<compile_context>
chip_gen: v7x
topology: tpu7x:2x2x1
jax: 0.10.0
libtpu: 0.0.40
codegen_flags: <defaults>
</compile_context>

<pallas_src>
import functools

import jax
import jax.numpy as jnp
from jax import lax
from jax.experimental import pallas as pl
from jax.experimental.pallas import tpu as pltpu

LEAKINESS = 0.2              # stand-in for hp.leakiness
DROPOUT_P = 0.3              # stand-in for hp.dropout (unused at inference)
MATMUL_DTYPE = jnp.bfloat16  # MXU operand dtype; accumulation is always f32


def _leaky(x):
    return jnp.where(x > 0, x, LEAKINESS * x)


def conv_block_kernel(*args, pool: bool, has_res: bool, H: int, W: int):
    """Fused conv_block forward for ONE batch element (one grid step).

    Refs (in order):
      x_ref    : (1, Cin, H*W)   f32   C-major input block (flat spatial)
      mask_ref : (1, Hp*Wp)      f32   1.0 at interior positions of the padded
                                       flat image, 0.0 on the pad ring
      [pmat_ref: (W, W//2)       f32   0.25 at (w, w//2), only if pool]
      w1_ref   : (Cin, 9*Cin)    bf16  conv_1 weights, col = tap*Cin + cin
      b1_ref   : (Cin, 1)        f32
      w2_ref   : (Cout, 9*Cin)   bf16  conv_2 weights
      b2_ref   : (Cout, 1)       f32
      [wr_ref  : (Cout, Cin)     bf16  1x1 residual conv, only if has_res]
      [br_ref  : (Cout, 1)       f32   only if has_res]
      out_ref  : (1, Cout, Ho*Wo) f32
      ext_ref  : (Cin, Hp*Wp + 2*(Wp+1)) bf16 scratch: zero-padded flat image
                 with a (Wp+1)-lane margin on each side so every im2col tap is
                 a full-length static lane slice.
    """
    it = iter(args)
    x_ref = next(it)
    mask_ref = next(it)
    pmat_ref = next(it) if pool else None
    w1_ref = next(it)
    b1_ref = next(it)
    w2_ref = next(it)
    b2_ref = next(it)
    if has_res:
        wr_ref = next(it)
        br_ref = next(it)
    out_ref = next(it)
    ext_ref = next(it)

    Cin = x_ref.shape[1]
    Cout = out_ref.shape[1]
    Hp, Wp = H + 2, W + 2
    HpWp = Hp * Wp
    M = Wp + 1                      # margin = max |tap offset|

    # ---- build the zero-padded, C-major, flat-spatial staging image (bf16) ---
    # Re-zeroing the (small, VMEM-only) staging buffer every step keeps the
    # kernel state-free across grid iterations, so "parallel" megacore
    # sharding is safe and the wrapper needs no HBM-side jnp.pad.
    ext_ref[...] = jnp.zeros_like(ext_ref)
    for h in range(H):              # scatter real rows into the padded image
        dst = M + (h + 1) * Wp + 1
        ext_ref[:, dst:dst + W] = (
            x_ref[0, :, h * W:(h + 1) * W].astype(ext_ref.dtype))

    def conv3x3(w_ref):
        # Wide-K im2col: 9 shifted full-length lane slices of the staging
        # buffer stacked along sublanes -> ONE MXU matmul per conv.
        taps = []
        for dh in range(3):
            for dw in range(3):
                off = (dh - 1) * Wp + (dw - 1)
                taps.append(ext_ref[:, M + off:M + off + HpWp])
        cols = jnp.concatenate(taps, axis=0)                  # (9*Cin, HpWp) bf16
        y = jnp.dot(w_ref[...], cols, preferred_element_type=jnp.float32)
        return y, taps[4]          # taps[4] (centre tap) == padded image (bf16)

    interior = mask_ref[...] != 0.0                           # (1, HpWp) bool

    # ---- conv_1: 3x3 Cin->Cin, pad=1, bias, LeakyReLU (dropout = eval id) ----
    y1, xpad_b = conv3x3(w1_ref)
    y1 = jnp.where(interior, _leaky(y1 + b1_ref[...]), 0.0)   # re-zero pad ring

    # stage conv_1 activations (bf16) back into the padded staging buffer
    ext_ref[:, M:M + HpWp] = y1.astype(ext_ref.dtype)

    # ---- conv_2: 3x3 Cin->Cout, pad=1, bias, LeakyReLU ------------------------
    y2, _ = conv3x3(w2_ref)
    s = _leaky(y2 + b2_ref[...])                              # (Cout, HpWp) f32

    # ---- residual -------------------------------------------------------------
    if has_res:
        # SpecNorm(Conv2d(in_c, out_c, 1)) on the original input, reusing the
        # already-staged bf16 padded image.
        s = s + jnp.dot(wr_ref[...], xpad_b,
                        preferred_element_type=jnp.float32) + br_ref[...]
    # else: plain `fx + x`; added per-row below in exact f32.

    # ---- extraction (+ fused AvgPool2d(2)), lane-dense output stores ----------
    if pool:
        Wo = W // 2
        pmat = pmat_ref[...]                                  # (W, Wo) f32
        for i in range(H // 2):
            a0 = (2 * i + 1) * Wp + 1                         # interior row 2i
            a1 = (2 * i + 2) * Wp + 1                         # interior row 2i+1
            rA = s[:, a0:a0 + W]
            rB = s[:, a1:a1 + W]
            if not has_res:
                rA = rA + x_ref[0, :, (2 * i) * W:(2 * i + 1) * W]
                rB = rB + x_ref[0, :, (2 * i + 1) * W:(2 * i + 2) * W]
            # W-pair + downsample + 0.25 scale as one tiny f32 matmul.
            pooled = jnp.dot(rA + rB, pmat,
                             preferred_element_type=jnp.float32,
                             precision=lax.Precision.HIGHEST)
            out_ref[0, :, i * Wo:(i + 1) * Wo] = pooled.astype(out_ref.dtype)
    else:
        for h in range(H):
            a = (h + 1) * Wp + 1
            row = s[:, a:a + W]
            if not has_res:
                row = row + x_ref[0, :, h * W:(h + 1) * W]    # exact f32 skip
            out_ref[0, :, h * W:(h + 1) * W] = row.astype(out_ref.dtype)


def _vmem_limit_bytes(H, W, Cin, Cout, pool):
    """~1.5x of the real per-step footprint, floor 32 MiB, cap 48 MiB (fits
    v7x's 64 MiB per-TC VMEM; v5e/v6e have 128 MiB)."""
    f32, bf16 = 4, 2
    Hp, Wp = H + 2, W + 2
    HpWp = Hp * Wp
    Ho, Wo = (H // 2, W // 2) if pool else (H, W)
    blk_in = Cin * H * W * f32
    blk_out = Cout * Ho * Wo * f32
    consts = (9 * Cin * (Cin + Cout) * bf16 + Cin * Cout * bf16
              + (Cin + 2 * Cout) * f32 + HpWp * f32 + W * max(Wo, 1) * f32)
    scratch = Cin * (HpWp + 2 * (Wp + 1)) * bf16
    temps = 2 * 9 * Cin * HpWp * bf16 + (Cin + 2 * Cout) * HpWp * f32
    need = 2 * (blk_in + blk_out + consts) + scratch + temps
    return int(min(max(int(1.5 * need), 32 * (1 << 20)), 48 * (1 << 20)))


def spectral_normalize(w, n_iter=30):
    """Divide conv weight (out_c, in_c, kh, kw) by its largest singular value.

    Note: PyTorch's spectral_norm does 1 power iteration per forward with a
    persistent u vector; here we run a converged power iteration offline.
    """
    wm = w.reshape(w.shape[0], -1).astype(jnp.float32)
    v = jnp.ones((wm.shape[1],), jnp.float32) / jnp.sqrt(float(wm.shape[1]))
    u = jnp.ones((wm.shape[0],), jnp.float32) / jnp.sqrt(float(wm.shape[0]))
    for _ in range(n_iter):
        u = wm @ v
        u = u / (jnp.linalg.norm(u) + 1e-12)
        v = wm.T @ u
        v = v / (jnp.linalg.norm(v) + 1e-12)
    sigma = u @ (wm @ v)
    return w / sigma


@functools.partial(jax.jit, static_argnames=("pool",))
def conv_block_forward(x_nchw, params, pool=True):
    """x_nchw: (N, Cin, H, W) float32. Returns NCHW output like the PyTorch module."""
    N, Cin, H, W = x_nchw.shape
    Cout = params["w2"].shape[0]
    has_res = "wr" in params
    assert has_res or Cin == Cout
    if pool:
        assert H % 2 == 0 and W % 2 == 0

    Hp, Wp = H + 2, W + 2
    HpWp = Hp * Wp
    Ho, Wo = (H // 2, W // 2) if pool else (H, W)

    # Native C-major layout: just a free flattening of the spatial dims; no
    # NCHW<->NHWC transposes and no HBM-side zero pad.
    x_flat = x_nchw.reshape(N, Cin, H * W).astype(jnp.float32)

    # Interior (non-pad) mask of the padded flat image.
    mask = jnp.pad(jnp.ones((H, W), jnp.float32),
                   ((1, 1), (1, 1))).reshape(1, HpWp)

    # PyTorch (out, in, kh, kw) -> (out, 9*in) matching the im2col row order
    # (tap-major, channel-minor); bf16 operands for the MXU.
    def conv_w(w):
        o, i = w.shape[0], w.shape[1]
        return jnp.transpose(w, (0, 2, 3, 1)).reshape(o, 9 * i).astype(MATMUL_DTYPE)

    w1m = conv_w(params["w1"])
    w2m = conv_w(params["w2"])
    b1 = params["b1"].reshape(Cin, 1).astype(jnp.float32)
    b2 = params["b2"].reshape(Cout, 1).astype(jnp.float32)

    def full(arr):
        nd = arr.ndim
        return pl.BlockSpec(arr.shape, lambda n: (0,) * nd)

    operands = [x_flat, mask]
    in_specs = [pl.BlockSpec((1, Cin, H * W), lambda n: (n, 0, 0)), full(mask)]
    if pool:
        # (W, W/2) pooling matrix: 0.25 at (w, w//2), 0 elsewhere.
        pmat = jnp.repeat(jnp.eye(Wo, dtype=jnp.float32), 2, axis=0) * 0.25
        operands.append(pmat)
        in_specs.append(full(pmat))
    operands += [w1m, b1, w2m, b2]
    in_specs += [full(w1m), full(b1), full(w2m), full(b2)]
    if has_res:
        wr = params["wr"].reshape(Cout, Cin).astype(MATMUL_DTYPE)
        br = params["br"].reshape(Cout, 1).astype(jnp.float32)
        operands += [wr, br]
        in_specs += [full(wr), full(br)]

    out_flat = pl.pallas_call(
        functools.partial(conv_block_kernel, pool=pool, has_res=has_res, H=H, W=W),
        out_shape=jax.ShapeDtypeStruct((N, Cout, Ho * Wo), jnp.float32),
        grid=(N,),
        in_specs=in_specs,
        out_specs=pl.BlockSpec((1, Cout, Ho * Wo), lambda n: (n, 0, 0)),
        scratch_shapes=[pltpu.VMEM((Cin, HpWp + 2 * (Wp + 1)), MATMUL_DTYPE)],
        compiler_params=pltpu.CompilerParams(
            dimension_semantics=("parallel",),
            vmem_limit_bytes=_vmem_limit_bytes(H, W, Cin, Cout, pool)),
    )(*operands)

    return out_flat.reshape(N, Cout, Ho, Wo)  # NCHW, free reshape


# ----------------------------- references ------------------------------------
def reference_conv_block(x, p, pool=True):
    """Pure-JAX NCHW reference in full f32 (PyTorch module, eval mode)."""
    def conv(t, w, b, pad):
        y = lax.conv_general_dilated(
            t, w, (1, 1), ((pad, pad), (pad, pad)),
            dimension_numbers=("NCHW", "OIHW", "NCHW"),
            precision=lax.Precision.HIGHEST)
        return y + b[None, :, None, None]
    fx = _leaky(conv(x, p["w1"], p["b1"], 1))
    fx = _leaky(conv(fx, p["w2"], p["b2"], 1))
    if "wr" in p:
        x = fx + conv(x, p["wr"], p["br"], 0)
    else:
        x = fx + x
    if pool:
        N, C, H, W = x.shape
        x = x.reshape(N, C, H // 2, 2, W // 2, 2).mean(axis=(3, 5))
    return x


def reference_conv_block_bf16_mxu(x, p, pool=True):
    """Reference modelling the kernel's numerics (bf16 matmul operands, f32
    accumulate / bias / LeakyReLU / pool) for a tight correctness check."""
    bf = jnp.bfloat16
    def conv(t, w, b, pad):
        y = lax.conv_general_dilated(
            t.astype(bf), w.astype(bf), (1, 1), ((pad, pad), (pad, pad)),
            dimension_numbers=("NCHW", "OIHW", "NCHW"),
            preferred_element_type=jnp.float32,
            precision=lax.Precision.HIGHEST)
        return y + b[None, :, None, None].astype(jnp.float32)
    fx = _leaky(conv(x, p["w1"], p["b1"], 1))
    fx = _leaky(conv(fx, p["w2"], p["b2"], 1))
    if "wr" in p:
        x = fx + conv(x, p["wr"], p["br"], 0)
    else:
        x = fx + x
    if pool:
        N, C, H, W = x.shape
        x = x.reshape(N, C, H // 2, 2, W // 2, 2).mean(axis=(3, 5))
    return x


if __name__ == "__main__":
    key = jax.random.PRNGKey(0)

    def make_params(k, cin, cout, with_res):
        ks = jax.random.split(k, 6)
        p = {
            "w1": spectral_normalize(0.3 * jax.random.normal(ks[0], (cin, cin, 3, 3), jnp.float32)),
            "b1": 0.1 * jax.random.normal(ks[1], (cin,), jnp.float32),
            "w2": spectral_normalize(0.3 * jax.random.normal(ks[2], (cout, cin, 3, 3), jnp.float32)),
            "b2": 0.1 * jax.random.normal(ks[3], (cout,), jnp.float32),
        }
        if with_res:
            p["wr"] = spectral_normalize(0.3 * jax.random.normal(ks[4], (cout, cin, 1, 1), jnp.float32))
            p["br"] = 0.1 * jax.random.normal(ks[5], (cout,), jnp.float32)
        return p

    kx1, kp1, kx2, kp2 = jax.random.split(key, 4)

    # Case 1: in_c != out_c (res_conv branch) + AvgPool2d(2)  == conv_block(4, 8, pool=True)
    N, Cin, Cout, H, W = 2, 4, 8, 16, 16
    x1 = jax.random.normal(kx1, (N, Cin, H, W), jnp.float32)
    p1 = make_params(kp1, Cin, Cout, with_res=True)
    out1 = jax.block_until_ready(conv_block_forward(x1, p1, pool=True))
    assert out1.shape == (N, Cout, H // 2, W // 2), out1.shape

    err1 = float(jnp.max(jnp.abs(out1 - reference_conv_block(x1, p1, pool=True))))
    err1q = float(jnp.max(jnp.abs(out1 - reference_conv_block_bf16_mxu(x1, p1, pool=True))))
    # 5e-2 vs the f32 reference bounds the bf16-operand quantisation; 2e-2 vs
    # the bf16-operand reference checks the kernel itself (slightly looser than
    # case 2 to absorb the fused-pool f32 matmul's MXU rounding).
    assert err1 < 5e-2, f"case1 f32-ref max abs err = {err1}"
    assert err1q < 2e-2, f"case1 bf16-ref max abs err = {err1q}"

    # Case 2: in_c == out_c (identity residual `fx + x`), no pooling == conv_block(8, 8, pool=False)
    N2, C2, H2, W2 = 2, 8, 16, 16
    x2 = jax.random.normal(kx2, (N2, C2, H2, W2), jnp.float32)
    p2 = make_params(kp2, C2, C2, with_res=False)
    out2 = jax.block_until_ready(conv_block_forward(x2, p2, pool=False))
    assert out2.shape == (N2, C2, H2, W2), out2.shape

    err2 = float(jnp.max(jnp.abs(out2 - reference_conv_block(x2, p2, pool=False))))
    err2q = float(jnp.max(jnp.abs(out2 - reference_conv_block_bf16_mxu(x2, p2, pool=False))))
    assert err2 < 5e-2, f"case2 f32-ref max abs err = {err2}"
    assert err2q < 1e-2, f"case2 bf16-ref max abs err = {err2q}"

    print("KERNEL_OK")
</pallas_src>

<mosaic_0001>
module attributes {stable_mosaic.version = 11 : i64} {
  func.func @conv_block_kernel(%arg0: i32, %arg1: memref<1x4x256xf32, #tpu.memory_space<vmem>>, %arg2: memref<1x324xf32, #tpu.memory_space<vmem>>, %arg3: memref<16x8xf32, #tpu.memory_space<vmem>>, %arg4: memref<4x36xbf16, #tpu.memory_space<vmem>>, %arg5: memref<4x1xf32, #tpu.memory_space<vmem>>, %arg6: memref<8x36xbf16, #tpu.memory_space<vmem>>, %arg7: memref<8x1xf32, #tpu.memory_space<vmem>>, %arg8: memref<8x4xbf16, #tpu.memory_space<vmem>>, %arg9: memref<8x1xf32, #tpu.memory_space<vmem>>, %arg10: memref<1x8x64xf32, #tpu.memory_space<vmem>>, %arg11: memref<4x362xbf16, #tpu.memory_space<vmem>>) attributes {dimension_semantics = [#tpu.dimension_semantics<parallel>], iteration_bounds = array<i64: 2>, scalar_prefetch = 0 : i64, scratch_operands = 1 : i64, tpu.core_type = #tpu.core_type<tc>, window_params = [{transform_indices = @transform_0, window_bounds = array<i64: 1, 4, 256>}, {pipeline_mode = #tpu.pipeline_mode<synchronous>, transform_indices = @transform_1, window_bounds = array<i64: 1, 324>}, {pipeline_mode = #tpu.pipeline_mode<synchronous>, transform_indices = @transform_2, window_bounds = array<i64: 16, 8>}, {pipeline_mode = #tpu.pipeline_mode<synchronous>, transform_indices = @transform_3, window_bounds = array<i64: 4, 36>}, {pipeline_mode = #tpu.pipeline_mode<synchronous>, transform_indices = @transform_4, window_bounds = array<i64: 4, 1>}, {pipeline_mode = #tpu.pipeline_mode<synchronous>, transform_indices = @transform_5, window_bounds = array<i64: 8, 36>}, {pipeline_mode = #tpu.pipeline_mode<synchronous>, transform_indices = @transform_6, window_bounds = array<i64: 8, 1>}, {pipeline_mode = #tpu.pipeline_mode<synchronous>, transform_indices = @transform_7, window_bounds = array<i64: 8, 4>}, {pipeline_mode = #tpu.pipeline_mode<synchronous>, transform_indices = @transform_8, window_bounds = array<i64: 8, 1>}, {transform_indices = @transform_9, window_bounds = array<i64: 1, 8, 64>}]} {
    %cst = arith.constant 0.000000e+00 : bf16
    %0 = vector.broadcast %cst : bf16 to vector<4x362xbf16>
    %c0 = arith.constant 0 : index
    %c0_0 = arith.constant 0 : index
    %1 = vector.load %arg11[%c0, %c0_0] : memref<4x362xbf16, #tpu.memory_space<vmem>>, vector<4x362xbf16>
    tpu.vector_store %arg11[%c0, %c0_0], %0 {strides = array<i32>} : memref<4x362xbf16, #tpu.memory_space<vmem>>, vector<4x362xbf16>,
    %c0_1 = arith.constant 0 : index
    %c0_2 = arith.constant 0 : index
    %c0_3 = arith.constant 0 : index
    %2 = vector.load %arg1[%c0_1, %c0_2, %c0_3] : memref<1x4x256xf32, #tpu.memory_space<vmem>>, vector<1x4x16xf32>
    %3 = vector.shape_cast %2 : vector<1x4x16xf32> to vector<4x16xf32>
    %4 = arith.truncf %3 : vector<4x16xf32> to vector<4x16xbf16>
    %c0_4 = arith.constant 0 : index
    %c38 = arith.constant 38 : index
    %5 = vector.load %arg11[%c0_4, %c38] : memref<4x362xbf16, #tpu.memory_space<vmem>>, vector<4x16xbf16>
    tpu.vector_store %arg11[%c0_4, %c38], %4 {strides = array<i32>} : memref<4x362xbf16, #tpu.memory_space<vmem>>, vector<4x16xbf16>,
    %c0_5 = arith.constant 0 : index
    %c0_6 = arith.constant 0 : index
    %c16 = arith.constant 16 : index
    %6 = vector.load %arg1[%c0_5, %c0_6, %c16] : memref<1x4x256xf32, #tpu.memory_space<vmem>>, vector<1x4x16xf32>
    %7 = vector.shape_cast %6 : vector<1x4x16xf32> to vector<4x16xf32>
    %8 = arith.truncf %7 : vector<4x16xf32> to vector<4x16xbf16>
    %c0_7 = arith.constant 0 : index
    %c56 = arith.constant 56 : index
    %9 = vector.load %arg11[%c0_7, %c56] : memref<4x362xbf16, #tpu.memory_space<vmem>>, vector<4x16xbf16>
    tpu.vector_store %arg11[%c0_7, %c56], %8 {strides = array<i32>} : memref<4x362xbf16, #tpu.memory_space<vmem>>, vector<4x16xbf16>,
    %c0_8 = arith.constant 0 : index
    %c0_9 = arith.constant 0 : index
    %c32 = arith.constant 32 : index
    %10 = vector.load %arg1[%c0_8, %c0_9, %c32] : memref<1x4x256xf32, #tpu.memory_space<vmem>>, vector<1x4x16xf32>
    %11 = vector.shape_cast %10 : vector<1x4x16xf32> to vector<4x16xf32>
    %12 = arith.truncf %11 : vector<4x16xf32> to vector<4x16xbf16>
    %c0_10 = arith.constant 0 : index
    %c74 = arith.constant 74 : index
    %13 = vector.load %arg11[%c0_10, %c74] : memref<4x362xbf16, #tpu.memory_space<vmem>>, vector<4x16xbf16>
    tpu.vector_store %arg11[%c0_10, %c74], %12 {strides = array<i32>} : memref<4x362xbf16, #tpu.memory_space<vmem>>, vector<4x16xbf16>,
    %c0_11 = arith.constant 0 : index
    %c0_12 = arith.constant 0 : index
    %c48 = arith.constant 48 : index
    %14 = vector.load %arg1[%c0_11, %c0_12, %c48] : memref<1x4x256xf32, #tpu.memory_space<vmem>>, vector<1x4x16xf32>
    %15 = vector.shape_cast %14 : vector<1x4x16xf32> to vector<4x16xf32>
    %16 = arith.truncf %15 : vector<4x16xf32> to vector<4x16xbf16>
    %c0_13 = arith.constant 0 : index
    %c92 = arith.constant 92 : index
    %17 = vector.load %arg11[%c0_13, %c92] : memref<4x362xbf16, #tpu.memory_space<vmem>>, vector<4x16xbf16>
    tpu.vector_store %arg11[%c0_13, %c92], %16 {strides = array<i32>} : memref<4x362xbf16, #tpu.memory_space<vmem>>, vector<4x16xbf16>,
    %c0_14 = arith.constant 0 : index
    %c0_15 = arith.constant 0 : index
    %c64 = arith.constant 64 : index
    %18 = vector.load %arg1[%c0_14, %c0_15, %c64] : memref<1x4x256xf32, #tpu.memory_space<vmem>>, vector<1x4x16xf32>
    %19 = vector.shape_cast %18 : vector<1x4x16xf32> to vector<4x16xf32>
    %20 = arith.truncf %19 : vector<4x16xf32> to vector<4x16xbf16>
    %c0_16 = arith.constant 0 : index
    %c110 = arith.constant 110 : index
    %21 = vector.load %arg11[%c0_16, %c110] : memref<4x362xbf16, #tpu.memory_space<vmem>>, vector<4x16xbf16>
    tpu.vector_store %arg11[%c0_16, %c110], %20 {strides = array<i32>} : memref<4x362xbf16, #tpu.memory_space<vmem>>, vector<4x16xbf16>,
    %c0_17 = arith.constant 0 : index
    %c0_18 = arith.constant 0 : index
    %c80 = arith.constant 80 : index
    %22 = vector.load %arg1[%c0_17, %c0_18, %c80] : memref<1x4x256xf32, #tpu.memory_space<vmem>>, vector<1x4x16xf32>
    %23 = vector.shape_cast %22 : vector<1x4x16xf32> to vector<4x16xf32>
    %24 = arith.truncf %23 : vector<4x16xf32> to vector<4x16xbf16>
    %c0_19 = arith.constant 0 : index
    %c128 = arith.constant 128 : index
    %25 = vector.load %arg11[%c0_19, %c128] : memref<4x362xbf16, #tpu.memory_space<vmem>>, vector<4x16xbf16>
    tpu.vector_store %arg11[%c0_19, %c128], %24 {strides = array<i32>} : memref<4x362xbf16, #tpu.memory_space<vmem>>, vector<4x16xbf16>,
    %c0_20 = arith.constant 0 : index
    %c0_21 = arith.constant 0 : index
    %c96 = arith.constant 96 : index
    %26 = vector.load %arg1[%c0_20, %c0_21, %c96] : memref<1x4x256xf32, #tpu.memory_space<vmem>>, vector<1x4x16xf32>
    %27 = vector.shape_cast %26 : vector<1x4x16xf32> to vector<4x16xf32>
    %28 = arith.truncf %27 : vector<4x16xf32> to vector<4x16xbf16>
    %c0_22 = arith.constant 0 : index
    %c146 = arith.constant 146 : index
    %29 = vector.load %arg11[%c0_22, %c146] : memref<4x362xbf16, #tpu.memory_space<vmem>>, vector<4x16xbf16>
    tpu.vector_store %arg11[%c0_22, %c146], %28 {strides = array<i32>} : memref<4x362xbf16, #tpu.memory_space<vmem>>, vector<4x16xbf16>,
    %c0_23 = arith.constant 0 : index
    %c0_24 = arith.constant 0 : index
    %c112 = arith.constant 112 : index
    %30 = vector.load %arg1[%c0_23, %c0_24, %c112] : memref<1x4x256xf32, #tpu.memory_space<vmem>>, vector<1x4x16xf32>
    %31 = vector.shape_cast %30 : vector<1x4x16xf32> to vector<4x16xf32>
    %32 = arith.truncf %31 : vector<4x16xf32> to vector<4x16xbf16>
    %c0_25 = arith.constant 0 : index
    %c164 = arith.constant 164 : index
    %33 = vector.load %arg11[%c0_25, %c164] : memref<4x362xbf16, #tpu.memory_space<vmem>>, vector<4x16xbf16>
    tpu.vector_store %arg11[%c0_25, %c164], %32 {strides = array<i32>} : memref<4x362xbf16, #tpu.memory_space<vmem>>, vector<4x16xbf16>,
    %c0_26 = arith.constant 0 : index
    %c0_27 = arith.constant 0 : index
    %c128_28 = arith.constant 128 : index
    %34 = vector.load %arg1[%c0_26, %c0_27, %c128_28] : memref<1x4x256xf32, #tpu.memory_space<vmem>>, vector<1x4x16xf32>
    %35 = vector.shape_cast %34 : vector<1x4x16xf32> to vector<4x16xf32>
    %36 = arith.truncf %35 : vector<4x16xf32> to vector<4x16xbf16>
    %c0_29 = arith.constant 0 : index
    %c182 = arith.constant 182 : index
    %37 = vector.load %arg11[%c0_29, %c182] : memref<4x362xbf16, #tpu.memory_space<vmem>>, vector<4x16xbf16>
    tpu.vector_store %arg11[%c0_29, %c182], %36 {strides = array<i32>} : memref<4x362xbf16, #tpu.memory_space<vmem>>, vector<4x16xbf16>,
    %c0_30 = arith.constant 0 : index
    %c0_31 = arith.constant 0 : index
    %c144 = arith.constant 144 : index
    %38 = vector.load %arg1[%c0_30, %c0_31, %c144] : memref<1x4x256xf32, #tpu.memory_space<vmem>>, vector<1x4x16xf32>
    %39 = vector.shape_cast %38 : vector<1x4x16xf32> to vector<4x16xf32>
    %40 = arith.truncf %39 : vector<4x16xf32> to vector<4x16xbf16>
    %c0_32 = arith.constant 0 : index
    %c200 = arith.constant 200 : index
    %41 = vector.load %arg11[%c0_32, %c200] : memref<4x362xbf16, #tpu.memory_space<vmem>>, vector<4x16xbf16>
    tpu.vector_store %arg11[%c0_32, %c200], %40 {strides = array<i32>} : memref<4x362xbf16, #tpu.memory_space<vmem>>, vector<4x16xbf16>,
    %c0_33 = arith.constant 0 : index
    %c0_34 = arith.constant 0 : index
    %c160 = arith.constant 160 : index
    %42 = vector.load %arg1[%c0_33, %c0_34, %c160] : memref<1x4x256xf32, #tpu.memory_space<vmem>>, vector<1x4x16xf32>
    %43 = vector.shape_cast %42 : vector<1x4x16xf32> to vector<4x16xf32>
    %44 = arith.truncf %43 : vector<4x16xf32> to vector<4x16xbf16>
    %c0_35 = arith.constant 0 : index
    %c218 = arith.constant 218 : index
    %45 = vector.load %arg11[%c0_35, %c218] : memref<4x362xbf16, #tpu.memory_space<vmem>>, vector<4x16xbf16>
    tpu.vector_store %arg11[%c0_35, %c218], %44 {strides = array<i32>} : memref<4x362xbf16, #tpu.memory_space<vmem>>, vector<4x16xbf16>,
    %c0_36 = arith.constant 0 : index
    %c0_37 = arith.constant 0 : index
    %c176 = arith.constant 176 : index
    %46 = vector.load %arg1[%c0_36, %c0_37, %c176] : memref<1x4x256xf32, #tpu.memory_space<vmem>>, vector<1x4x16xf32>
    %47 = vector.shape_cast %46 : vector<1x4x16xf32> to vector<4x16xf32>
    %48 = arith.truncf %47 : vector<4x16xf32> to vector<4x16xbf16>
    %c0_38 = arith.constant 0 : index
    %c236 = arith.constant 236 : index
    %49 = vector.load %arg11[%c0_38, %c236] : memref<4x362xbf16, #tpu.memory_space<vmem>>, vector<4x16xbf16>
    tpu.vector_store %arg11[%c0_38, %c236], %48 {strides = array<i32>} : memref<4x362xbf16, #tpu.memory_space<vmem>>, vector<4x16xbf16>,
    %c0_39 = arith.constant 0 : index
    %c0_40 = arith.constant 0 : index
    %c192 = arith.constant 192 : index
    %50 = vector.load %arg1[%c0_39, %c0_40, %c192] : memref<1x4x256xf32, #tpu.memory_space<vmem>>, vector<1x4x16xf32>
    %51 = vector.shape_cast %50 : vector<1x4x16xf32> to vector<4x16xf32>
    %52 = arith.truncf %51 : vector<4x16xf32> to vector<4x16xbf16>
    %c0_41 = arith.constant 0 : index
    %c254 = arith.constant 254 : index
    %53 = vector.load %arg11[%c0_41, %c254] : memref<4x362xbf16, #tpu.memory_space<vmem>>, vector<4x16xbf16>
    tpu.vector_store %arg11[%c0_41, %c254], %52 {strides = array<i32>} : memref<4x362xbf16, #tpu.memory_space<vmem>>, vector<4x16xbf16>,
    %c0_42 = arith.constant 0 : index
    %c0_43 = arith.constant 0 : index
    %c208 = arith.constant 208 : index
    %54 = vector.load %arg1[%c0_42, %c0_43, %c208] : memref<1x4x256xf32, #tpu.memory_space<vmem>>, vector<1x4x16xf32>
    %55 = vector.shape_cast %54 : vector<1x4x16xf32> to vector<4x16xf32>
    %56 = arith.truncf %55 : vector<4x16xf32> to vector<4x16xbf16>
    %c0_44 = arith.constant 0 : index
    %c272 = arith.constant 272 : index
    %57 = vector.load %arg11[%c0_44, %c272] : memref<4x362xbf16, #tpu.memory_space<vmem>>, vector<4x16xbf16>
    tpu.vector_store %arg11[%c0_44, %c272], %56 {strides = array<i32>} : memref<4x362xbf16, #tpu.memory_space<vmem>>, vector<4x16xbf16>,
    %c0_45 = arith.constant 0 : index
    %c0_46 = arith.constant 0 : index
    %c224 = arith.constant 224 : index
    %58 = vector.load %arg1[%c0_45, %c0_46, %c224] : memref<1x4x256xf32, #tpu.memory_space<vmem>>, vector<1x4x16xf32>
    %59 = vector.shape_cast %58 : vector<1x4x16xf32> to vector<4x16xf32>
    %60 = arith.truncf %59 : vector<4x16xf32> to vector<4x16xbf16>
    %c0_47 = arith.constant 0 : index
    %c290 = arith.constant 290 : index
    %61 = vector.load %arg11[%c0_47, %c290] : memref<4x362xbf16, #tpu.memory_space<vmem>>, vector<4x16xbf16>
    tpu.vector_store %arg11[%c0_47, %c290], %60 {strides = array<i32>} : memref<4x362xbf16, #tpu.memory_space<vmem>>, vector<4x16xbf16>,
    %c0_48 = arith.constant 0 : index
    %c0_49 = arith.constant 0 : index
    %c240 = arith.constant 240 : index
    %62 = vector.load %arg1[%c0_48, %c0_49, %c240] : memref<1x4x256xf32, #tpu.memory_space<vmem>>, vector<1x4x16xf32>
    %63 = vector.shape_cast %62 : vector<1x4x16xf32> to vector<4x16xf32>
    %64 = arith.truncf %63 : vector<4x16xf32> to vector<4x16xbf16>
    %c0_50 = arith.constant 0 : index
    %c308 = arith.constant 308 : index
    %65 = vector.load %arg11[%c0_50, %c308] : memref<4x362xbf16, #tpu.memory_space<vmem>>, vector<4x16xbf16>
    tpu.vector_store %arg11[%c0_50, %c308], %64 {strides = array<i32>} : memref<4x362xbf16, #tpu.memory_space<vmem>>, vector<4x16xbf16>,
    %c0_51 = arith.constant 0 : index
    %c0_52 = arith.constant 0 : index
    %66 = vector.load %arg2[%c0_51, %c0_52] : memref<1x324xf32, #tpu.memory_space<vmem>>, vector<1x324xf32>
    %cst_53 = arith.constant 0.000000e+00 : f32
    %67 = vector.broadcast %cst_53 : f32 to vector<1x324xf32>
    %68 = arith.cmpf one, %66, %67 : vector<1x324xf32>
    %c0_54 = arith.constant 0 : index
    %c0_55 = arith.constant 0 : index
    %69 = vector.load %arg11[%c0_54, %c0_55] : memref<4x362xbf16, #tpu.memory_space<vmem>>, vector<4x324xbf16>
    %c0_56 = arith.constant 0 : index
    %c1 = arith.constant 1 : index
    %70 = vector.load %arg11[%c0_56, %c1] : memref<4x362xbf16, #tpu.memory_space<vmem>>, vector<4x324xbf16>
    %c0_57 = arith.constant 0 : index
    %c2 = arith.constant 2 : index
    %71 = vector.load %arg11[%c0_57, %c2] : memref<4x362xbf16, #tpu.memory_space<vmem>>, vector<4x324xbf16>
    %c0_58 = arith.constant 0 : index
    %c18 = arith.constant 18 : index
    %72 = vector.load %arg11[%c0_58, %c18] : memref<4x362xbf16, #tpu.memory_space<vmem>>, vector<4x324xbf16>
    %c0_59 = arith.constant 0 : index
    %c19 = arith.constant 19 : index
    %73 = vector.load %arg11[%c0_59, %c19] : memref<4x362xbf16, #tpu.memory_space<vmem>>, vector<4x324xbf16>
    %c0_60 = arith.constant 0 : index
    %c20 = arith.constant 20 : index
    %74 = vector.load %arg11[%c0_60, %c20] : memref<4x362xbf16, #tpu.memory_space<vmem>>, vector<4x324xbf16>
    %c0_61 = arith.constant 0 : index
    %c36 = arith.constant 36 : index
    %75 = vector.load %arg11[%c0_61, %c36] : memref<4x362xbf16, #tpu.memory_space<vmem>>, vector<4x324xbf16>
    %c0_62 = arith.constant 0 : index
    %c37 = arith.constant 37 : index
    %76 = vector.load %arg11[%c0_62, %c37] : memref<4x362xbf16, #tpu.memory_space<vmem>>, vector<4x324xbf16>
    %c0_63 = arith.constant 0 : index
    %c38_64 = arith.constant 38 : index
    %77 = vector.load %arg11[%c0_63, %c38_64] : memref<4x362xbf16, #tpu.memory_space<vmem>>, vector<4x324xbf16>
    %78 = tpu.concatenate %69, %70, %71, %72, %73, %74, %75, %76, %77 in 0 : vector<4x324xbf16>, vector<4x324xbf16>, vector<4x324xbf16>, vector<4x324xbf16>, vector<4x324xbf16>, vector<4x324xbf16>, vector<4x324xbf16>, vector<4x324xbf16>, vector<4x324xbf16> -> vector<36x324xbf16>
    %c0_65 = arith.constant 0 : index
    %c0_66 = arith.constant 0 : index
    %79 = vector.load %arg4[%c0_65, %c0_66] : memref<4x36xbf16, #tpu.memory_space<vmem>>, vector<4x36xbf16>
    %cst_67 = arith.constant dense<0.000000e+00> : vector<4x324xf32>
    %80 = tpu.matmul %79, %78, %cst_67 {dimension_numbers = #tpu.dot_dimension_numbers<[1], [0], [0], [1], [0, 0, 1, 1], [], []>} : vector<4x36xbf16>, vector<36x324xbf16>, vector<4x324xf32> -> vector<4x324xf32>
    %c0_68 = arith.constant 0 : index
    %c0_69 = arith.constant 0 : index
    %81 = vector.load %arg5[%c0_68, %c0_69] : memref<4x1xf32, #tpu.memory_space<vmem>>, vector<4x1xf32>
    %82 = vector.broadcast %81 : vector<4x1xf32> to vector<4x324xf32>
    %83 = arith.addf %80, %82 : vector<4x324xf32>
    %cst_70 = arith.constant 0.000000e+00 : f32
    %84 = vector.broadcast %cst_70 : f32 to vector<4x324xf32>
    %85 = arith.cmpf ogt, %83, %84 : vector<4x324xf32>
    %cst_71 = arith.constant 2.000000e-01 : f32
    %86 = vector.broadcast %cst_71 : f32 to vector<4x324xf32>
    %87 = arith.mulf %86, %83 : vector<4x324xf32>
    %88 = arith.select %85, %83, %87 : vector<4x324xi1>, vector<4x324xf32>
    %cst_72 = arith.constant 0.000000e+00 : f32
    %89 = vector.shape_cast %68 : vector<1x324xi1> to vector<1x324xi1>
    %90 = vector.broadcast %89 : vector<1x324xi1> to vector<4x324xi1>
    %91 = vector.broadcast %cst_72 : f32 to vector<4x324xf32>
    %92 = arith.select %90, %88, %91 : vector<4x324xi1>, vector<4x324xf32>
    %93 = arith.truncf %92 : vector<4x324xf32> to vector<4x324xbf16>
    %c0_73 = arith.constant 0 : index
    %c19_74 = arith.constant 19 : index
    %94 = vector.load %arg11[%c0_73, %c19_74] : memref<4x362xbf16, #tpu.memory_space<vmem>>, vector<4x324xbf16>
    tpu.vector_store %arg11[%c0_73, %c19_74], %93 {strides = array<i32>} : memref<4x362xbf16, #tpu.memory_space<vmem>>, vector<4x324xbf16>,
    %c0_75 = arith.constant 0 : index
    %c0_76 = arith.constant 0 : index
    %95 = vector.load %arg11[%c0_75, %c0_76] : memref<4x362xbf16, #tpu.memory_space<vmem>>, vector<4x324xbf16>
    %c0_77 = arith.constant 0 : index
    %c1_78 = arith.constant 1 : index
    %96 = vector.load %arg11[%c0_77, %c1_78] : memref<4x362xbf16, #tpu.memory_space<vmem>>, vector<4x324xbf16>
    %c0_79 = arith.constant 0 : index
    %c2_80 = arith.constant 2 : index
    %97 = vector.load %arg11[%c0_79, %c2_80] : memref<4x362xbf16, #tpu.memory_space<vmem>>, vector<4x324xbf16>
    %c0_81 = arith.constant 0 : index
    %c18_82 = arith.constant 18 : index
    %98 = vector.load %arg11[%c0_81, %c18_82] : memref<4x362xbf16, #tpu.memory_space<vmem>>, vector<4x324xbf16>
    %c0_83 = arith.constant 0 : index
    %c19_84 = arith.constant 19 : index
    %99 = vector.load %arg11[%c0_83, %c19_84] : memref<4x362xbf16, #tpu.memory_space<vmem>>, vector<4x324xbf16>
    %c0_85 = arith.constant 0 : index
    %c20_86 = arith.constant 20 : index
    %100 = vector.load %arg11[%c0_85, %c20_86] : memref<4x362xbf16, #tpu.memory_space<vmem>>, vector<4x324xbf16>
    %c0_87 = arith.constant 0 : index
    %c36_88 = arith.constant 36 : index
    %101 = vector.load %arg11[%c0_87, %c36_88] : memref<4x362xbf16, #tpu.memory_space<vmem>>, vector<4x324xbf16>
    %c0_89 = arith.constant 0 : index
    %c37_90 = arith.constant 37 : index
    %102 = vector.load %arg11[%c0_89, %c37_90] : memref<4x362xbf16, #tpu.memory_space<vmem>>, vector<4x324xbf16>
    %c0_91 = arith.constant 0 : index
    %c38_92 = arith.constant 38 : index
    %103 = vector.load %arg11[%c0_91, %c38_92] : memref<4x362xbf16, #tpu.memory_space<vmem>>, vector<4x324xbf16>
    %104 = tpu.concatenate %95, %96, %97, %98, %99, %100, %101, %102, %103 in 0 : vector<4x324xbf16>, vector<4x324xbf16>, vector<4x324xbf16>, vector<4x324xbf16>, vector<4x324xbf16>, vector<4x324xbf16>, vector<4x324xbf16>, vector<4x324xbf16>, vector<4x324xbf16> -> vector<36x324xbf16>
    %c0_93 = arith.constant 0 : index
    %c0_94 = arith.constant 0 : index
    %105 = vector.load %arg6[%c0_93, %c0_94] : memref<8x36xbf16, #tpu.memory_space<vmem>>, vector<8x36xbf16>
    %cst_95 = arith.constant dense<0.000000e+00> : vector<8x324xf32>
    %106 = tpu.matmul %105, %104, %cst_95 {dimension_numbers = #tpu.dot_dimension_numbers<[1], [0], [0], [1], [0, 0, 1, 1], [], []>} : vector<8x36xbf16>, vector<36x324xbf16>, vector<8x324xf32> -> vector<8x324xf32>
    %c0_96 = arith.constant 0 : index
    %c0_97 = arith.constant 0 : index
    %107 = vector.load %arg7[%c0_96, %c0_97] : memref<8x1xf32, #tpu.memory_space<vmem>>, vector<8x1xf32>
    %108 = vector.broadcast %107 : vector<8x1xf32> to vector<8x324xf32>
    %109 = arith.addf %106, %108 : vector<8x324xf32>
    %cst_98 = arith.constant 0.000000e+00 : f32
    %110 = vector.broadcast %cst_98 : f32 to vector<8x324xf32>
    %111 = arith.cmpf ogt, %109, %110 : vector<8x324xf32>
    %cst_99 = arith.constant 2.000000e-01 : f32
    %112 = vector.broadcast %cst_99 : f32 to vector<8x324xf32>
    %113 = arith.mulf %112, %109 : vector<8x324xf32>
    %114 = arith.select %111, %109, %113 : vector<8x324xi1>, vector<8x324xf32>
    %c0_100 = arith.constant 0 : index
    %c0_101 = arith.constant 0 : index
    %115 = vector.load %arg8[%c0_100, %c0_101] : memref<8x4xbf16, #tpu.memory_space<vmem>>, vector<8x4xbf16>
    %cst_102 = arith.constant dense<0.000000e+00> : vector<8x324xf32>
    %116 = tpu.matmul %115, %73, %cst_102 {dimension_numbers = #tpu.dot_dimension_numbers<[1], [0], [0], [1], [0, 0, 1, 1], [], []>} : vector<8x4xbf16>, vector<4x324xbf16>, vector<8x324xf32> -> vector<8x324xf32>
    %117 = arith.addf %114, %116 : vector<8x324xf32>
    %c0_103 = arith.constant 0 : index
    %c0_104 = arith.constant 0 : index
    %118 = vector.load %arg9[%c0_103, %c0_104] : memref<8x1xf32, #tpu.memory_space<vmem>>, vector<8x1xf32>
    %119 = vector.broadcast %118 : vector<8x1xf32> to vector<8x324xf32>
    %120 = arith.addf %117, %119 : vector<8x324xf32>
    %c0_105 = arith.constant 0 : index
    %c0_106 = arith.constant 0 : index
    %121 = vector.load %arg3[%c0_105, %c0_106] : memref<16x8xf32, #tpu.memory_space<vmem>>, vector<16x8xf32>
    %122 = vector.extract_strided_slice %120 {offsets = [0, 19], sizes = [8, 16], strides = [1, 1]} : vector<8x324xf32> to vector<8x16xf32>
    %123 = vector.extract_strided_slice %120 {offsets = [0, 37], sizes = [8, 16], strides = [1, 1]} : vector<8x324xf32> to vector<8x16xf32>
    %124 = arith.addf %122, %123 : vector<8x16xf32>
    %cst_107 = arith.constant dense<0.000000e+00> : vector<8x8xf32>
    %125 = tpu.matmul %124, %121, %cst_107 {dimension_numbers = #tpu.dot_dimension_numbers<[1], [0], [0], [1], [0, 0, 1, 1], [], []>, precision = #tpu.contract_precision<fp32>} : vector<8x16xf32>, vector<16x8xf32>, vector<8x8xf32> -> vector<8x8xf32>
    %c0_108 = arith.constant 0 : index
    %c0_109 = arith.constant 0 : index
    %c0_110 = arith.constant 0 : index
    %126 = vector.load %arg10[%c0_108, %c0_109, %c0_110] : memref<1x8x64xf32, #tpu.memory_space<vmem>>, vector<1x8x8xf32>
    %127 = vector.shape_cast %126 : vector<1x8x8xf32> to vector<8x8xf32>
    %128 = vector.shape_cast %125 : vector<8x8xf32> to vector<1x8x8xf32>
    tpu.vector_store %arg10[%c0_108, %c0_109, %c0_110], %128 {strides = array<i32>} : memref<1x8x64xf32, #tpu.memory_space<vmem>>, vector<1x8x8xf32>,
    %129 = vector.extract_strided_slice %120 {offsets = [0, 55], sizes = [8, 16], strides = [1, 1]} : vector<8x324xf32> to vector<8x16xf32>
    %130 = vector.extract_strided_slice %120 {offsets = [0, 73], sizes = [8, 16], strides = [1, 1]} : vector<8x324xf32> to vector<8x16xf32>
    %131 = arith.addf %129, %130 : vector<8x16xf32>
    %cst_111 = arith.constant dense<0.000000e+00> : vector<8x8xf32>
    %132 = tpu.matmul %131, %121, %cst_111 {dimension_numbers = #tpu.dot_dimension_numbers<[1], [0], [0], [1], [0, 0, 1, 1], [], []>, precision = #tpu.contract_precision<fp32>} : vector<8x16xf32>, vector<16x8xf32>, vector<8x8xf32> -> vector<8x8xf32>
    %c0_112 = arith.constant 0 : index
    %c0_113 = arith.constant 0 : index
    %c8 = arith.constant 8 : index
    %133 = vector.load %arg10[%c0_112, %c0_113, %c8] : memref<1x8x64xf32, #tpu.memory_space<vmem>>, vector<1x8x8xf32>
    %134 = vector.shape_cast %133 : vector<1x8x8xf32> to vector<8x8xf32>
    %135 = vector.shape_cast %132 : vector<8x8xf32> to vector<1x8x8xf32>
    tpu.vector_store %arg10[%c0_112, %c0_113, %c8], %135 {strides = array<i32>} : memref<1x8x64xf32, #tpu.memory_space<vmem>>, vector<1x8x8xf32>,
    %136 = vector.extract_strided_slice %120 {offsets = [0, 91], sizes = [8, 16], strides = [1, 1]} : vector<8x324xf32> to vector<8x16xf32>
    %137 = vector.extract_strided_slice %120 {offsets = [0, 109], sizes = [8, 16], strides = [1, 1]} : vector<8x324xf32> to vector<8x16xf32>
    %138 = arith.addf %136, %137 : vector<8x16xf32>
    %cst_114 = arith.constant dense<0.000000e+00> : vector<8x8xf32>
    %139 = tpu.matmul %138, %121, %cst_114 {dimension_numbers = #tpu.dot_dimension_numbers<[1], [0], [0], [1], [0, 0, 1, 1], [], []>, precision = #tpu.contract_precision<fp32>} : vector<8x16xf32>, vector<16x8xf32>, vector<8x8xf32> -> vector<8x8xf32>
    %c0_115 = arith.constant 0 : index
    %c0_116 = arith.constant 0 : index
    %c16_117 = arith.constant 16 : index
    %140 = vector.load %arg10[%c0_115, %c0_116, %c16_117] : memref<1x8x64xf32, #tpu.memory_space<vmem>>, vector<1x8x8xf32>
    %141 = vector.shape_cast %140 : vector<1x8x8xf32> to vector<8x8xf32>
    %142 = vector.shape_cast %139 : vector<8x8xf32> to vector<1x8x8xf32>
    tpu.vector_store %arg10[%c0_115, %c0_116, %c16_117], %142 {strides = array<i32>} : memref<1x8x64xf32, #tpu.memory_space<vmem>>, vector<1x8x8xf32>,
    %143 = vector.extract_strided_slice %120 {offsets = [0, 127], sizes = [8, 16], strides = [1, 1]} : vector<8x324xf32> to vector<8x16xf32>
    %144 = vector.extract_strided_slice %120 {offsets = [0, 145], sizes = [8, 16], strides = [1, 1]} : vector<8x324xf32> to vector<8x16xf32>
    %145 = arith.addf %143, %144 : vector<8x16xf32>
    %cst_118 = arith.constant dense<0.000000e+00> : vector<8x8xf32>
    %146 = tpu.matmul %145, %121, %cst_118 {dimension_numbers = #tpu.dot_dimension_numbers<[1], [0], [0], [1], [0, 0, 1, 1], [], []>, precision = #tpu.contract_precision<fp32>} : vector<8x16xf32>, vector<16x8xf32>, vector<8x8xf32> -> vector<8x8xf32>
    %c0_119 = arith.constant 0 : index
    %c0_120 = arith.constant 0 : index
    %c24 = arith.constant 24 : index
    %147 = vector.load %arg10[%c0_119, %c0_120, %c24] : memref<1x8x64xf32, #tpu.memory_space<vmem>>, vector<1x8x8xf32>
    %148 = vector.shape_cast %147 : vector<1x8x8xf32> to vector<8x8xf32>
    %149 = vector.shape_cast %146 : vector<8x8xf32> to vector<1x8x8xf32>
    tpu.vector_store %arg10[%c0_119, %c0_120, %c24], %149 {strides = array<i32>} : memref<1x8x64xf32, #tpu.memory_space<vmem>>, vector<1x8x8xf32>,
    %150 = vector.extract_strided_slice %120 {offsets = [0, 163], sizes = [8, 16], strides = [1, 1]} : vector<8x324xf32> to vector<8x16xf32>
    %151 = vector.extract_strided_slice %120 {offsets = [0, 181], sizes = [8, 16], strides = [1, 1]} : vector<8x324xf32> to vector<8x16xf32>
    %152 = arith.addf %150, %151 : vector<8x16xf32>
    %cst_121 = arith.constant dense<0.000000e+00> : vector<8x8xf32>
    %153 = tpu.matmul %152, %121, %cst_121 {dimension_numbers = #tpu.dot_dimension_numbers<[1], [0], [0], [1], [0, 0, 1, 1], [], []>, precision = #tpu.contract_precision<fp32>} : vector<8x16xf32>, vector<16x8xf32>, vector<8x8xf32> -> vector<8x8xf32>
    %c0_122 = arith.constant 0 : index
    %c0_123 = arith.constant 0 : index
    %c32_124 = arith.constant 32 : index
    %154 = vector.load %arg10[%c0_122, %c0_123, %c32_124] : memref<1x8x64xf32, #tpu.memory_space<vmem>>, vector<1x8x8xf32>
    %155 = vector.shape_cast %154 : vector<1x8x8xf32> to vector<8x8xf32>
    %156 = vector.shape_cast %153 : vector<8x8xf32> to vector<1x8x8xf32>
    tpu.vector_store %arg10[%c0_122, %c0_123, %c32_124], %156 {strides = array<i32>} : memref<1x8x64xf32, #tpu.memory_space<vmem>>, vector<1x8x8xf32>,
    %157 = vector.extract_strided_slice %120 {offsets = [0, 199], sizes = [8, 16], strides = [1, 1]} : vector<8x324xf32> to vector<8x16xf32>
    %158 = vector.extract_strided_slice %120 {offsets = [0, 217], sizes = [8, 16], strides = [1, 1]} : vector<8x324xf32> to vector<8x16xf32>
    %159 = arith.addf %157, %158 : vector<8x16xf32>
    %cst_125 = arith.constant dense<0.000000e+00> : vector<8x8xf32>
    %160 = tpu.matmul %159, %121, %cst_125 {dimension_numbers = #tpu.dot_dimension_numbers<[1], [0], [0], [1], [0, 0, 1, 1], [], []>, precision = #tpu.contract_precision<fp32>} : vector<8x16xf32>, vector<16x8xf32>, vector<8x8xf32> -> vector<8x8xf32>
    %c0_126 = arith.constant 0 : index
    %c0_127 = arith.constant 0 : index
    %c40 = arith.constant 40 : index
    %161 = vector.load %arg10[%c0_126, %c0_127, %c40] : memref<1x8x64xf32, #tpu.memory_space<vmem>>, vector<1x8x8xf32>
    %162 = vector.shape_cast %161 : vector<1x8x8xf32> to vector<8x8xf32>
    %163 = vector.shape_cast %160 : vector<8x8xf32> to vector<1x8x8xf32>
    tpu.vector_store %arg10[%c0_126, %c0_127, %c40], %163 {strides = array<i32>} : memref<1x8x64xf32, #tpu.memory_space<vmem>>, vector<1x8x8xf32>,
    %164 = vector.extract_strided_slice %120 {offsets = [0, 235], sizes = [8, 16], strides = [1, 1]} : vector<8x324xf32> to vector<8x16xf32>
    %165 = vector.extract_strided_slice %120 {offsets = [0, 253], sizes = [8, 16], strides = [1, 1]} : vector<8x324xf32> to vector<8x16xf32>
    %166 = arith.addf %164, %165 : vector<8x16xf32>
    %cst_128 = arith.constant dense<0.000000e+00> : vector<8x8xf32>
    %167 = tpu.matmul %166, %121, %cst_128 {dimension_numbers = #tpu.dot_dimension_numbers<[1], [0], [0], [1], [0, 0, 1, 1], [], []>, precision = #tpu.contract_precision<fp32>} : vector<8x16xf32>, vector<16x8xf32>, vector<8x8xf32> -> vector<8x8xf32>
    %c0_129 = arith.constant 0 : index
    %c0_130 = arith.constant 0 : index
    %c48_131 = arith.constant 48 : index
    %168 = vector.load %arg10[%c0_129, %c0_130, %c48_131] : memref<1x8x64xf32, #tpu.memory_space<vmem>>, vector<1x8x8xf32>
    %169 = vector.shape_cast %168 : vector<1x8x8xf32> to vector<8x8xf32>
    %170 = vector.shape_cast %167 : vector<8x8xf32> to vector<1x8x8xf32>
    tpu.vector_store %arg10[%c0_129, %c0_130, %c48_131], %170 {strides = array<i32>} : memref<1x8x64xf32, #tpu.memory_space<vmem>>, vector<1x8x8xf32>,
    %171 = vector.extract_strided_slice %120 {offsets = [0, 271], sizes = [8, 16], strides = [1, 1]} : vector<8x324xf32> to vector<8x16xf32>
    %172 = vector.extract_strided_slice %120 {offsets = [0, 289], sizes = [8, 16], strides = [1, 1]} : vector<8x324xf32> to vector<8x16xf32>
    %173 = arith.addf %171, %172 : vector<8x16xf32>
    %cst_132 = arith.constant dense<0.000000e+00> : vector<8x8xf32>
    %174 = tpu.matmul %173, %121, %cst_132 {dimension_numbers = #tpu.dot_dimension_numbers<[1], [0], [0], [1], [0, 0, 1, 1], [], []>, precision = #tpu.contract_precision<fp32>} : vector<8x16xf32>, vector<16x8xf32>, vector<8x8xf32> -> vector<8x8xf32>
    %c0_133 = arith.constant 0 : index
    %c0_134 = arith.constant 0 : index
    %c56_135 = arith.constant 56 : index
    %175 = vector.load %arg10[%c0_133, %c0_134, %c56_135] : memref<1x8x64xf32, #tpu.memory_space<vmem>>, vector<1x8x8xf32>
    %176 = vector.shape_cast %175 : vector<1x8x8xf32> to vector<8x8xf32>
    %177 = vector.shape_cast %174 : vector<8x8xf32> to vector<1x8x8xf32>
    tpu.vector_store %arg10[%c0_133, %c0_134, %c56_135], %177 {strides = array<i32>} : memref<1x8x64xf32, #tpu.memory_space<vmem>>, vector<1x8x8xf32>,
    return
  }
  func.func @transform_0(%arg0: i32) -> (i32, i32, i32) {
    %c0_i32 = arith.constant 0 : i32
    %c0_i32_0 = arith.constant 0 : i32
    %c0_i32_1 = arith.constant 0 : i32
    return %arg0, %c0_i32, %c0_i32_0 : i32, i32, i32
  }
  func.func @transform_1(%arg0: i32) -> (i32, i32) {
    %c0_i32 = arith.constant 0 : i32
    %c0_i32_0 = arith.constant 0 : i32
    %c0_i32_1 = arith.constant 0 : i32
    return %c0_i32, %c0_i32_0 : i32, i32
  }
  func.func @transform_2(%arg0: i32) -> (i32, i32) {
    %c0_i32 = arith.constant 0 : i32
    %c0_i32_0 = arith.constant 0 : i32
    %c0_i32_1 = arith.constant 0 : i32
    return %c0_i32, %c0_i32_0 : i32, i32
  }
  func.func @transform_3(%arg0: i32) -> (i32, i32) {
    %c0_i32 = arith.constant 0 : i32
    %c0_i32_0 = arith.constant 0 : i32
    %c0_i32_1 = arith.constant 0 : i32
    return %c0_i32, %c0_i32_0 : i32, i32
  }
  func.func @transform_4(%arg0: i32) -> (i32, i32) {
    %c0_i32 = arith.constant 0 : i32
    %c0_i32_0 = arith.constant 0 : i32
    %c0_i32_1 = arith.constant 0 : i32
    return %c0_i32, %c0_i32_0 : i32, i32
  }
  func.func @transform_5(%arg0: i32) -> (i32, i32) {
    %c0_i32 = arith.constant 0 : i32
    %c0_i32_0 = arith.constant 0 : i32
    %c0_i32_1 = arith.constant 0 : i32
    return %c0_i32, %c0_i32_0 : i32, i32
  }
  func.func @transform_6(%arg0: i32) -> (i32, i32) {
    %c0_i32 = arith.constant 0 : i32
    %c0_i32_0 = arith.constant 0 : i32
    %c0_i32_1 = arith.constant 0 : i32
    return %c0_i32, %c0_i32_0 : i32, i32
  }
  func.func @transform_7(%arg0: i32) -> (i32, i32) {
    %c0_i32 = arith.constant 0 : i32
    %c0_i32_0 = arith.constant 0 : i32
    %c0_i32_1 = arith.constant 0 : i32
    return %c0_i32, %c0_i32_0 : i32, i32
  }
  func.func @transform_8(%arg0: i32) -> (i32, i32) {
    %c0_i32 = arith.constant 0 : i32
    %c0_i32_0 = arith.constant 0 : i32
    %c0_i32_1 = arith.constant 0 : i32
    return %c0_i32, %c0_i32_0 : i32, i32
  }
  func.func @transform_9(%arg0: i32) -> (i32, i32, i32) {
    %c0_i32 = arith.constant 0 : i32
    %c0_i32_0 = arith.constant 0 : i32
    %c0_i32_1 = arith.constant 0 : i32
    return %arg0, %c0_i32, %c0_i32_0 : i32, i32, i32
  }
}

</mosaic_0001>

<llo_original>
// kernel: conv_block_forward.1
$region0: #{conv_block_forward.1}
  #allocation0 [shape = 'u32[]', space=smem, size = 0x4, offset = 0x4, fixed_abs, tag = 'smem constant byte address 0x4 - core index']
  #allocation1 [shape = 'u32[144,128]{1,0:T(1,128)}', space=vmem, size = 0x12000, scoped, tag = 'internal scratch']
  #allocation2 [shape = 'bf16[4,362]{1,0:T(4,128)(2,1)}', space=vmem, size = 0xc00, scoped, tag = 'scratch operand']
  %s0 = inlined_call_operand.vmem [shape: f32[2,4,256], index: 0, kind: input, shape index: {}]
  %s1 = inlined_call_operand.vmem [shape: f32[1,324], index: 1, kind: input, shape index: {}]
  %s2 = inlined_call_operand.vmem [shape: f32[16,8], index: 2, kind: input, shape index: {}]
  %s3 = inlined_call_operand.vmem [shape: bf16[4,36], index: 3, kind: input, shape index: {}]
  %s4 = inlined_call_operand.vmem [shape: f32[4,1], index: 4, kind: input, shape index: {}]
  %s5 = inlined_call_operand.vmem [shape: bf16[8,36], index: 5, kind: input, shape index: {}]
  %s6 = inlined_call_operand.vmem [shape: f32[8,1], index: 6, kind: input, shape index: {}]
  %s7 = inlined_call_operand.vmem [shape: bf16[8,4], index: 7, kind: input, shape index: {}]
  %s8 = inlined_call_operand.vmem [shape: f32[8,1], index: 8, kind: input, shape index: {}]
  %s9 = inlined_call_operand.vmem [shape: f32[2,8,64], index: 9, kind: output, shape index: {}]
  %s10 = sld [smem:[#allocation0]]
  $region69: #{conv_block_forward.1} parent=0
    _
  %s12 = ssub.s32 1, %s10
  %s13 = scalar_select 0, %s12, %s10
  loop: start=0, step=1, limit=4
  $region2: #{conv_block_forward.1} parent=0 // loop_pre_header
    _
  $region3: #{conv_block_forward.1} parent=0 // loop_header
    %s15 = sphi 0, %s19
    %p16 = scmp.ge.s32.totalorder %s15, 4
    %s25 = sphi 0, %s27
    %s28 = sphi 0, %s25
    %s29 = sphi 0, %s28
    %s45 = sphi 0, %s29
    %s49 = sphi 0, %s49
    %s51 = sphi 0, %s49
    %s52 = sphi 0, %s51
    %s66 = sphi 0, %s52
    %s70 = sphi 0, %s70
    %s72 = sphi 0, %s70
    %s73 = sphi 0, %s72
    %s87 = sphi 0, %s73
    %s91 = sphi 0, %s91
    %s93 = sphi 0, %s91
    %s94 = sphi 0, %s93
    %s108 = sphi 0, %s94
    %s112 = sphi 0, %s112
    %s114 = sphi 0, %s112
    %s115 = sphi 0, %s114
    %s129 = sphi 0, %s115
    %s133 = sphi 0, %s133
    %s135 = sphi 0, %s133
    %s136 = sphi 0, %s135
    %s150 = sphi 0, %s136
    %s154 = sphi 0, %s154
    %s156 = sphi 0, %s154
    %s157 = sphi 0, %s156
    %s171 = sphi 0, %s157
    %s175 = sphi 0, %s175
    %s177 = sphi 0, %s175
    %s178 = sphi 0, %s177
    %s192 = sphi 0, %s178
    %s196 = sphi 0, %s196
    %s198 = sphi 0, %s196
    %s199 = sphi 0, %s198
    %s213 = sphi 0, %s199
    %s219 = sphi 0, %s221
    %s222 = sphi 0, %s219
    %s223 = sphi 0, %s222
    %s239 = sphi 0, %s223
  $region4: #{conv_block_forward.1} parent=0 // loop_header_branch
    %18 = sbr.rel (%p16) target = $region8
  $region5: #{conv_block_forward.1} parent=0 // loop_body
    %s20 = ssub.s32 %s15, 1
    %s21 = ssub.s32 %s15, 2
    %s22 = sadd.s32 %s15, 1
    %s23 = ssub.s32 %s15, %s22
    %p24 = scmp.eq.s32.totalorder %s23, 0
    %s26 = sadd.s32 %s25, 1
    %s27 = scalar_select %p24, %s25, %s26
    %p30 = pneg %p24
    %p31 = scmp.eq.s32.totalorder %s15, 1
    %p32 = por %p30, %p31
    %p33 = scmp.ne.s32.totalorder %s25, %s28
    %p34 = scmp.eq.s32.totalorder %s15, 0
    %p35 = por %p33, %p34
    %p36 = scmp.ne.s32.totalorder %s25, %s28
    %p37 = scmp.eq.s32.totalorder %s20, 1
    %p38 = por %p36, %p37
    %p39 = scmp.ne.s32.totalorder %s28, %s29
    %p40 = scmp.eq.s32.totalorder %s20, 0
    %p41 = por %p39, %p40
    %p42 = scmp.ne.s32.totalorder %s28, %s29
    %p43 = scmp.eq.s32.totalorder %s21, 1
    %p44 = por %p42, %p43
    %p46 = scmp.ne.s32.totalorder %s29, %s45
    %p47 = scmp.eq.s32.totalorder %s21, 0
    %p48 = por %p46, %p47
    %s50 = sadd.s32 %s49, 1
    %p53 = scmp.eq.s32.totalorder %s15, 1
    %p54 = scmp.ne.s32.totalorder %s49, %s51
    %p55 = scmp.eq.s32.totalorder %s15, 0
    %p56 = por %p54, %p55
    %p57 = scmp.ne.s32.totalorder %s49, %s51
    %p58 = scmp.eq.s32.totalorder %s20, 1
    %p59 = por %p57, %p58
    %p60 = scmp.ne.s32.totalorder %s51, %s52
    %p61 = scmp.eq.s32.totalorder %s20, 0
    %p62 = por %p60, %p61
    %p63 = scmp.ne.s32.totalorder %s51, %s52
    %p64 = scmp.eq.s32.totalorder %s21, 1
    %p65 = por %p63, %p64
    %p67 = scmp.ne.s32.totalorder %s52, %s66
    %p68 = scmp.eq.s32.totalorder %s21, 0
    %p69 = por %p67, %p68
    %s71 = sadd.s32 %s70, 1
    %p74 = scmp.eq.s32.totalorder %s15, 1
    %p75 = scmp.ne.s32.totalorder %s70, %s72
    %p76 = scmp.eq.s32.totalorder %s15, 0
    %p77 = por %p75, %p76
    %p78 = scmp.ne.s32.totalorder %s70, %s72
    %p79 = scmp.eq.s32.totalorder %s20, 1
    %p80 = por %p78, %p79
    %p81 = scmp.ne.s32.totalorder %s72, %s73
    %p82 = scmp.eq.s32.totalorder %s20, 0
    %p83 = por %p81, %p82
    %p84 = scmp.ne.s32.totalorder %s72, %s73
    %p85 = scmp.eq.s32.totalorder %s21, 1
    %p86 = por %p84, %p85
    %p88 = scmp.ne.s32.totalorder %s73, %s87
    %p89 = scmp.eq.s32.totalorder %s21, 0
    %p90 = por %p88, %p89
    %s92 = sadd.s32 %s91, 1
    %p95 = scmp.eq.s32.totalorder %s15, 1
    %p96 = scmp.ne.s32.totalorder %s91, %s93
    %p97 = scmp.eq.s32.totalorder %s15, 0
    %p98 = por %p96, %p97
    %p99 = scmp.ne.s32.totalorder %s91, %s93
    %p100 = scmp.eq.s32.totalorder %s20, 1
    %p101 = por %p99, %p100
    %p102 = scmp.ne.s32.totalorder %s93, %s94
    %p103 = scmp.eq.s32.totalorder %s20, 0
    %p104 = por %p102, %p103
    %p105 = scmp.ne.s32.totalorder %s93, %s94
    %p106 = scmp.eq.s32.totalorder %s21, 1
    %p107 = por %p105, %p106
    %p109 = scmp.ne.s32.totalorder %s94, %s108
    %p110 = scmp.eq.s32.totalorder %s21, 0
    %p111 = por %p109, %p110
    %s113 = sadd.s32 %s112, 1
    %p116 = scmp.eq.s32.totalorder %s15, 1
    %p117 = scmp.ne.s32.totalorder %s112, %s114
    %p118 = scmp.eq.s32.totalorder %s15, 0
    %p119 = por %p117, %p118
    %p120 = scmp.ne.s32.totalorder %s112, %s114
    %p121 = scmp.eq.s32.totalorder %s20, 1
    %p122 = por %p120, %p121
    %p123 = scmp.ne.s32.totalorder %s114, %s115
    %p124 = scmp.eq.s32.totalorder %s20, 0
    %p125 = por %p123, %p124
    %p126 = scmp.ne.s32.totalorder %s114, %s115
    %p127 = scmp.eq.s32.totalorder %s21, 1
    %p128 = por %p126, %p127
    %p130 = scmp.ne.s32.totalorder %s115, %s129
    %p131 = scmp.eq.s32.totalorder %s21, 0
    %p132 = por %p130, %p131
    %s134 = sadd.s32 %s133, 1
    %p137 = scmp.eq.s32.totalorder %s15, 1
    %p138 = scmp.ne.s32.totalorder %s133, %s135
    %p139 = scmp.eq.s32.totalorder %s15, 0
    %p140 = por %p138, %p139
    %p141 = scmp.ne.s32.totalorder %s133, %s135
    %p142 = scmp.eq.s32.totalorder %s20, 1
    %p143 = por %p141, %p142
    %p144 = scmp.ne.s32.totalorder %s135, %s136
    %p145 = scmp.eq.s32.totalorder %s20, 0
    %p146 = por %p144, %p145
    %p147 = scmp.ne.s32.totalorder %s135, %s136
    %p148 = scmp.eq.s32.totalorder %s21, 1
    %p149 = por %p147, %p148
    %p151 = scmp.ne.s32.totalorder %s136, %s150
    %p152 = scmp.eq.s32.totalorder %s21, 0
    %p153 = por %p151, %p152
    %s155 = sadd.s32 %s154, 1
    %p158 = scmp.eq.s32.totalorder %s15, 1
    %p159 = scmp.ne.s32.totalorder %s154, %s156
    %p160 = scmp.eq.s32.totalorder %s15, 0
    %p161 = por %p159, %p160
    %p162 = scmp.ne.s32.totalorder %s154, %s156
    %p163 = scmp.eq.s32.totalorder %s20, 1
    %p164 = por %p162, %p163
    %p165 = scmp.ne.s32.totalorder %s156, %s157
    %p166 = scmp.eq.s32.totalorder %s20, 0
    %p167 = por %p165, %p166
    %p168 = scmp.ne.s32.totalorder %s156, %s157
    %p169 = scmp.eq.s32.totalorder %s21, 1
    %p170 = por %p168, %p169
    %p172 = scmp.ne.s32.totalorder %s157, %s171
    %p173 = scmp.eq.s32.totalorder %s21, 0
    %p174 = por %p172, %p173
    %s176 = sadd.s32 %s175, 1
    %p179 = scmp.eq.s32.totalorder %s15, 1
    %p180 = scmp.ne.s32.totalorder %s175, %s177
    %p181 = scmp.eq.s32.totalorder %s15, 0
    %p182 = por %p180, %p181
    %p183 = scmp.ne.s32.totalorder %s175, %s177
    %p184 = scmp.eq.s32.totalorder %s20, 1
    %p185 = por %p183, %p184
    %p186 = scmp.ne.s32.totalorder %s177, %s178
    %p187 = scmp.eq.s32.totalorder %s20, 0
    %p188 = por %p186, %p187
    %p189 = scmp.ne.s32.totalorder %s177, %s178
    %p190 = scmp.eq.s32.totalorder %s21, 1
    %p191 = por %p189, %p190
    %p193 = scmp.ne.s32.totalorder %s178, %s192
    %p194 = scmp.eq.s32.totalorder %s21, 0
    %p195 = por %p193, %p194
    %s197 = sadd.s32 %s196, 1
    %p200 = scmp.eq.s32.totalorder %s15, 1
    %p201 = scmp.ne.s32.totalorder %s196, %s198
    %p202 = scmp.eq.s32.totalorder %s15, 0
    %p203 = por %p201, %p202
    %p204 = scmp.ne.s32.totalorder %s196, %s198
    %p205 = scmp.eq.s32.totalorder %s20, 1
    %p206 = por %p204, %p205
    %p207 = scmp.ne.s32.totalorder %s198, %s199
    %p208 = scmp.eq.s32.totalorder %s20, 0
    %p209 = por %p207, %p208
    %p210 = scmp.ne.s32.totalorder %s198, %s199
    %p211 = scmp.eq.s32.totalorder %s21, 1
    %p212 = por %p210, %p211
    %p214 = scmp.ne.s32.totalorder %s199, %s213
    %p215 = scmp.eq.s32.totalorder %s21, 0
    %p216 = por %p214, %p215
    %s217 = ssub.s32 %s15, %s22
    %p218 = scmp.eq.s32.totalorder %s217, 0
    %s220 = sadd.s32 %s219, 1
    %s221 = scalar_select %p218, %s219, %s220
    %p224 = pneg %p218
    %p225 = scmp.eq.s32.totalorder %s15, 1
    %p226 = por %p224, %p225
    %p227 = scmp.ne.s32.totalorder %s219, %s222
    %p228 = scmp.eq.s32.totalorder %s15, 0
    %p229 = por %p227, %p228
    %p230 = scmp.ne.s32.totalorder %s219, %s222
    %p231 = scmp.eq.s32.totalorder %s20, 1
    %p232 = por %p230, %p231
    %p233 = scmp.ne.s32.totalorder %s222, %s223
    %p234 = scmp.eq.s32.totalorder %s20, 0
    %p235 = por %p233, %p234
    %p236 = scmp.ne.s32.totalorder %s222, %s223
    %p237 = scmp.eq.s32.totalorder %s21, 1
    %p238 = por %p236, %p237
    %p240 = scmp.ne.s32.totalorder %s223, %s239
    %p241 = scmp.eq.s32.totalorder %s21, 0
    %p242 = por %p240, %p241
    %p243 = scmp.le.s32.totalorder 1, %s15
    %p244 = scmp.lt.s32.totalorder %s15, 3
    %p245 = pnand %p243, %p244
    %p246 = pneg %p245
    // Predicated region
    $region9: #{conv_block_forward.1} parent=5 // pred_check
      _
    $region10: #{conv_block_forward.1} parent=5 // pred_check_branch
      %248 = sbr.rel (%p245) target = $region12
    $region11: #{conv_block_forward.1} parent=5 // pred_region
      %s249 = ssub.s32 %s15, 1
      // Predicated region
      $region13: #{conv_block_forward.1} parent=11 // pred_check
        %p250 = pneg %p62
      $region14: #{conv_block_forward.1} parent=11 // pred_check_branch
        %252 = sbr.rel (%p250) target = $region16
      $region15: #{conv_block_forward.1} parent=11 // pred_region
        _
      $region16: #{conv_block_forward.1} parent=11 // pred_fallthru
        _
      // Predicated region
      $region17: #{conv_block_forward.1} parent=11 // pred_check
        %p253 = pneg %p83
      $region18: #{conv_block_forward.1} parent=11 // pred_check_branch
        %255 = sbr.rel (%p253) target = $region20
      $region19: #{conv_block_forward.1} parent=11 // pred_region
        _
      $region20: #{conv_block_forward.1} parent=11 // pred_fallthru
        _
      // Predicated region
      $region21: #{conv_block_forward.1} parent=11 // pred_check
        %p256 = pneg %p104
      $region22: #{conv_block_forward.1} parent=11 // pred_check_branch
        %258 = sbr.rel (%p256) target = $region24
      $region23: #{conv_block_forward.1} parent=11 // pred_region
        _
      $region24: #{conv_block_forward.1} parent=11 // pred_fallthru
        _
      // Predicated region
      $region25: #{conv_block_forward.1} parent=11 // pred_check
        %p259 = pneg %p125
      $region26: #{conv_block_forward.1} parent=11 // pred_check_branch
        %261 = sbr.rel (%p259) target = $region28
      $region27: #{conv_block_forward.1} parent=11 // pred_region
        _
      $region28: #{conv_block_forward.1} parent=11 // pred_fallthru
        _
      // Predicated region
      $region29: #{conv_block_forward.1} parent=11 // pred_check
        %p262 = pneg %p146
      $region30: #{conv_block_forward.1} parent=11 // pred_check_branch
        %264 = sbr.rel (%p262) target = $region32
      $region31: #{conv_block_forward.1} parent=11 // pred_region
        _
      $region32: #{conv_block_forward.1} parent=11 // pred_fallthru
        _
      // Predicated region
      $region33: #{conv_block_forward.1} parent=11 // pred_check
        %p265 = pneg %p167
      $region34: #{conv_block_forward.1} parent=11 // pred_check_branch
        %267 = sbr.rel (%p265) target = $region36
      $region35: #{conv_block_forward.1} parent=11 // pred_region
        _
      $region36: #{conv_block_forward.1} parent=11 // pred_fallthru
        _
      // Predicated region
      $region37: #{conv_block_forward.1} parent=11 // pred_check
        %p268 = pneg %p188
      $region38: #{conv_block_forward.1} parent=11 // pred_check_branch
        %270 = sbr.rel (%p268) target = $region40
      $region39: #{conv_block_forward.1} parent=11 // pred_region
        _
      $region40: #{conv_block_forward.1} parent=11 // pred_fallthru
        _
      // Predicated region
      $region41: #{conv_block_forward.1} parent=11 // pred_check
        %p271 = pneg %p209
      $region42: #{conv_block_forward.1} parent=11 // pred_check_branch
        %273 = sbr.rel (%p271) target = $region44
      $region43: #{conv_block_forward.1} parent=11 // pred_region
        _
      $region44: #{conv_block_forward.1} parent=11 // pred_fallthru
        _
    $region12: #{conv_block_forward.1} parent=5 // pred_fallthru
      _
    %p274 = scmp.lt.s32.totalorder %s15, 2
    // Predicated region
    $region45: #{conv_block_forward.1} parent=5 // pred_check
      %p275 = pneg %p274
    $region46: #{conv_block_forward.1} parent=5 // pred_check_branch
      %277 = sbr.rel (%p275) target = $region48
    $region47: #{conv_block_forward.1} parent=5 // pred_region
      // Predicated region
      $region49: #{conv_block_forward.1} parent=47 // pred_check
        %p278 = pneg %p35
      $region50: #{conv_block_forward.1} parent=47 // pred_check_branch
        %280 = sbr.rel (%p278) target = $region52
      $region51: #{conv_block_forward.1} parent=47 // pred_region
        %p281 = scmp.lt.s32.totalorder %s15, 1
        %s282 = scalar_select %p281, %s15, 1
        %s283 = smul.addr %s282, 2
        %s284 = smul.addr %s283, 4
        %s285 = scalar_lea.vmem %s0, %s284
      $region52: #{conv_block_forward.1} parent=47 // pred_fallthru
        _
    $region48: #{conv_block_forward.1} parent=5 // pred_fallthru
      _
    %p286 = scmp.le.s32.totalorder 1, %s15
    %p287 = scmp.lt.s32.totalorder %s15, 3
    %p288 = pnand %p286, %p287
    %p289 = pneg %p288
    // Predicated region
    $region53: #{conv_block_forward.1} parent=5 // pred_check
      _
    $region54: #{conv_block_forward.1} parent=5 // pred_check_branch
      %291 = sbr.rel (%p288) target = $region56
    $region55: #{conv_block_forward.1} parent=5 // pred_region
      %s292 = ssub.s32 %s15, 1
      %p293 = scmp.lt.s32.totalorder %s20, 1
      %s294 = scalar_select %p293, %s20, 1
      %s295 = smul.addr %s294, 2
      %s296 = smul.addr %s295, 4
      %s297 = scalar_lea.vmem %s0, %s296
      %p298 = pneg %p41
      %p299 = pneg %p38
      %p300 = pneg %p62
      %p301 = pneg %p59
      %p302 = pneg %p83
      %p303 = pneg %p80
      %p304 = pneg %p104
      %p305 = pneg %p101
      %p306 = pneg %p125
      %p307 = pneg %p122
      %p308 = pneg %p146
      %p309 = pneg %p143
      %p310 = pneg %p167
      %p311 = pneg %p164
      %p312 = pneg %p188
      %p313 = pneg %p185
      %p314 = pneg %p209
      %p315 = pneg %p206
      %p316 = pneg %p235
      %p317 = pneg %p232
      %p318 = scmp.lt.s32.totalorder %s20, 1
      %s319 = scalar_select %p318, %s20, 1
      %s320 = smul.addr %s319, 8
      %s321 = scalar_lea.vmem %s9, %s320
      %p322 = scmp.lt.s32.totalorder %s20, 1
      %s323 = scalar_select %p322, %s20, 1
      %s324 = smul.addr %s323, 2
      %s325 = smul.addr %s324, 4
      %s326 = scalar_lea.vmem %s0, %s325
      %p327 = scmp.lt.s32.totalorder %s20, 1
      %s328 = scalar_select %p327, %s20, 1
      %s329 = smul.addr %s328, 8
      %s330 = scalar_lea.vmem %s9, %s329
      %vm332 = vcmask 1041408
      %vm333 = vcmask 1043458
      %vm334 = vmor %vm333, %vm332
      %vm335 = vcmask 865284
      %vm336 = vmor %vm335, %vm334
      %337 = vst.msk [vmem:[#allocation2] sm:$0x3f] %vm336, 0
      %v338 = vld [vmem:[%s326] sm:$0xf]
      %v339 = vpack.c.bf16 %v338, %v338
      %v342 = vunpack.c.l.s4 1983009808
      %v343 = vunpack.c.0.s8 %v342
      %v344 = vlaneseq
      %v345 = vshrl.u32 %v344, 7
      %v346 = vsub.s32 %v343, %v345
      %v347 = vrot.slane %v339, %v346
      %348 = vrot.lane.b32.xlu0 %v347, 38
      %v349 = vpop.permute.xlu0 %348
      %vm351 = vcmask 435504
      %352 = vst.msk [vmem:[#allocation2] sm:$0x3] %vm351, %v349
      %v353 = vld [vmem:[%s326] sm:$0xf]
      %v354 = vpack.c.bf16 %v353, %v353
      %v357 = vunpack.c.l.s4 1983009808
      %v358 = vunpack.c.0.s8 %v357
      %v359 = vlaneseq
      %v360 = vshrl.u32 %v359, 7
      %v361 = vsub.s32 %v358, %v360
      %v362 = vrot.slane %v354, %v361
      %363 = vrot.lane.b32.xlu0 %v362, 40
      %v364 = vpop.permute.xlu0 %363
      %vm366 = vcmask 583104
      %367 = vst.msk [vmem:[#allocation2] sm:$0x3] %vm366, %v364
      %v368 = vld [vmem:[%s326] sm:$0xf]
      %v369 = vpack.c.bf16 %v368, %v368
      %v372 = vunpack.c.l.s4 1983009808
      %v373 = vunpack.c.0.s8 %v372
      %v374 = vlaneseq
      %v375 = vshrl.u32 %v374, 7
      %v376 = vsub.s32 %v373, %v375
      %v377 = vrot.slane %v369, %v376
      %378 = vrot.lane.b32.xlu0 %v377, 42
      %v379 = vpop.permute.xlu0 %378
      %vm381 = vcmask 730704
      %382 = vst.msk [vmem:[#allocation2] sm:$0x3] %vm381, %v379
      %v383 = vld [vmem:[%s326] sm:$0xf]
      %v384 = vpack.c.bf16 %v383, %v383
      %v387 = vunpack.c.l.s4 1983009808
      %v388 = vunpack.c.0.s8 %v387
      %v389 = vlaneseq
      %v390 = vshrl.u32 %v389, 7
      %v391 = vsub.s32 %v388, %v390
      %v392 = vrot.slane %v384, %v391
      %393 = vrot.lane.b32.xlu0 %v392, 44
      %v394 = vpop.permute.xlu0 %393
      %vm396 = vcmask 878304
      %397 = vst.msk [vmem:[#allocation2] sm:$0x3] %vm396, %v394
      %v398 = vld [vmem:[%s326] sm:$0xf]
      %v399 = vpack.c.bf16 %v398, %v398
      %v402 = vunpack.c.l.s4 1983009808
      %v403 = vunpack.c.0.s8 %v402
      %v404 = vlaneseq
      %v405 = vshrl.u32 %v404, 7
      %v406 = vsub.s32 %v403, %v405
      %v407 = vrot.slane %v399, %v406
      %408 = vrot.lane.b32.xlu0 %v407, 46
      %v409 = vpop.permute.xlu0 %408
      %vm411 = vcmask 1025904
      %412 = vst.msk [vmem:[#allocation2] sm:$0x3] %vm411, %v409
      %v413 = vld [vmem:[%s326] sm:$0xf]
      %v414 = vpack.c.bf16 %v413, %v413
      %v417 = vunpack.c.l.s4 1983009808
      %v418 = vunpack.c.0.s8 %v417
      %v419 = vlaneseq
      %v420 = vshrl.u32 %v419, 7
      %v421 = vsub.s32 %v418, %v420
      %v422 = vrot.slane %v414, %v421
      %423 = vrot.lane.b32.xlu0 %v422, 48
      %v424 = vpop.permute.xlu0 %423
      %vm426 = vcmask 123904
      %427 = vst.msk [vmem:[#allocation2 + $0x2] sm:$0x3] %vm426, %v424
      %v428 = vld [vmem:[%s326] sm:$0xf]
      %v429 = vpack.c.bf16 %v428, %v428
      %v432 = vunpack.c.l.s4 1983009808
      %v433 = vunpack.c.0.s8 %v432
      %v434 = vlaneseq
      %v435 = vshrl.u32 %v434, 7
      %v436 = vsub.s32 %v433, %v435
      %v437 = vrot.slane %v429, %v436
      %438 = vrot.lane.b32.xlu0 %v437, 50
      %v439 = vpop.permute.xlu0 %438
      %vm441 = vcmask 271504
      %442 = vst.msk [vmem:[#allocation2 + $0x2] sm:$0x3] %vm441, %v439
      %v443 = vld [vmem:[%s326] sm:$0xf]
      %v444 = vpack.c.bf16 %v443, %v443
      %v447 = vunpack.c.l.s4 1983009808
      %v448 = vunpack.c.0.s8 %v447
      %v449 = vlaneseq
      %v450 = vshrl.u32 %v449, 7
      %v451 = vsub.s32 %v448, %v450
      %v452 = vrot.slane %v444, %v451
      %453 = vrot.lane.b32.xlu0 %v452, 52
      %v454 = vpop.permute.xlu0 %453
      %vm456 = vcmask 419104
      %457 = vst.msk [vmem:[#allocation2 + $0x2] sm:$0x3] %vm456, %v454
      %v458 = vld [vmem:[%s326 + $0x4] sm:$0xf]
      %v459 = vpack.c.bf16 %v458, %v458
      %v462 = vunpack.c.l.s4 1983009808
      %v463 = vunpack.c.0.s8 %v462
      %v464 = vlaneseq
      %v465 = vshrl.u32 %v464, 7
      %v466 = vsub.s32 %v463, %v465
      %v467 = vrot.slane %v459, %v466
      %468 = vrot.lane.b32.xlu0 %v467, 54
      %v469 = vpop.permute.xlu0 %468
      %vm471 = vcmask 566704
      %472 = vst.msk [vmem:[#allocation2 + $0x2] sm:$0x3] %vm471, %v469
      %v473 = vld [vmem:[%s326 + $0x4] sm:$0xf]
      %v474 = vpack.c.bf16 %v473, %v473
      %v477 = vunpack.c.l.s4 1983009808
      %v478 = vunpack.c.0.s8 %v477
      %v479 = vlaneseq
      %v480 = vshrl.u32 %v479, 7
      %v481 = vsub.s32 %v478, %v480
      %v482 = vrot.slane %v474, %v481
      %483 = vrot.lane.b32.xlu0 %v482, 56
      %v484 = vpop.permute.xlu0 %483
      %vm486 = vcmask 714304
      %487 = vst.msk [vmem:[#allocation2 + $0x2] sm:$0x3] %vm486, %v484
      %v488 = vld [vmem:[%s326 + $0x4] sm:$0xf]
      %v489 = vpack.c.bf16 %v488, %v488
      %v492 = vunpack.c.l.s4 1983009808
      %v493 = vunpack.c.0.s8 %v492
      %v494 = vlaneseq
      %v495 = vshrl.u32 %v494, 7
      %v496 = vsub.s32 %v493, %v495
      %v497 = vrot.slane %v489, %v496
      %498 = vrot.lane.b32.xlu0 %v497, 58
      %v499 = vpop.permute.xlu0 %498
      %vm501 = vcmask 861904
      %502 = vst.msk [vmem:[#allocation2 + $0x2] sm:$0x3] %vm501, %v499
      %v503 = vld [vmem:[%s326 + $0x4] sm:$0xf]
      %v504 = vpack.c.bf16 %v503, %v503
      %v507 = vunpack.c.l.s4 1983009808
      %v508 = vunpack.c.0.s8 %v507
      %v509 = vlaneseq
      %v510 = vshrl.u32 %v509, 7
      %v511 = vsub.s32 %v508, %v510
      %v512 = vrot.slane %v504, %v511
      %513 = vrot.lane.b32.xlu0 %v512, 60
      %v514 = vpop.permute.xlu0 %513
      %vm516 = vcmask 1009504
      %517 = vst.msk [vmem:[#allocation2 + $0x2] sm:$0x3] %vm516, %v514
      %v518 = vld [vmem:[%s326 + $0x4] sm:$0xf]
      %v519 = vpack.c.bf16 %v518, %v518
      %v522 = vunpack.c.l.s4 1983009808
      %v523 = vunpack.c.0.s8 %v522
      %v524 = vlaneseq
      %v525 = vshrl.u32 %v524, 7
      %v526 = vsub.s32 %v523, %v525
      %v527 = vrot.slane %v519, %v526
      %528 = vrot.lane.b32.xlu0 %v527, 62
      %v529 = vpop.permute.xlu0 %528
      %v530 = vrot.slane %v529, 6
      %vm531 = vcmask 506880
      %v532 = vsel %vm531, %v530, %v529
      %vm534 = vcmask 1042416
      %vm535 = vcmask 109570
      %vm536 = vmor %vm535, %vm534
      %537 = vst.msk [vmem:[#allocation2 + $0x2] sm:$0xf] %vm536, %v532
      %v538 = vld [vmem:[%s326 + $0x4] sm:$0xf]
      %v539 = vpack.c.bf16 %v538, %v538
      %v542 = vunpack.c.l.s4 1983009808
      %v543 = vunpack.c.0.s8 %v542
      %v544 = vlaneseq
      %v545 = vshrl.u32 %v544, 7
      %v546 = vsub.s32 %v543, %v545
      %v547 = vrot.slane %v539, %v546
      %548 = vrot.lane.b32.xlu0 %v547, 64
      %v549 = vpop.permute.xlu0 %548
      %vm551 = vcmask 255104
      %552 = vst.msk [vmem:[#allocation2 + $0x4] sm:$0x3] %vm551, %v549
      %v553 = vld [vmem:[%s326 + $0x4] sm:$0xf]
      %v554 = vpack.c.bf16 %v553, %v553
      %v557 = vunpack.c.l.s4 1983009808
      %v558 = vunpack.c.0.s8 %v557
      %v559 = vlaneseq
      %v560 = vshrl.u32 %v559, 7
      %v561 = vsub.s32 %v558, %v560
      %v562 = vrot.slane %v554, %v561
      %563 = vrot.lane.b32.xlu0 %v562, 66
      %v564 = vpop.permute.xlu0 %563
      %vm566 = vcmask 402704
      %567 = vst.msk [vmem:[#allocation2 + $0x4] sm:$0x3] %vm566, %v564
      %v568 = vld [vmem:[%s326 + $0x4] sm:$0xf]
      %v569 = vpack.c.bf16 %v568, %v568
      %v572 = vunpack.c.l.s4 1983009808
      %v573 = vunpack.c.0.s8 %v572
      %v574 = vlaneseq
      %v575 = vshrl.u32 %v574, 7
      %v576 = vsub.s32 %v573, %v575
      %v577 = vrot.slane %v569, %v576
      %578 = vrot.lane.b32.xlu0 %v577, 68
      %v579 = vpop.permute.xlu0 %578
      %vm581 = vcmask 550304
      %582 = vst.msk [vmem:[#allocation2 + $0x4] sm:$0x3] %vm581, %v579
      %v583 = vld [vmem:[%s1] sm:$0x7]
      %vm584 = vcmp.ne.f32.partialorder %v583, 0.0
      %v585 = vld [vmem:[#allocation2] sm:$0x3f]
      %v587 = vcombine.high %v585, %v585
      %v589 = vunpack.c.l.s4 1983009808
      %v590 = vunpack.c.0.s8 %v589
      %v591 = vlaneseq
      %v592 = vshrl.u32 %v591, 7
      %v593 = vsub.s32 %v590, %v592
      %v594 = vrot.slane %v585, %v593
      %v596 = vunpack.c.l.s4 1983009808
      %v597 = vunpack.c.0.s8 %v596
      %v598 = vlaneseq
      %v599 = vshrl.u32 %v598, 7
      %v600 = vsub.s32 %v597, %v599
      %v601 = vrot.slane %v587, %v600
      %v602 = vcombine.high %v594, %v594
      %v603 = vcombine.low %v585, %v585
      %v605 = vunpack.c.l.s4 1983009808
      %v606 = vunpack.c.0.s8 %v605
      %v607 = vlaneseq
      %v608 = vshrl.u32 %v607, 7
      %v609 = vsub.s32 %v606, %v608
      %v610 = vrot.slane %v603, %v609
      %v611 = vcombine.high %v610, %v610
      %612 = vrot.lane.b32.xlu0 %v610, 127
      %v613 = vpop.permute.xlu0 %612
      %614 = vrot.lane.b32.xlu0 %v611, 127
      %v615 = vpop.permute.xlu0 %614
      %616 = vrot.lane.b32.xlu0 %v594, 127
      %v617 = vpop.permute.xlu0 %616
      %vm618 = vcmask 1039360
      %v619 = vsel %vm618, %v613, %v615
      %v620 = vsel %vm618, %v615, %v617
      %v621 = vcombine.low %v594, %v594
      %v622 = vcombine.low %v601, %v601
      %623 = vrot.lane.b32.xlu0 %v621, 126
      %v624 = vpop.permute.xlu0 %623
      %625 = vrot.lane.b32.xlu0 %v594, 126
      %v626 = vpop.permute.xlu0 %625
      %627 = vrot.lane.b32.xlu0 %v622, 126
      %v628 = vpop.permute.xlu0 %627
      %vm629 = vcmask 1031168
      %v630 = vsel %vm629, %v624, %v626
      %v631 = vsel %vm629, %v626, %v628
      %v632 = vcombine.low %v610, %v610
      %633 = vrot.lane.b32.xlu0 %v632, 110
      %v634 = vpop.permute.xlu0 %633
      %635 = vrot.lane.b32.xlu0 %v610, 110
      %v636 = vpop.permute.xlu0 %635
      %637 = vrot.lane.b32.xlu0 %v621, 110
      %v638 = vpop.permute.xlu0 %637
      %vm639 = vcmask 900096
      %v640 = vsel %vm639, %v634, %v636
      %v641 = vsel %vm639, %v636, %v638
      %642 = vrot.lane.b32.xlu0 %v594, 109
      %v643 = vpop.permute.xlu0 %642
      %644 = vrot.lane.b32.xlu0 %v602, 109
      %v645 = vpop.permute.xlu0 %644
      %646 = vrot.lane.b32.xlu0 %v601, 109
      %v647 = vpop.permute.xlu0 %646
      %vm648 = vcmask 891904
      %v649 = vsel %vm648, %v643, %v645
      %v650 = vsel %vm648, %v645, %v647
      %651 = vrot.lane.b32.xlu0 %v610, 108
      %v652 = vpop.permute.xlu0 %651
      %653 = vrot.lane.b32.xlu0 %v611, 108
      %v654 = vpop.permute.xlu0 %653
      %655 = vrot.lane.b32.xlu0 %v594, 108
      %v656 = vpop.permute.xlu0 %655
      %vm657 = vcmask 883712
      %v658 = vsel %vm657, %v652, %v654
      %v659 = vsel %vm657, %v654, %v656
      %660 = vrot.lane.b32.xlu0 %v621, 92
      %v661 = vpop.permute.xlu0 %660
      %662 = vrot.lane.b32.xlu0 %v594, 92
      %v663 = vpop.permute.xlu0 %662
      %664 = vrot.lane.b32.xlu0 %v622, 92
      %v665 = vpop.permute.xlu0 %664
      %vm666 = vcmask 752640
      %v667 = vsel %vm666, %v661, %v663
      %v668 = vsel %vm666, %v663, %v665
      %669 = vrot.lane.b32.xlu0 %v632, 91
      %v670 = vpop.permute.xlu0 %669
      %671 = vrot.lane.b32.xlu0 %v610, 91
      %v672 = vpop.permute.xlu0 %671
      %673 = vrot.lane.b32.xlu0 %v621, 91
      %v674 = vpop.permute.xlu0 %673
      %vm675 = vcmask 744448
      %v676 = vsel %vm675, %v670, %v672
      %v677 = vsel %vm675, %v672, %v674
      %678 = vrot.lane.b32.xlu0 %v594, 90
      %v679 = vpop.permute.xlu0 %678
      %680 = vrot.lane.b32.xlu0 %v602, 90
      %v681 = vpop.permute.xlu0 %680
      %682 = vrot.lane.b32.xlu0 %v601, 90
      %v683 = vpop.permute.xlu0 %682
      %vm684 = vcmask 736256
      %v685 = vsel %vm684, %v679, %v681
      %v686 = vsel %vm684, %v681, %v683
      %v689 = vsel %vm332, %v594, %v619
      %v692 = vsel %vm332, %v602, %v620
      %v695 = vsel %vm332, %v601, %v617
      %vm696 = vcmask 1043456
      %v698 = vsel %vm696, %v689, %v630
      %v700 = vsel %vm696, %v692, %v631
      %v702 = vsel %vm696, %v695, %v628
      %vm703 = vcmask 1045504
      %v705 = vsel %vm703, %v698, %v640
      %v708 = vsel %vm703, %v700, %v641
      %v711 = vsel %vm703, %v702, %v638
      %v715 = vsel %vm332, %v649, %v658
      %v718 = vsel %vm332, %v650, %v659
      %v721 = vsel %vm332, %v647, %v656
      %v723 = vsel %vm696, %v715, %v667
      %v725 = vsel %vm696, %v718, %v668
      %v727 = vsel %vm696, %v721, %v665
      %v729 = vsel %vm703, %v723, %v676
      %v732 = vsel %vm703, %v725, %v677
      %v735 = vsel %vm703, %v727, %v674
      %v737 = vld [vmem:[%s3] sm:$0x3]
      %v738 = vld [vmem:[%s4] sm:$0xf]
      %740 = vset.pattern.permute.xlu0 0
      %741 = vperm.xlu0 %740, %v738
      %v742 = vpop.permute.xlu0 %741
      %vm744 = vcmask 293888
      %v746 = vsel %vm744, %v737, 0
      %v749 = vsel %vm332, %v685, 0
      %v752 = vsel %vm332, %v686, 0
      %v755 = vsel %vm332, %v683, 0
      %757 = vmatprep.subr.bf16.mxu0 %v708
      %758 = vmatpush1.bf16.msra.mxu0 %v705
      %759 = vmatprep.subr.bf16.mxu0 %v732
      %760 = vmatpush1.bf16.msra.mxu0 %v729
      %761 = vmatprep.subr.bf16.mxu0 %v752
      %762 = vmatpush1.bf16.msra.mxu0 %v749
      %763 = vmatprep.subr.bf16.mxu0 0
      %764 = vmatpush1.bf16.msra.mxu0 0
      %765 = vmatprep.subr.bf16.mxu0 0
      %766 = vmatpush1.bf16.msra.mxu0 0
      %767 = vmatprep.subr.bf16.mxu0 0
      %768 = vmatpush1.bf16.msra.mxu0 0
      %769 = vmatprep.subr.bf16.mxu0 0
      %770 = vmatpush1.bf16.msra.mxu0 0
      %771 = vmatprep.subr.bf16.mxu0 0
      %772 = vmatpush1.bf16.msra.mxu0 0
      %773 = vmatprep.subr.bf16.mxu0 0
      %774 = vmatpush1.bf16.msra.mxu0 0
      %775 = vmatprep.subr.bf16.mxu0 0
      %776 = vmatpush1.bf16.msra.mxu0 0
      %777 = vmatprep.subr.bf16.mxu0 0
      %778 = vmatpush1.bf16.msra.mxu0 0
      %779 = vmatprep.subr.bf16.mxu0 0
      %780 = vmatpush1.bf16.msra.mxu0 0
      %781 = vmatprep.subr.bf16.mxu0 0
      %782 = vmatpush1.bf16.msra.mxu0 0
      %783 = vmatprep.subr.bf16.mxu0 0
      %784 = vmatpush1.bf16.msra.mxu0 0
      %785 = vmatprep.subr.bf16.mxu0 0
      %786 = vmatpush1.bf16.msra.mxu0 0
      %787 = vmatprep.subr.bf16.mxu0 0
      %788 = vmatpush1.bf16.msra.mxu0 0
      %789 = vmatprep.mubr.bf16.mxu0 0
      %790 = vmatmul.mubr.bf16.gmra.mrb[0].mxu0 %v746
      %v791 = vpop.f32.mrb[0].mxu0
      %v792 = vadd.f32 %v742, %v791
      %v793 = vpop.f32.mrb[0].mxu0
      %v794 = vadd.f32 %v742, %v793
      %v795 = vpop.f32.mrb[0].mxu0
      %v796 = vpop.f32.mrb[0].mxu0
      %797 = vdwg.mxu0
      %798 = vmatprep.subr.bf16.mxu0 0
      %799 = vmatpush1.bf16.msra.mxu0 %v711
      %800 = vmatprep.subr.bf16.mxu0 0
      %801 = vmatpush1.bf16.msra.mxu0 %v735
      %802 = vmatprep.subr.bf16.mxu0 0
      %803 = vmatpush1.bf16.msra.mxu0 %v755
      %804 = vmatprep.subr.bf16.mxu0 0
      %805 = vmatpush1.bf16.msra.mxu0 0
      %806 = vmatprep.subr.bf16.mxu0 0
      %807 = vmatpush1.bf16.msra.mxu0 0
      %808 = vmatprep.subr.bf16.mxu0 0
      %809 = vmatpush1.bf16.msra.mxu0 0
      %810 = vmatprep.subr.bf16.mxu0 0
      %811 = vmatpush1.bf16.msra.mxu0 0
      %812 = vmatprep.subr.bf16.mxu0 0
      %813 = vmatpush1.bf16.msra.mxu0 0
      %814 = vmatprep.subr.bf16.mxu0 0
      %815 = vmatpush1.bf16.msra.mxu0 0
      %816 = vmatprep.subr.bf16.mxu0 0
      %817 = vmatpush1.bf16.msra.mxu0 0
      %818 = vmatprep.subr.bf16.mxu0 0
      %819 = vmatpush1.bf16.msra.mxu0 0
      %820 = vmatprep.subr.bf16.mxu0 0
      %821 = vmatpush1.bf16.msra.mxu0 0
      %822 = vmatprep.subr.bf16.mxu0 0
      %823 = vmatpush1.bf16.msra.mxu0 0
      %824 = vmatprep.subr.bf16.mxu0 0
      %825 = vmatpush1.bf16.msra.mxu0 0
      %826 = vmatprep.subr.bf16.mxu0 0
      %827 = vmatpush1.bf16.msra.mxu0 0
      %828 = vmatprep.subr.bf16.mxu0 0
      %829 = vmatpush1.bf16.msra.mxu0 0
      %830 = vmatprep.mubr.bf16.mxu0 0
      %831 = vmatmul.mubr.bf16.gmra.mrb[0].mxu0 %v746
      %v832 = vpop.f32.mrb[0].mxu0
      %v833 = vadd.f32 %v742, %v832
      %v834 = vpop.f32.mrb[0].mxu0
      %v835 = vpop.f32.mrb[0].mxu0
      %v836 = vpop.f32.mrb[0].mxu0
      %837 = vdwg.mxu0
      %vm838 = vcmp.gt.f32.partialorder %v792, 0.0
      %vm839 = vcmp.gt.f32.partialorder %v794, 0.0
      %vm840 = vcmp.gt.f32.partialorder %v833, 0.0
      %v841 = vmul.f32 %v792, 0.2
      %v842 = vmul.f32 %v794, 0.2
      %v843 = vmul.f32 %v833, 0.2
      %v844 = vsel %vm838, %v792, %v841
      %v845 = vsel %vm839, %v794, %v842
      %v846 = vsel %vm840, %v833, %v843
      %v847 = vsel %vm584, 1, 0
      %v848 = vlaneseq
      %v849 = vshrl.u32 %v848, 7
      %v850 = vsub.s32 0, %v849
      %v851 = vrot.slane %v847, %v850
      %v852 = vlaneseq
      %v853 = vshrl.u32 %v852, 7
      %v854 = vsub.s32 1, %v853
      %v855 = vrot.slane %v847, %v854
      %v856 = vlaneseq
      %v857 = vshrl.u32 %v856, 7
      %v858 = vsub.s32 2, %v857
      %v859 = vrot.slane %v847, %v858
      %vm860 = vcmp.eq.s32.totalorder %v851, 1
      %vm861 = vcmp.eq.s32.totalorder %v855, 1
      %vm862 = vcmp.eq.s32.totalorder %v859, 1
      %v863 = vsel %vm860, %v844, 0.0
      %v864 = vsel %vm861, %v845, 0.0
      %v865 = vsel %vm862, %v846, 0.0
      %v866 = vpack.c.bf16 %v863, %v863
      %v867 = vpack.c.bf16 %v864, %v864
      %v868 = vpack.c.bf16 %v865, %v865
      %v872 = vcombine.low %v866, %v867
      %v874 = vunpack.c.l.s4 1983009808
      %v875 = vunpack.c.0.s8 %v874
      %v876 = vlaneseq
      %v877 = vshrl.u32 %v876, 7
      %v878 = vsub.s32 %v875, %v877
      %v879 = vrot.slane %v872, %v878
      %v881 = vunpack.c.l.s4 1983009808
      %v882 = vunpack.c.0.s8 %v881
      %v883 = vlaneseq
      %v884 = vshrl.u32 %v883, 7
      %v885 = vsub.s32 %v882, %v884
      %v886 = vrot.slane %v868, %v885
      %v887 = vcombine.low %v879, %v886
      %888 = vrot.lane.b32.xlu0 %v887, 19
      %v889 = vpop.permute.xlu0 %888
      %v890 = vrot.slane %v889, 6
      %vm891 = vcmask 154624
      %v892 = vsel %vm891, %v890, %v889
      %vm894 = vcmask 1041560
      %vm895 = vmor %vm333, %vm894
      %vm896 = vcmask 709636
      %vm897 = vmor %vm896, %vm895
      %898 = vst.msk [vmem:[#allocation2] sm:$0x3f] %vm897, %v892
      %v899 = vld [vmem:[#allocation2] sm:$0x3f]
      %v901 = vcombine.high %v899, %v899
      %v903 = vunpack.c.l.s4 1983009808
      %v904 = vunpack.c.0.s8 %v903
      %v905 = vlaneseq
      %v906 = vshrl.u32 %v905, 7
      %v907 = vsub.s32 %v904, %v906
      %v908 = vrot.slane %v899, %v907
      %v910 = vunpack.c.l.s4 1983009808
      %v911 = vunpack.c.0.s8 %v910
      %v912 = vlaneseq
      %v913 = vshrl.u32 %v912, 7
      %v914 = vsub.s32 %v911, %v913
      %v915 = vrot.slane %v901, %v914
      %v916 = vcombine.high %v908, %v908
      %v917 = vcombine.low %v899, %v899
      %v919 = vunpack.c.l.s4 1983009808
      %v920 = vunpack.c.0.s8 %v919
      %v921 = vlaneseq
      %v922 = vshrl.u32 %v921, 7
      %v923 = vsub.s32 %v920, %v922
      %v924 = vrot.slane %v917, %v923
      %v925 = vcombine.high %v924, %v924
      %926 = vrot.lane.b32.xlu0 %v924, 127
      %v927 = vpop.permute.xlu0 %926
      %928 = vrot.lane.b32.xlu0 %v925, 127
      %v929 = vpop.permute.xlu0 %928
      %930 = vrot.lane.b32.xlu0 %v908, 127
      %v931 = vpop.permute.xlu0 %930
      %v932 = vsel %vm618, %v927, %v929
      %v933 = vsel %vm618, %v929, %v931
      %v934 = vcombine.low %v908, %v908
      %v935 = vcombine.low %v915, %v915
      %936 = vrot.lane.b32.xlu0 %v934, 126
      %v937 = vpop.permute.xlu0 %936
      %938 = vrot.lane.b32.xlu0 %v908, 126
      %v939 = vpop.permute.xlu0 %938
      %940 = vrot.lane.b32.xlu0 %v935, 126
      %v941 = vpop.permute.xlu0 %940
      %v942 = vsel %vm629, %v937, %v939
      %v943 = vsel %vm629, %v939, %v941
      %v944 = vcombine.low %v924, %v924
      %945 = vrot.lane.b32.xlu0 %v944, 110
      %v946 = vpop.permute.xlu0 %945
      %947 = vrot.lane.b32.xlu0 %v924, 110
      %v948 = vpop.permute.xlu0 %947
      %949 = vrot.lane.b32.xlu0 %v934, 110
      %v950 = vpop.permute.xlu0 %949
      %v951 = vsel %vm639, %v946, %v948
      %v952 = vsel %vm639, %v948, %v950
      %953 = vrot.lane.b32.xlu0 %v908, 109
      %v954 = vpop.permute.xlu0 %953
      %955 = vrot.lane.b32.xlu0 %v916, 109
      %v956 = vpop.permute.xlu0 %955
      %957 = vrot.lane.b32.xlu0 %v915, 109
      %v958 = vpop.permute.xlu0 %957
      %v959 = vsel %vm648, %v954, %v956
      %v960 = vsel %vm648, %v956, %v958
      %961 = vrot.lane.b32.xlu0 %v924, 108
      %v962 = vpop.permute.xlu0 %961
      %963 = vrot.lane.b32.xlu0 %v925, 108
      %v964 = vpop.permute.xlu0 %963
      %965 = vrot.lane.b32.xlu0 %v908, 108
      %v966 = vpop.permute.xlu0 %965
      %v967 = vsel %vm657, %v962, %v964
      %v968 = vsel %vm657, %v964, %v966
      %969 = vrot.lane.b32.xlu0 %v934, 92
      %v970 = vpop.permute.xlu0 %969
      %971 = vrot.lane.b32.xlu0 %v908, 92
      %v972 = vpop.permute.xlu0 %971
      %973 = vrot.lane.b32.xlu0 %v935, 92
      %v974 = vpop.permute.xlu0 %973
      %v975 = vsel %vm666, %v970, %v972
      %v976 = vsel %vm666, %v972, %v974
      %977 = vrot.lane.b32.xlu0 %v944, 91
      %v978 = vpop.permute.xlu0 %977
      %979 = vrot.lane.b32.xlu0 %v924, 91
      %v980 = vpop.permute.xlu0 %979
      %981 = vrot.lane.b32.xlu0 %v934, 91
      %v982 = vpop.permute.xlu0 %981
      %v983 = vsel %vm675, %v978, %v980
      %v984 = vsel %vm675, %v980, %v982
      %985 = vrot.lane.b32.xlu0 %v908, 90
      %v986 = vpop.permute.xlu0 %985
      %987 = vrot.lane.b32.xlu0 %v916, 90
      %v988 = vpop.permute.xlu0 %987
      %989 = vrot.lane.b32.xlu0 %v915, 90
      %v990 = vpop.permute.xlu0 %989
      %v991 = vsel %vm684, %v986, %v988
      %v992 = vsel %vm684, %v988, %v990
      %v995 = vsel %vm332, %v908, %v932
      %v998 = vsel %vm332, %v916, %v933
      %v1001 = vsel %vm332, %v915, %v931
      %v1003 = vsel %vm696, %v995, %v942
      %v1005 = vsel %vm696, %v998, %v943
      %v1007 = vsel %vm696, %v1001, %v941
      %v1009 = vsel %vm703, %v1003, %v951
      %v1012 = vsel %vm703, %v1005, %v952
      %v1015 = vsel %vm703, %v1007, %v950
      %v1019 = vsel %vm332, %v959, %v967
      %v1022 = vsel %vm332, %v960, %v968
      %v1025 = vsel %vm332, %v958, %v966
      %v1027 = vsel %vm696, %v1019, %v975
      %v1029 = vsel %vm696, %v1022, %v976
      %v1031 = vsel %vm696, %v1025, %v974
      %v1033 = vsel %vm703, %v1027, %v983
      %v1036 = vsel %vm703, %v1029, %v984
      %v1039 = vsel %vm703, %v1031, %v982
      %v1041 = vld [vmem:[%s5] sm:$0xf]
      %v1042 = vld [vmem:[%s6] sm:$0xff]
      %1044 = vset.pattern.permute.xlu0 0
      %1045 = vperm.xlu0 %1044, %v1042
      %v1046 = vpop.permute.xlu0 %1045
      %v1049 = vsel %vm744, %v1041, 0
      %v1052 = vsel %vm332, %v991, 0
      %v1055 = vsel %vm332, %v992, 0
      %v1058 = vsel %vm332, %v990, 0
      %1060 = vmatprep.subr.bf16.mxu0 %v1012
      %1061 = vmatpush1.bf16.msra.mxu0 %v1009
      %1062 = vmatprep.subr.bf16.mxu0 %v1036
      %1063 = vmatpush1.bf16.msra.mxu0 %v1033
      %1064 = vmatprep.subr.bf16.mxu0 %v1055
      %1065 = vmatpush1.bf16.msra.mxu0 %v1052
      %1066 = vmatprep.subr.bf16.mxu0 0
      %1067 = vmatpush1.bf16.msra.mxu0 0
      %1068 = vmatprep.subr.bf16.mxu0 0
      %1069 = vmatpush1.bf16.msra.mxu0 0
      %1070 = vmatprep.subr.bf16.mxu0 0
      %1071 = vmatpush1.bf16.msra.mxu0 0
      %1072 = vmatprep.subr.bf16.mxu0 0
      %1073 = vmatpush1.bf16.msra.mxu0 0
      %1074 = vmatprep.subr.bf16.mxu0 0
      %1075 = vmatpush1.bf16.msra.mxu0 0
      %1076 = vmatprep.subr.bf16.mxu0 0
      %1077 = vmatpush1.bf16.msra.mxu0 0
      %1078 = vmatprep.subr.bf16.mxu0 0
      %1079 = vmatpush1.bf16.msra.mxu0 0
      %1080 = vmatprep.subr.bf16.mxu0 0
      %1081 = vmatpush1.bf16.msra.mxu0 0
      %1082 = vmatprep.subr.bf16.mxu0 0
      %1083 = vmatpush1.bf16.msra.mxu0 0
      %1084 = vmatprep.subr.bf16.mxu0 0
      %1085 = vmatpush1.bf16.msra.mxu0 0
      %1086 = vmatprep.subr.bf16.mxu0 0
      %1087 = vmatpush1.bf16.msra.mxu0 0
      %1088 = vmatprep.subr.bf16.mxu0 0
      %1089 = vmatpush1.bf16.msra.mxu0 0
      %1090 = vmatprep.subr.bf16.mxu0 0
      %1091 = vmatpush1.bf16.msra.mxu0 0
      %1092 = vmatprep.mubr.bf16.mxu0 0
      %1093 = vmatmul.mubr.bf16.gmra.mrb[0].mxu0 %v1049
      %v1094 = vpop.f32.mrb[0].mxu0
      %v1095 = vadd.f32 %v1046, %v1094
      %v1096 = vpop.f32.mrb[0].mxu0
      %v1097 = vadd.f32 %v1046, %v1096
      %v1098 = vpop.f32.mrb[0].mxu0
      %v1099 = vpop.f32.mrb[0].mxu0
      %1100 = vdwg.mxu0
      %1101 = vmatprep.subr.bf16.mxu0 0
      %1102 = vmatpush1.bf16.msra.mxu0 %v1015
      %1103 = vmatprep.subr.bf16.mxu0 0
      %1104 = vmatpush1.bf16.msra.mxu0 %v1039
      %1105 = vmatprep.subr.bf16.mxu0 0
      %1106 = vmatpush1.bf16.msra.mxu0 %v1058
      %1107 = vmatprep.subr.bf16.mxu0 0
      %1108 = vmatpush1.bf16.msra.mxu0 0
      %1109 = vmatprep.subr.bf16.mxu0 0
      %1110 = vmatpush1.bf16.msra.mxu0 0
      %1111 = vmatprep.subr.bf16.mxu0 0
      %1112 = vmatpush1.bf16.msra.mxu0 0
      %1113 = vmatprep.subr.bf16.mxu0 0
      %1114 = vmatpush1.bf16.msra.mxu0 0
      %1115 = vmatprep.subr.bf16.mxu0 0
      %1116 = vmatpush1.bf16.msra.mxu0 0
      %1117 = vmatprep.subr.bf16.mxu0 0
      %1118 = vmatpush1.bf16.msra.mxu0 0
      %1119 = vmatprep.subr.bf16.mxu0 0
      %1120 = vmatpush1.bf16.msra.mxu0 0
      %1121 = vmatprep.subr.bf16.mxu0 0
      %1122 = vmatpush1.bf16.msra.mxu0 0
      %1123 = vmatprep.subr.bf16.mxu0 0
      %1124 = vmatpush1.bf16.msra.mxu0 0
      %1125 = vmatprep.subr.bf16.mxu0 0
      %1126 = vmatpush1.bf16.msra.mxu0 0
      %1127 = vmatprep.subr.bf16.mxu0 0
      %1128 = vmatpush1.bf16.msra.mxu0 0
      %1129 = vmatprep.subr.bf16.mxu0 0
      %1130 = vmatpush1.bf16.msra.mxu0 0
      %1131 = vmatprep.subr.bf16.mxu0 0
      %1132 = vmatpush1.bf16.msra.mxu0 0
      %1133 = vmatprep.mubr.bf16.mxu0 0
      %1134 = vmatmul.mubr.bf16.gmra.mrb[0].mxu0 %v1049
      %v1135 = vpop.f32.mrb[0].mxu0
      %v1136 = vadd.f32 %v1046, %v1135
      %v1137 = vpop.f32.mrb[0].mxu0
      %v1138 = vpop.f32.mrb[0].mxu0
      %v1139 = vpop.f32.mrb[0].mxu0
      %1140 = vdwg.mxu0
      %vm1141 = vcmp.gt.f32.partialorder %v1095, 0.0
      %vm1142 = vcmp.gt.f32.partialorder %v1097, 0.0
      %vm1143 = vcmp.gt.f32.partialorder %v1136, 0.0
      %v1144 = vmul.f32 %v1095, 0.2
      %v1145 = vmul.f32 %v1097, 0.2
      %v1146 = vmul.f32 %v1136, 0.2
      %v1147 = vsel %vm1141, %v1095, %v1144
      %v1148 = vsel %vm1142, %v1097, %v1145
      %v1149 = vsel %vm1143, %v1136, %v1146
      %v1150 = vld [vmem:[%s7] sm:$0xf]
      %vm1151 = vcmask 31744
      %v1153 = vsel %vm1151, %v1150, 0
      %v1155 = vsel %vm332, %v649, 0
      %v1157 = vsel %vm332, %v650, 0
      %v1159 = vsel %vm332, %v647, 0
      %1161 = vmatprep.subr.bf16.mxu0 %v1157
      %1162 = vmatpush1.bf16.msra.mxu0 %v1155
      %1163 = vmatprep.subr.bf16.mxu0 0
      %1164 = vmatpush1.bf16.msra.mxu0 0
      %1165 = vmatprep.subr.bf16.mxu0 0
      %1166 = vmatpush1.bf16.msra.mxu0 0
      %1167 = vmatprep.subr.bf16.mxu0 0
      %1168 = vmatpush1.bf16.msra.mxu0 0
      %1169 = vmatprep.subr.bf16.mxu0 0
      %1170 = vmatpush1.bf16.msra.mxu0 0
      %1171 = vmatprep.subr.bf16.mxu0 0
      %1172 = vmatpush1.bf16.msra.mxu0 0
      %1173 = vmatprep.subr.bf16.mxu0 0
      %1174 = vmatpush1.bf16.msra.mxu0 0
      %1175 = vmatprep.subr.bf16.mxu0 0
      %1176 = vmatpush1.bf16.msra.mxu0 0
      %1177 = vmatprep.subr.bf16.mxu0 0
      %1178 = vmatpush1.bf16.msra.mxu0 0
      %1179 = vmatprep.subr.bf16.mxu0 0
      %1180 = vmatpush1.bf16.msra.mxu0 0
      %1181 = vmatprep.subr.bf16.mxu0 0
      %1182 = vmatpush1.bf16.msra.mxu0 0
      %1183 = vmatprep.subr.bf16.mxu0 0
      %1184 = vmatpush1.bf16.msra.mxu0 0
      %1185 = vmatprep.subr.bf16.mxu0 0
      %1186 = vmatpush1.bf16.msra.mxu0 0
      %1187 = vmatprep.subr.bf16.mxu0 0
      %1188 = vmatpush1.bf16.msra.mxu0 0
      %1189 = vmatprep.subr.bf16.mxu0 0
      %1190 = vmatpush1.bf16.msra.mxu0 0
      %1191 = vmatprep.subr.bf16.mxu0 0
      %1192 = vmatpush1.bf16.msra.mxu0 0
      %1193 = vmatprep.mubr.bf16.mxu0 0
      %1194 = vmatmul.mubr.bf16.gmra.mrb[0].mxu0 %v1153
      %v1195 = vpop.f32.mrb[0].mxu0
      %v1196 = vadd.f32 0.0, %v1195
      %v1197 = vpop.f32.mrb[0].mxu0
      %v1198 = vadd.f32 0.0, %v1197
      %v1199 = vpop.f32.mrb[0].mxu0
      %v1200 = vpop.f32.mrb[0].mxu0
      %1201 = vdwg.mxu0
      %1202 = vmatprep.subr.bf16.mxu0 0
      %1203 = vmatpush1.bf16.msra.mxu0 %v1159
      %1204 = vmatprep.subr.bf16.mxu0 0
      %1205 = vmatpush1.bf16.msra.mxu0 0
      %1206 = vmatprep.subr.bf16.mxu0 0
      %1207 = vmatpush1.bf16.msra.mxu0 0
      %1208 = vmatprep.subr.bf16.mxu0 0
      %1209 = vmatpush1.bf16.msra.mxu0 0
      %1210 = vmatprep.subr.bf16.mxu0 0
      %1211 = vmatpush1.bf16.msra.mxu0 0
      %1212 = vmatprep.subr.bf16.mxu0 0
      %1213 = vmatpush1.bf16.msra.mxu0 0
      %1214 = vmatprep.subr.bf16.mxu0 0
      %1215 = vmatpush1.bf16.msra.mxu0 0
      %1216 = vmatprep.subr.bf16.mxu0 0
      %1217 = vmatpush1.bf16.msra.mxu0 0
      %1218 = vmatprep.subr.bf16.mxu0 0
      %1219 = vmatpush1.bf16.msra.mxu0 0
      %1220 = vmatprep.subr.bf16.mxu0 0
      %1221 = vmatpush1.bf16.msra.mxu0 0
      %1222 = vmatprep.subr.bf16.mxu0 0
      %1223 = vmatpush1.bf16.msra.mxu0 0
      %1224 = vmatprep.subr.bf16.mxu0 0
      %1225 = vmatpush1.bf16.msra.mxu0 0
      %1226 = vmatprep.subr.bf16.mxu0 0
      %1227 = vmatpush1.bf16.msra.mxu0 0
      %1228 = vmatprep.subr.bf16.mxu0 0
      %1229 = vmatpush1.bf16.msra.mxu0 0
      %1230 = vmatprep.subr.bf16.mxu0 0
      %1231 = vmatpush1.bf16.msra.mxu0 0
      %1232 = vmatprep.subr.bf16.mxu0 0
      %1233 = vmatpush1.bf16.msra.mxu0 0
      %1234 = vmatprep.mubr.bf16.mxu0 0
      %1235 = vmatmul.mubr.bf16.gmra.mrb[0].mxu0 %v1153
      %v1236 = vpop.f32.mrb[0].mxu0
      %v1237 = vadd.f32 0.0, %v1236
      %v1238 = vpop.f32.mrb[0].mxu0
      %v1239 = vpop.f32.mrb[0].mxu0
      %v1240 = vpop.f32.mrb[0].mxu0
      %1241 = vdwg.mxu0
      %v1242 = vadd.f32 %v1147, %v1196
      %v1243 = vadd.f32 %v1148, %v1198
      %v1244 = vadd.f32 %v1149, %v1237
      %v1245 = vld [vmem:[%s8] sm:$0xff]
      %1247 = vset.pattern.permute.xlu0 0
      %1248 = vperm.xlu0 %1247, %v1245
      %v1249 = vpop.permute.xlu0 %1248
      %v1251 = vadd.f32 %v1242, %v1249
      %v1252 = vadd.f32 %v1243, %v1249
      %v1253 = vadd.f32 %v1244, %v1249
      %v1254 = vld [vmem:[%s2] sm:$0xff]
      %v1255 = vld [vmem:[%s2 + $0x8] sm:$0xff]
      %1257 = vrot.lane.b32.xlu0 %v1251, 110
      %v1258 = vpop.permute.xlu0 %1257
      %v1260 = vadd.f32 %v1251, %v1258
      %1262 = vrot.lane.b32.xlu0 %v1260, 109
      %v1263 = vpop.permute.xlu0 %1262
      %vm1264 = vcmask 130048
      %v1265 = vsel %vm1264, %v1263, 0
      %1267 = vmatprep.subr.mxu0 0.0
      %v1268 = vand.u32 %v1254, 4294901760
      %1269 = vmatpush1.msra.mxu0 %v1268
      %1270 = vmatprep.subr.mxu0 0.0
      %v1271 = vand.u32 %v1255, 4294901760
      %1272 = vmatpush1.msra.mxu0 %v1271
      %1273 = vmatprep.subr.mxu0 0.0
      %1274 = vmatpush1.msra.mxu0 0.0
      %1275 = vmatprep.subr.mxu0 0.0
      %1276 = vmatpush1.msra.mxu0 0.0
      %1277 = vmatprep.subr.mxu0 0.0
      %1278 = vmatpush1.msra.mxu0 0.0
      %1279 = vmatprep.subr.mxu0 0.0
      %1280 = vmatpush1.msra.mxu0 0.0
      %1281 = vmatprep.subr.mxu0 0.0
      %1282 = vmatpush1.msra.mxu0 0.0
      %1283 = vmatprep.subr.mxu0 0.0
      %1284 = vmatpush1.msra.mxu0 0.0
      %1285 = vmatprep.subr.mxu0 0.0
      %1286 = vmatpush1.msra.mxu0 0.0
      %1287 = vmatprep.subr.mxu0 0.0
      %1288 = vmatpush1.msra.mxu0 0.0
      %1289 = vmatprep.subr.mxu0 0.0
      %1290 = vmatpush1.msra.mxu0 0.0
      %1291 = vmatprep.subr.mxu0 0.0
      %1292 = vmatpush1.msra.mxu0 0.0
      %1293 = vmatprep.subr.mxu0 0.0
      %1294 = vmatpush1.msra.mxu0 0.0
      %1295 = vmatprep.subr.mxu0 0.0
      %1296 = vmatpush1.msra.mxu0 0.0
      %1297 = vmatprep.subr.mxu0 0.0
      %1298 = vmatpush1.msra.mxu0 0.0
      %1299 = vmatprep.subr.mxu0 0.0
      %1300 = vmatpush1.msra.mxu0 0.0
      %1301 = vmatprep.subr.mxu0 0.0
      %1302 = vmatpush1.msra.mxu0 0.0
      %1303 = vmatprep.subr.mxu0 0.0
      %1304 = vmatpush1.msra.mxu0 0.0
      %1305 = vmatprep.subr.mxu0 0.0
      %1306 = vmatpush1.msra.mxu0 0.0
      %1307 = vmatprep.subr.mxu0 0.0
      %1308 = vmatpush1.msra.mxu0 0.0
      %1309 = vmatprep.subr.mxu0 0.0
      %1310 = vmatpush1.msra.mxu0 0.0
      %1311 = vmatprep.subr.mxu0 0.0
      %1312 = vmatpush1.msra.mxu0 0.0
      %1313 = vmatprep.subr.mxu0 0.0
      %1314 = vmatpush1.msra.mxu0 0.0
      %1315 = vmatprep.subr.mxu0 0.0
      %1316 = vmatpush1.msra.mxu0 0.0
      %1317 = vmatprep.subr.mxu0 0.0
      %1318 = vmatpush1.msra.mxu0 0.0
      %1319 = vmatprep.subr.mxu0 0.0
      %1320 = vmatpush1.msra.mxu0 0.0
      %1321 = vmatprep.subr.mxu0 0.0
      %1322 = vmatpush1.msra.mxu0 0.0
      %1323 = vmatprep.subr.mxu0 0.0
      %1324 = vmatpush1.msra.mxu0 0.0
      %1325 = vmatprep.subr.mxu0 0.0
      %1326 = vmatpush1.msra.mxu0 0.0
      %1327 = vmatprep.subr.mxu0 0.0
      %1328 = vmatpush1.msra.mxu0 0.0
      %1329 = vmatprep.subr.mxu0 0.0
      %1330 = vmatpush1.msra.mxu0 0.0
      %1331 = vmatprep.subr.mxu0 0.0
      %1332 = vmatpush1.msra.mxu0 0.0
      %1333 = vmatprep.mubr.f32.mxu0 0.0
      %v1334 = vand.u32 %v1265, 4294901760
      %v1335 = vsub.f32 %v1265, %v1334
      %v1336 = vand.u32 %v1335, 4294901760
      %v1337 = vsub.f32 %v1335, %v1336
      %v1338 = vand.u32 %v1337, 4294901760
      %1339 = vmatmul.mubr.f32.gmra.mrb[0].mxu0 %v1338
      %v1340 = vpop.f32.mrb[0].mxu0
      %v1341 = vadd.f32 0.0, %v1340
      %v1342 = vpop.f32.mrb[0].mxu0
      %1343 = vdwg.mxu0
      %1344 = vmatprep.subr.mxu0 0.0
      %v1345 = vand.u32 %v1254, 4294901760
      %v1346 = vsub.f32 %v1254, %v1345
      %v1347 = vand.u32 %v1346, 4294901760
      %v1348 = vsub.f32 %v1346, %v1347
      %v1349 = vand.u32 %v1348, 4294901760
      %1350 = vmatpush1.msra.mxu0 %v1349
      %1351 = vmatprep.subr.mxu0 0.0
      %v1352 = vand.u32 %v1255, 4294901760
      %v1353 = vsub.f32 %v1255, %v1352
      %v1354 = vand.u32 %v1353, 4294901760
      %v1355 = vsub.f32 %v1353, %v1354
      %v1356 = vand.u32 %v1355, 4294901760
      %1357 = vmatpush1.msra.mxu0 %v1356
      %1358 = vmatprep.subr.mxu0 0.0
      %1359 = vmatpush1.msra.mxu0 0.0
      %1360 = vmatprep.subr.mxu0 0.0
      %1361 = vmatpush1.msra.mxu0 0.0
      %1362 = vmatprep.subr.mxu0 0.0
      %1363 = vmatpush1.msra.mxu0 0.0
      %1364 = vmatprep.subr.mxu0 0.0
      %1365 = vmatpush1.msra.mxu0 0.0
      %1366 = vmatprep.subr.mxu0 0.0
      %1367 = vmatpush1.msra.mxu0 0.0
      %1368 = vmatprep.subr.mxu0 0.0
      %1369 = vmatpush1.msra.mxu0 0.0
      %1370 = vmatprep.subr.mxu0 0.0
      %1371 = vmatpush1.msra.mxu0 0.0
      %1372 = vmatprep.subr.mxu0 0.0
      %1373 = vmatpush1.msra.mxu0 0.0
      %1374 = vmatprep.subr.mxu0 0.0
      %1375 = vmatpush1.msra.mxu0 0.0
      %1376 = vmatprep.subr.mxu0 0.0
      %1377 = vmatpush1.msra.mxu0 0.0
      %1378 = vmatprep.subr.mxu0 0.0
      %1379 = vmatpush1.msra.mxu0 0.0
      %1380 = vmatprep.subr.mxu0 0.0
      %1381 = vmatpush1.msra.mxu0 0.0
      %1382 = vmatprep.subr.mxu0 0.0
      %1383 = vmatpush1.msra.mxu0 0.0
      %1384 = vmatprep.subr.mxu0 0.0
      %1385 = vmatpush1.msra.mxu0 0.0
      %1386 = vmatprep.subr.mxu0 0.0
      %1387 = vmatpush1.msra.mxu0 0.0
      %1388 = vmatprep.subr.mxu0 0.0
      %1389 = vmatpush1.msra.mxu0 0.0
      %1390 = vmatprep.subr.mxu0 0.0
      %1391 = vmatpush1.msra.mxu0 0.0
      %1392 = vmatprep.subr.mxu0 0.0
      %1393 = vmatpush1.msra.mxu0 0.0
      %1394 = vmatprep.subr.mxu0 0.0
      %1395 = vmatpush1.msra.mxu0 0.0
      %1396 = vmatprep.subr.mxu0 0.0
      %1397 = vmatpush1.msra.mxu0 0.0
      %1398 = vmatprep.subr.mxu0 0.0
      %1399 = vmatpush1.msra.mxu0 0.0
      %1400 = vmatprep.subr.mxu0 0.0
      %1401 = vmatpush1.msra.mxu0 0.0
      %1402 = vmatprep.subr.mxu0 0.0
      %1403 = vmatpush1.msra.mxu0 0.0
      %1404 = vmatprep.subr.mxu0 0.0
      %1405 = vmatpush1.msra.mxu0 0.0
      %1406 = vmatprep.subr.mxu0 0.0
      %1407 = vmatpush1.msra.mxu0 0.0
      %1408 = vmatprep.subr.mxu0 0.0
      %1409 = vmatpush1.msra.mxu0 0.0
      %1410 = vmatprep.subr.mxu0 0.0
      %1411 = vmatpush1.msra.mxu0 0.0
      %1412 = vmatprep.subr.mxu0 0.0
      %1413 = vmatpush1.msra.mxu0 0.0
      %1414 = vmatprep.subr.mxu0 0.0
      %1415 = vmatpush1.msra.mxu0 0.0
      %1416 = vmatprep.subr.mxu0 0.0
      %1417 = vmatpush1.msra.mxu0 0.0
      %1418 = vmatprep.mubr.f32.mxu0 0.0
      %v1419 = vand.u32 %v1265, 4294901760
      %1420 = vmatmul.mubr.f32.gmra.mrb[0].mxu0 %v1419
      %v1421 = vpop.f32.mrb[0].mxu0
      %v1422 = vadd.f32 %v1341, %v1421
      %v1423 = vpop.f32.mrb[0].mxu0
      %1424 = vdwg.mxu0
      %1425 = vmatprep.subr.mxu0 0.0
      %v1426 = vand.u32 %v1254, 4294901760
      %v1427 = vsub.f32 %v1254, %v1426
      %1428 = vmatpush1.msra.mxu0 %v1427
      %1429 = vmatprep.subr.mxu0 0.0
      %v1430 = vand.u32 %v1255, 4294901760
      %v1431 = vsub.f32 %v1255, %v1430
      %1432 = vmatpush1.msra.mxu0 %v1431
      %1433 = vmatprep.subr.mxu0 0.0
      %1434 = vmatpush1.msra.mxu0 0.0
      %1435 = vmatprep.subr.mxu0 0.0
      %1436 = vmatpush1.msra.mxu0 0.0
      %1437 = vmatprep.subr.mxu0 0.0
      %1438 = vmatpush1.msra.mxu0 0.0
      %1439 = vmatprep.subr.mxu0 0.0
      %1440 = vmatpush1.msra.mxu0 0.0
      %1441 = vmatprep.subr.mxu0 0.0
      %1442 = vmatpush1.msra.mxu0 0.0
      %1443 = vmatprep.subr.mxu0 0.0
      %1444 = vmatpush1.msra.mxu0 0.0
      %1445 = vmatprep.subr.mxu0 0.0
      %1446 = vmatpush1.msra.mxu0 0.0
      %1447 = vmatprep.subr.mxu0 0.0
      %1448 = vmatpush1.msra.mxu0 0.0
      %1449 = vmatprep.subr.mxu0 0.0
      %1450 = vmatpush1.msra.mxu0 0.0
      %1451 = vmatprep.subr.mxu0 0.0
      %1452 = vmatpush1.msra.mxu0 0.0
      %1453 = vmatprep.subr.mxu0 0.0
      %1454 = vmatpush1.msra.mxu0 0.0
      %1455 = vmatprep.subr.mxu0 0.0
      %1456 = vmatpush1.msra.mxu0 0.0
      %1457 = vmatprep.subr.mxu0 0.0
      %1458 = vmatpush1.msra.mxu0 0.0
      %1459 = vmatprep.subr.mxu0 0.0
      %1460 = vmatpush1.msra.mxu0 0.0
      %1461 = vmatprep.subr.mxu0 0.0
      %1462 = vmatpush1.msra.mxu0 0.0
      %1463 = vmatprep.subr.mxu0 0.0
      %1464 = vmatpush1.msra.mxu0 0.0
      %1465 = vmatprep.subr.mxu0 0.0
      %1466 = vmatpush1.msra.mxu0 0.0
      %1467 = vmatprep.subr.mxu0 0.0
      %1468 = vmatpush1.msra.mxu0 0.0
      %1469 = vmatprep.subr.mxu0 0.0
      %1470 = vmatpush1.msra.mxu0 0.0
      %1471 = vmatprep.subr.mxu0 0.0
      %1472 = vmatpush1.msra.mxu0 0.0
      %1473 = vmatprep.subr.mxu0 0.0
      %1474 = vmatpush1.msra.mxu0 0.0
      %1475 = vmatprep.subr.mxu0 0.0
      %1476 = vmatpush1.msra.mxu0 0.0
      %1477 = vmatprep.subr.mxu0 0.0
      %1478 = vmatpush1.msra.mxu0 0.0
      %1479 = vmatprep.subr.mxu0 0.0
      %1480 = vmatpush1.msra.mxu0 0.0
      %1481 = vmatprep.subr.mxu0 0.0
      %1482 = vmatpush1.msra.mxu0 0.0
      %1483 = vmatprep.subr.mxu0 0.0
      %1484 = vmatpush1.msra.mxu0 0.0
      %1485 = vmatprep.subr.mxu0 0.0
      %1486 = vmatpush1.msra.mxu0 0.0
      %1487 = vmatprep.subr.mxu0 0.0
      %1488 = vmatpush1.msra.mxu0 0.0
      %1489 = vmatprep.subr.mxu0 0.0
      %1490 = vmatpush1.msra.mxu0 0.0
      %1491 = vmatprep.subr.mxu0 0.0
      %1492 = vmatpush1.msra.mxu0 0.0
      %1493 = vmatprep.mubr.f32.mxu0 0.0
      %v1494 = vand.u32 %v1265, 4294901760
      %v1495 = vsub.f32 %v1265, %v1494
      %1496 = vmatmul.mubr.f32.gmra.mrb[0].mxu0 %v1495
      %v1497 = vpop.f32.mrb[0].mxu0
      %v1498 = vadd.f32 %v1422, %v1497
      %v1499 = vpop.f32.mrb[0].mxu0
      %1500 = vdwg.mxu0
      %1501 = vmatprep.subr.mxu0 0.0
      %v1502 = vand.u32 %v1254, 4294901760
      %1503 = vmatpush1.msra.mxu0 %v1502
      %1504 = vmatprep.subr.mxu0 0.0
      %v1505 = vand.u32 %v1255, 4294901760
      %1506 = vmatpush1.msra.mxu0 %v1505
      %1507 = vmatprep.subr.mxu0 0.0
      %1508 = vmatpush1.msra.mxu0 0.0
      %1509 = vmatprep.subr.mxu0 0.0
      %1510 = vmatpush1.msra.mxu0 0.0
      %1511 = vmatprep.subr.mxu0 0.0
      %1512 = vmatpush1.msra.mxu0 0.0
      %1513 = vmatprep.subr.mxu0 0.0
      %1514 = vmatpush1.msra.mxu0 0.0
      %1515 = vmatprep.subr.mxu0 0.0
      %1516 = vmatpush1.msra.mxu0 0.0
      %1517 = vmatprep.subr.mxu0 0.0
      %1518 = vmatpush1.msra.mxu0 0.0
      %1519 = vmatprep.subr.mxu0 0.0
      %1520 = vmatpush1.msra.mxu0 0.0
      %1521 = vmatprep.subr.mxu0 0.0
      %1522 = vmatpush1.msra.mxu0 0.0
      %1523 = vmatprep.subr.mxu0 0.0
      %1524 = vmatpush1.msra.mxu0 0.0
      %1525 = vmatprep.subr.mxu0 0.0
      %1526 = vmatpush1.msra.mxu0 0.0
      %1527 = vmatprep.subr.mxu0 0.0
      %1528 = vmatpush1.msra.mxu0 0.0
      %1529 = vmatprep.subr.mxu0 0.0
      %1530 = vmatpush1.msra.mxu0 0.0
      %1531 = vmatprep.subr.mxu0 0.0
      %1532 = vmatpush1.msra.mxu0 0.0
      %1533 = vmatprep.subr.mxu0 0.0
      %1534 = vmatpush1.msra.mxu0 0.0
      %1535 = vmatprep.subr.mxu0 0.0
      %1536 = vmatpush1.msra.mxu0 0.0
      %1537 = vmatprep.subr.mxu0 0.0
      %1538 = vmatpush1.msra.mxu0 0.0
      %1539 = vmatprep.subr.mxu0 0.0
      %1540 = vmatpush1.msra.mxu0 0.0
      %1541 = vmatprep.subr.mxu0 0.0
      %1542 = vmatpush1.msra.mxu0 0.0
      %1543 = vmatprep.subr.mxu0 0.0
      %1544 = vmatpush1.msra.mxu0 0.0
      %1545 = vmatprep.subr.mxu0 0.0
      %1546 = vmatpush1.msra.mxu0 0.0
      %1547 = vmatprep.subr.mxu0 0.0
      %1548 = vmatpush1.msra.mxu0 0.0
      %1549 = vmatprep.subr.mxu0 0.0
      %1550 = vmatpush1.msra.mxu0 0.0
      %1551 = vmatprep.subr.mxu0 0.0
      %1552 = vmatpush1.msra.mxu0 0.0
      %1553 = vmatprep.subr.mxu0 0.0
      %1554 = vmatpush1.msra.mxu0 0.0
      %1555 = vmatprep.subr.mxu0 0.0
      %1556 = vmatpush1.msra.mxu0 0.0
      %1557 = vmatprep.subr.mxu0 0.0
      %1558 = vmatpush1.msra.mxu0 0.0
      %1559 = vmatprep.subr.mxu0 0.0
      %1560 = vmatpush1.msra.mxu0 0.0
      %1561 = vmatprep.subr.mxu0 0.0
      %1562 = vmatpush1.msra.mxu0 0.0
      %1563 = vmatprep.subr.mxu0 0.0
      %1564 = vmatpush1.msra.mxu0 0.0
      %1565 = vmatprep.subr.mxu0 0.0
      %1566 = vmatpush1.msra.mxu0 0.0
      %1567 = vmatprep.mubr.f32.mxu0 0.0
      %v1568 = vand.u32 %v1265, 4294901760
      %v1569 = vsub.f32 %v1265, %v1568
      %v1570 = vand.u32 %v1569, 4294901760
      %1571 = vmatmul.mubr.f32.gmra.mrb[0].mxu0 %v1570
      %v1572 = vpop.f32.mrb[0].mxu0
      %v1573 = vadd.f32 %v1498, %v1572
      %v1574 = vpop.f32.mrb[0].mxu0
      %1575 = vdwg.mxu0
      %1576 = vmatprep.subr.mxu0 0.0
      %v1577 = vand.u32 %v1254, 4294901760
      %v1578 = vsub.f32 %v1254, %v1577
      %v1579 = vand.u32 %v1578, 4294901760
      %1580 = vmatpush1.msra.mxu0 %v1579
      %1581 = vmatprep.subr.mxu0 0.0
      %v1582 = vand.u32 %v1255, 4294901760
      %v1583 = vsub.f32 %v1255, %v1582
      %v1584 = vand.u32 %v1583, 4294901760
      %1585 = vmatpush1.msra.mxu0 %v1584
      %1586 = vmatprep.subr.mxu0 0.0
      %1587 = vmatpush1.msra.mxu0 0.0
      %1588 = vmatprep.subr.mxu0 0.0
      %1589 = vmatpush1.msra.mxu0 0.0
      %1590 = vmatprep.subr.mxu0 0.0
      %1591 = vmatpush1.msra.mxu0 0.0
      %1592 = vmatprep.subr.mxu0 0.0
      %1593 = vmatpush1.msra.mxu0 0.0
      %1594 = vmatprep.subr.mxu0 0.0
      %1595 = vmatpush1.msra.mxu0 0.0
      %1596 = vmatprep.subr.mxu0 0.0
      %1597 = vmatpush1.msra.mxu0 0.0
      %1598 = vmatprep.subr.mxu0 0.0
      %1599 = vmatpush1.msra.mxu0 0.0
      %1600 = vmatprep.subr.mxu0 0.0
      %1601 = vmatpush1.msra.mxu0 0.0
      %1602 = vmatprep.subr.mxu0 0.0
      %1603 = vmatpush1.msra.mxu0 0.0
      %1604 = vmatprep.subr.mxu0 0.0
      %1605 = vmatpush1.msra.mxu0 0.0
      %1606 = vmatprep.subr.mxu0 0.0
      %1607 = vmatpush1.msra.mxu0 0.0
      %1608 = vmatprep.subr.mxu0 0.0
      %1609 = vmatpush1.msra.mxu0 0.0
      %1610 = vmatprep.subr.mxu0 0.0
      %1611 = vmatpush1.msra.mxu0 0.0
      %1612 = vmatprep.subr.mxu0 0.0
      %1613 = vmatpush1.msra.mxu0 0.0
      %1614 = vmatprep.subr.mxu0 0.0
      %1615 = vmatpush1.msra.mxu0 0.0
      %1616 = vmatprep.subr.mxu0 0.0
      %1617 = vmatpush1.msra.mxu0 0.0
      %1618 = vmatprep.subr.mxu0 0.0
      %1619 = vmatpush1.msra.mxu0 0.0
      %1620 = vmatprep.subr.mxu0 0.0
      %1621 = vmatpush1.msra.mxu0 0.0
      %1622 = vmatprep.subr.mxu0 0.0
      %1623 = vmatpush1.msra.mxu0 0.0
      %1624 = vmatprep.subr.mxu0 0.0
      %1625 = vmatpush1.msra.mxu0 0.0
      %1626 = vmatprep.subr.mxu0 0.0
      %1627 = vmatpush1.msra.mxu0 0.0
      %1628 = vmatprep.subr.mxu0 0.0
      %1629 = vmatpush1.msra.mxu0 0.0
      %1630 = vmatprep.subr.mxu0 0.0
      %1631 = vmatpush1.msra.mxu0 0.0
      %1632 = vmatprep.subr.mxu0 0.0
      %1633 = vmatpush1.msra.mxu0 0.0
      %1634 = vmatprep.subr.mxu0 0.0
      %1635 = vmatpush1.msra.mxu0 0.0
      %1636 = vmatprep.subr.mxu0 0.0
      %1637 = vmatpush1.msra.mxu0 0.0
      %1638 = vmatprep.subr.mxu0 0.0
      %1639 = vmatpush1.msra.mxu0 0.0
      %1640 = vmatprep.subr.mxu0 0.0
      %1641 = vmatpush1.msra.mxu0 0.0
      %1642 = vmatprep.subr.mxu0 0.0
      %1643 = vmatpush1.msra.mxu0 0.0
      %1644 = vmatprep.subr.mxu0 0.0
      %1645 = vmatpush1.msra.mxu0 0.0
      %1646 = vmatprep.mubr.f32.mxu0 0.0
      %v1647 = vand.u32 %v1265, 4294901760
      %1648 = vmatmul.mubr.f32.gmra.mrb[0].mxu0 %v1647
      %v1649 = vpop.f32.mrb[0].mxu0
      %v1650 = vadd.f32 %v1573, %v1649
      %v1651 = vpop.f32.mrb[0].mxu0
      %1652 = vdwg.mxu0
      %1653 = vmatprep.subr.mxu0 0.0
      %v1654 = vand.u32 %v1254, 4294901760
      %1655 = vmatpush1.msra.mxu0 %v1654
      %1656 = vmatprep.subr.mxu0 0.0
      %v1657 = vand.u32 %v1255, 4294901760
      %1658 = vmatpush1.msra.mxu0 %v1657
      %1659 = vmatprep.subr.mxu0 0.0
      %1660 = vmatpush1.msra.mxu0 0.0
      %1661 = vmatprep.subr.mxu0 0.0
      %1662 = vmatpush1.msra.mxu0 0.0
      %1663 = vmatprep.subr.mxu0 0.0
      %1664 = vmatpush1.msra.mxu0 0.0
      %1665 = vmatprep.subr.mxu0 0.0
      %1666 = vmatpush1.msra.mxu0 0.0
      %1667 = vmatprep.subr.mxu0 0.0
      %1668 = vmatpush1.msra.mxu0 0.0
      %1669 = vmatprep.subr.mxu0 0.0
      %1670 = vmatpush1.msra.mxu0 0.0
      %1671 = vmatprep.subr.mxu0 0.0
      %1672 = vmatpush1.msra.mxu0 0.0
      %1673 = vmatprep.subr.mxu0 0.0
      %1674 = vmatpush1.msra.mxu0 0.0
      %1675 = vmatprep.subr.mxu0 0.0
      %1676 = vmatpush1.msra.mxu0 0.0
      %1677 = vmatprep.subr.mxu0 0.0
      %1678 = vmatpush1.msra.mxu0 0.0
      %1679 = vmatprep.subr.mxu0 0.0
      %1680 = vmatpush1.msra.mxu0 0.0
      %1681 = vmatprep.subr.mxu0 0.0
      %1682 = vmatpush1.msra.mxu0 0.0
      %1683 = vmatprep.subr.mxu0 0.0
      %1684 = vmatpush1.msra.mxu0 0.0
      %1685 = vmatprep.subr.mxu0 0.0
      %1686 = vmatpush1.msra.mxu0 0.0
      %1687 = vmatprep.subr.mxu0 0.0
      %1688 = vmatpush1.msra.mxu0 0.0
      %1689 = vmatprep.subr.mxu0 0.0
      %1690 = vmatpush1.msra.mxu0 0.0
      %1691 = vmatprep.subr.mxu0 0.0
      %1692 = vmatpush1.msra.mxu0 0.0
      %1693 = vmatprep.subr.mxu0 0.0
      %1694 = vmatpush1.msra.mxu0 0.0
      %1695 = vmatprep.subr.mxu0 0.0
      %1696 = vmatpush1.msra.mxu0 0.0
      %1697 = vmatprep.subr.mxu0 0.0
      %1698 = vmatpush1.msra.mxu0 0.0
      %1699 = vmatprep.subr.mxu0 0.0
      %1700 = vmatpush1.msra.mxu0 0.0
      %1701 = vmatprep.subr.mxu0 0.0
      %1702 = vmatpush1.msra.mxu0 0.0
      %1703 = vmatprep.subr.mxu0 0.0
      %1704 = vmatpush1.msra.mxu0 0.0
      %1705 = vmatprep.subr.mxu0 0.0
      %1706 = vmatpush1.msra.mxu0 0.0
      %1707 = vmatprep.subr.mxu0 0.0
      %1708 = vmatpush1.msra.mxu0 0.0
      %1709 = vmatprep.subr.mxu0 0.0
      %1710 = vmatpush1.msra.mxu0 0.0
      %1711 = vmatprep.subr.mxu0 0.0
      %1712 = vmatpush1.msra.mxu0 0.0
      %1713 = vmatprep.subr.mxu0 0.0
      %1714 = vmatpush1.msra.mxu0 0.0
      %1715 = vmatprep.subr.mxu0 0.0
      %1716 = vmatpush1.msra.mxu0 0.0
      %1717 = vmatprep.subr.mxu0 0.0
      %1718 = vmatpush1.msra.mxu0 0.0
      %1719 = vmatprep.mubr.f32.mxu0 0.0
      %v1720 = vand.u32 %v1265, 4294901760
      %1721 = vmatmul.mubr.f32.gmra.mrb[0].mxu0 %v1720
      %v1722 = vpop.f32.mrb[0].mxu0
      %v1723 = vadd.f32 %v1650, %v1722
      %v1724 = vpop.f32.mrb[0].mxu0
      %1725 = vdwg.mxu0
      %vm1726 = vcmask 64512
      %1727 = vst.msk [vmem:[%s330] sm:$0xff] %vm1726, %v1723
      %1728 = vrot.lane.b32.xlu0 %v1260, 73
      %v1729 = vpop.permute.xlu0 %1728
      %v1730 = vsel %vm1264, %v1729, 0
      %1732 = vmatprep.subr.mxu0 0.0
      %v1733 = vand.u32 %v1254, 4294901760
      %1734 = vmatpush1.msra.mxu0 %v1733
      %1735 = vmatprep.subr.mxu0 0.0
      %v1736 = vand.u32 %v1255, 4294901760
      %1737 = vmatpush1.msra.mxu0 %v1736
      %1738 = vmatprep.subr.mxu0 0.0
      %1739 = vmatpush1.msra.mxu0 0.0
      %1740 = vmatprep.subr.mxu0 0.0
      %1741 = vmatpush1.msra.mxu0 0.0
      %1742 = vmatprep.subr.mxu0 0.0
      %1743 = vmatpush1.msra.mxu0 0.0
      %1744 = vmatprep.subr.mxu0 0.0
      %1745 = vmatpush1.msra.mxu0 0.0
      %1746 = vmatprep.subr.mxu0 0.0
      %1747 = vmatpush1.msra.mxu0 0.0
      %1748 = vmatprep.subr.mxu0 0.0
      %1749 = vmatpush1.msra.mxu0 0.0
      %1750 = vmatprep.subr.mxu0 0.0
      %1751 = vmatpush1.msra.mxu0 0.0
      %1752 = vmatprep.subr.mxu0 0.0
      %1753 = vmatpush1.msra.mxu0 0.0
      %1754 = vmatprep.subr.mxu0 0.0
      %1755 = vmatpush1.msra.mxu0 0.0
      %1756 = vmatprep.subr.mxu0 0.0
      %1757 = vmatpush1.msra.mxu0 0.0
      %1758 = vmatprep.subr.mxu0 0.0
      %1759 = vmatpush1.msra.mxu0 0.0
      %1760 = vmatprep.subr.mxu0 0.0
      %1761 = vmatpush1.msra.mxu0 0.0
      %1762 = vmatprep.subr.mxu0 0.0
      %1763 = vmatpush1.msra.mxu0 0.0
      %1764 = vmatprep.subr.mxu0 0.0
      %1765 = vmatpush1.msra.mxu0 0.0
      %1766 = vmatprep.subr.mxu0 0.0
      %1767 = vmatpush1.msra.mxu0 0.0
      %1768 = vmatprep.subr.mxu0 0.0
      %1769 = vmatpush1.msra.mxu0 0.0
      %1770 = vmatprep.subr.mxu0 0.0
      %1771 = vmatpush1.msra.mxu0 0.0
      %1772 = vmatprep.subr.mxu0 0.0
      %1773 = vmatpush1.msra.mxu0 0.0
      %1774 = vmatprep.subr.mxu0 0.0
      %1775 = vmatpush1.msra.mxu0 0.0
      %1776 = vmatprep.subr.mxu0 0.0
      %1777 = vmatpush1.msra.mxu0 0.0
      %1778 = vmatprep.subr.mxu0 0.0
      %1779 = vmatpush1.msra.mxu0 0.0
      %1780 = vmatprep.subr.mxu0 0.0
      %1781 = vmatpush1.msra.mxu0 0.0
      %1782 = vmatprep.subr.mxu0 0.0
      %1783 = vmatpush1.msra.mxu0 0.0
      %1784 = vmatprep.subr.mxu0 0.0
      %1785 = vmatpush1.msra.mxu0 0.0
      %1786 = vmatprep.subr.mxu0 0.0
      %1787 = vmatpush1.msra.mxu0 0.0
      %1788 = vmatprep.subr.mxu0 0.0
      %1789 = vmatpush1.msra.mxu0 0.0
      %1790 = vmatprep.subr.mxu0 0.0
      %1791 = vmatpush1.msra.mxu0 0.0
      %1792 = vmatprep.subr.mxu0 0.0
      %1793 = vmatpush1.msra.mxu0 0.0
      %1794 = vmatprep.subr.mxu0 0.0
      %1795 = vmatpush1.msra.mxu0 0.0
      %1796 = vmatprep.subr.mxu0 0.0
      %1797 = vmatpush1.msra.mxu0 0.0
      %1798 = vmatprep.mubr.f32.mxu0 0.0
      %v1799 = vand.u32 %v1730, 4294901760
      %v1800 = vsub.f32 %v1730, %v1799
      %v1801 = vand.u32 %v1800, 4294901760
      %v1802 = vsub.f32 %v1800, %v1801
      %v1803 = vand.u32 %v1802, 4294901760
      %1804 = vmatmul.mubr.f32.gmra.mrb[0].mxu0 %v1803
      %v1805 = vpop.f32.mrb[0].mxu0
      %v1806 = vadd.f32 0.0, %v1805
      %v1807 = vpop.f32.mrb[0].mxu0
      %1808 = vdwg.mxu0
      %1809 = vmatprep.subr.mxu0 0.0
      %v1810 = vand.u32 %v1254, 4294901760
      %v1811 = vsub.f32 %v1254, %v1810
      %v1812 = vand.u32 %v1811, 4294901760
      %v1813 = vsub.f32 %v1811, %v1812
      %v1814 = vand.u32 %v1813, 4294901760
      %1815 = vmatpush1.msra.mxu0 %v1814
      %1816 = vmatprep.subr.mxu0 0.0
      %v1817 = vand.u32 %v1255, 4294901760
      %v1818 = vsub.f32 %v1255, %v1817
      %v1819 = vand.u32 %v1818, 4294901760
      %v1820 = vsub.f32 %v1818, %v1819
      %v1821 = vand.u32 %v1820, 4294901760
      %1822 = vmatpush1.msra.mxu0 %v1821
      %1823 = vmatprep.subr.mxu0 0.0
      %1824 = vmatpush1.msra.mxu0 0.0
      %1825 = vmatprep.subr.mxu0 0.0
      %1826 = vmatpush1.msra.mxu0 0.0
      %1827 = vmatprep.subr.mxu0 0.0
      %1828 = vmatpush1.msra.mxu0 0.0
      %1829 = vmatprep.subr.mxu0 0.0
      %1830 = vmatpush1.msra.mxu0 0.0
      %1831 = vmatprep.subr.mxu0 0.0
      %1832 = vmatpush1.msra.mxu0 0.0
      %1833 = vmatprep.subr.mxu0 0.0
      %1834 = vmatpush1.msra.mxu0 0.0
      %1835 = vmatprep.subr.mxu0 0.0
      %1836 = vmatpush1.msra.mxu0 0.0
      %1837 = vmatprep.subr.mxu0 0.0
      %1838 = vmatpush1.msra.mxu0 0.0
      %1839 = vmatprep.subr.mxu0 0.0
      %1840 = vmatpush1.msra.mxu0 0.0
      %1841 = vmatprep.subr.mxu0 0.0
      %1842 = vmatpush1.msra.mxu0 0.0
      %1843 = vmatprep.subr.mxu0 0.0
      %1844 = vmatpush1.msra.mxu0 0.0
      %1845 = vmatprep.subr.mxu0 0.0
      %1846 = vmatpush1.msra.mxu0 0.0
      %1847 = vmatprep.subr.mxu0 0.0
      %1848 = vmatpush1.msra.mxu0 0.0
      %1849 = vmatprep.subr.mxu0 0.0
      %1850 = vmatpush1.msra.mxu0 0.0
      %1851 = vmatprep.subr.mxu0 0.0
      %1852 = vmatpush1.msra.mxu0 0.0
      %1853 = vmatprep.subr.mxu0 0.0
      %1854 = vmatpush1.msra.mxu0 0.0
      %1855 = vmatprep.subr.mxu0 0.0
      %1856 = vmatpush1.msra.mxu0 0.0
      %1857 = vmatprep.subr.mxu0 0.0
      %1858 = vmatpush1.msra.mxu0 0.0
      %1859 = vmatprep.subr.mxu0 0.0
      %1860 = vmatpush1.msra.mxu0 0.0
      %1861 = vmatprep.subr.mxu0 0.0
      %1862 = vmatpush1.msra.mxu0 0.0
      %1863 = vmatprep.subr.mxu0 0.0
      %1864 = vmatpush1.msra.mxu0 0.0
      %1865 = vmatprep.subr.mxu0 0.0
      %1866 = vmatpush1.msra.mxu0 0.0
      %1867 = vmatprep.subr.mxu0 0.0
      %1868 = vmatpush1.msra.mxu0 0.0
      %1869 = vmatprep.subr.mxu0 0.0
      %1870 = vmatpush1.msra.mxu0 0.0
      %1871 = vmatprep.subr.mxu0 0.0
      %1872 = vmatpush1.msra.mxu0 0.0
      %1873 = vmatprep.subr.mxu0 0.0
      %1874 = vmatpush1.msra.mxu0 0.0
      %1875 = vmatprep.subr.mxu0 0.0
      %1876 = vmatpush1.msra.mxu0 0.0
      %1877 = vmatprep.subr.mxu0 0.0
      %1878 = vmatpush1.msra.mxu0 0.0
      %1879 = vmatprep.subr.mxu0 0.0
      %1880 = vmatpush1.msra.mxu0 0.0
      %1881 = vmatprep.subr.mxu0 0.0
      %1882 = vmatpush1.msra.mxu0 0.0
      %1883 = vmatprep.mubr.f32.mxu0 0.0
      %v1884 = vand.u32 %v1730, 4294901760
      %1885 = vmatmul.mubr.f32.gmra.mrb[0].mxu0 %v1884
      %v1886 = vpop.f32.mrb[0].mxu0
      %v1887 = vadd.f32 %v1806, %v1886
      %v1888 = vpop.f32.mrb[0].mxu0
      %1889 = vdwg.mxu0
      %1890 = vmatprep.subr.mxu0 0.0
      %v1891 = vand.u32 %v1254, 4294901760
      %v1892 = vsub.f32 %v1254, %v1891
      %1893 = vmatpush1.msra.mxu0 %v1892
      %1894 = vmatprep.subr.mxu0 0.0
      %v1895 = vand.u32 %v1255, 4294901760
      %v1896 = vsub.f32 %v1255, %v1895
      %1897 = vmatpush1.msra.mxu0 %v1896
      %1898 = vmatprep.subr.mxu0 0.0
      %1899 = vmatpush1.msra.mxu0 0.0
      %1900 = vmatprep.subr.mxu0 0.0
      %1901 = vmatpush1.msra.mxu0 0.0
      %1902 = vmatprep.subr.mxu0 0.0
      %1903 = vmatpush1.msra.mxu0 0.0
      %1904 = vmatprep.subr.mxu0 0.0
      %1905 = vmatpush1.msra.mxu0 0.0
      %1906 = vmatprep.subr.mxu0 0.0
      %1907 = vmatpush1.msra.mxu0 0.0
      %1908 = vmatprep.subr.mxu0 0.0
      %1909 = vmatpush1.msra.mxu0 0.0
      %1910 = vmatprep.subr.mxu0 0.0
      %1911 = vmatpush1.msra.mxu0 0.0
      %1912 = vmatprep.subr.mxu0 0.0
      %1913 = vmatpush1.msra.mxu0 0.0
      %1914 = vmatprep.subr.mxu0 0.0
      %1915 = vmatpush1.msra.mxu0 0.0
      %1916 = vmatprep.subr.mxu0 0.0
      %1917 = vmatpush1.msra.mxu0 0.0
      %1918 = vmatprep.subr.mxu0 0.0
      %1919 = vmatpush1.msra.mxu0 0.0
      %1920 = vmatprep.subr.mxu0 0.0
      %1921 = vmatpush1.msra.mxu0 0.0
      %1922 = vmatprep.subr.mxu0 0.0
      %1923 = vmatpush1.msra.mxu0 0.0
      %1924 = vmatprep.subr.mxu0 0.0
      %1925 = vmatpush1.msra.mxu0 0.0
      %1926 = vmatprep.subr.mxu0 0.0
      %1927 = vmatpush1.msra.mxu0 0.0
      %1928 = vmatprep.subr.mxu0 0.0
      %1929 = vmatpush1.msra.mxu0 0.0
      %1930 = vmatprep.subr.mxu0 0.0
      %1931 = vmatpush1.msra.mxu0 0.0
      %1932 = vmatprep.subr.mxu0 0.0
      %1933 = vmatpush1.msra.mxu0 0.0
      %1934 = vmatprep.subr.mxu0 0.0
      %1935 = vmatpush1.msra.mxu0 0.0
      %1936 = vmatprep.subr.mxu0 0.0
      %1937 = vmatpush1.msra.mxu0 0.0
      %1938 = vmatprep.subr.mxu0 0.0
      %1939 = vmatpush1.msra.mxu0 0.0
      %1940 = vmatprep.subr.mxu0 0.0
      %1941 = vmatpush1.msra.mxu0 0.0
      %1942 = vmatprep.subr.mxu0 0.0
      %1943 = vmatpush1.msra.mxu0 0.0
      %1944 = vmatprep.subr.mxu0 0.0
      %1945 = vmatpush1.msra.mxu0 0.0
      %1946 = vmatprep.subr.mxu0 0.0
      %1947 = vmatpush1.msra.mxu0 0.0
      %1948 = vmatprep.subr.mxu0 0.0
      %1949 = vmatpush1.msra.mxu0 0.0
      %1950 = vmatprep.subr.mxu0 0.0
      %1951 = vmatpush1.msra.mxu0 0.0
      %1952 = vmatprep.subr.mxu0 0.0
      %1953 = vmatpush1.msra.mxu0 0.0
      %1954 = vmatprep.subr.mxu0 0.0
      %1955 = vmatpush1.msra.mxu0 0.0
      %1956 = vmatprep.subr.mxu0 0.0
      %1957 = vmatpush1.msra.mxu0 0.0
      %1958 = vmatprep.mubr.f32.mxu0 0.0
      %v1959 = vand.u32 %v1730, 4294901760
      %v1960 = vsub.f32 %v1730, %v1959
      %1961 = vmatmul.mubr.f32.gmra.mrb[0].mxu0 %v1960
      %v1962 = vpop.f32.mrb[0].mxu0
      %v1963 = vadd.f32 %v1887, %v1962
      %v1964 = vpop.f32.mrb[0].mxu0
      %1965 = vdwg.mxu0
      %1966 = vmatprep.subr.mxu0 0.0
      %v1967 = vand.u32 %v1254, 4294901760
      %1968 = vmatpush1.msra.mxu0 %v1967
      %1969 = vmatprep.subr.mxu0 0.0
      %v1970 = vand.u32 %v1255, 4294901760
      %1971 = vmatpush1.msra.mxu0 %v1970
      %1972 = vmatprep.subr.mxu0 0.0
      %1973 = vmatpush1.msra.mxu0 0.0
      %1974 = vmatprep.subr.mxu0 0.0
      %1975 = vmatpush1.msra.mxu0 0.0
      %1976 = vmatprep.subr.mxu0 0.0
      %1977 = vmatpush1.msra.mxu0 0.0
      %1978 = vmatprep.subr.mxu0 0.0
      %1979 = vmatpush1.msra.mxu0 0.0
      %1980 = vmatprep.subr.mxu0 0.0
      %1981 = vmatpush1.msra.mxu0 0.0
      %1982 = vmatprep.subr.mxu0 0.0
      %1983 = vmatpush1.msra.mxu0 0.0
      %1984 = vmatprep.subr.mxu0 0.0
      %1985 = vmatpush1.msra.mxu0 0.0
      %1986 = vmatprep.subr.mxu0 0.0
      %1987 = vmatpush1.msra.mxu0 0.0
      %1988 = vmatprep.subr.mxu0 0.0
      %1989 = vmatpush1.msra.mxu0 0.0
      %1990 = vmatprep.subr.mxu0 0.0
      %1991 = vmatpush1.msra.mxu0 0.0
      %1992 = vmatprep.subr.mxu0 0.0
      %1993 = vmatpush1.msra.mxu0 0.0
      %1994 = vmatprep.subr.mxu0 0.0
      %1995 = vmatpush1.msra.mxu0 0.0
      %1996 = vmatprep.subr.mxu0 0.0
      %1997 = vmatpush1.msra.mxu0 0.0
      %1998 = vmatprep.subr.mxu0 0.0
      %1999 = vmatpush1.msra.mxu0 0.0
      %2000 = vmatprep.subr.mxu0 0.0
      %2001 = vmatpush1.msra.mxu0 0.0
      %2002 = vmatprep.subr.mxu0 0.0
      %2003 = vmatpush1.msra.mxu0 0.0
      %2004 = vmatprep.subr.mxu0 0.0
      %2005 = vmatpush1.msra.mxu0 0.0
      %2006 = vmatprep.subr.mxu0 0.0
      %2007 = vmatpush1.msra.mxu0 0.0
      %2008 = vmatprep.subr.mxu0 0.0
      %2009 = vmatpush1.msra.mxu0 0.0
      %2010 = vmatprep.subr.mxu0 0.0
      %2011 = vmatpush1.msra.mxu0 0.0
      %2012 = vmatprep.subr.mxu0 0.0
      %2013 = vmatpush1.msra.mxu0 0.0
      %2014 = vmatprep.subr.mxu0 0.0
      %2015 = vmatpush1.msra.mxu0 0.0
      %2016 = vmatprep.subr.mxu0 0.0
      %2017 = vmatpush1.msra.mxu0 0.0
      %2018 = vmatprep.subr.mxu0 0.0
      %2019 = vmatpush1.msra.mxu0 0.0
      %2020 = vmatprep.subr.mxu0 0.0
      %2021 = vmatpush1.msra.mxu0 0.0
      %2022 = vmatprep.subr.mxu0 0.0
      %2023 = vmatpush1.msra.mxu0 0.0
      %2024 = vmatprep.subr.mxu0 0.0
      %2025 = vmatpush1.msra.mxu0 0.0
      %2026 = vmatprep.subr.mxu0 0.0
      %2027 = vmatpush1.msra.mxu0 0.0
      %2028 = vmatprep.subr.mxu0 0.0
      %2029 = vmatpush1.msra.mxu0 0.0
      %2030 = vmatprep.subr.mxu0 0.0
      %2031 = vmatpush1.msra.mxu0 0.0
      %2032 = vmatprep.mubr.f32.mxu0 0.0
      %v2033 = vand.u32 %v1730, 4294901760
      %v2034 = vsub.f32 %v1730, %v2033
      %v2035 = vand.u32 %v2034, 4294901760
      %2036 = vmatmul.mubr.f32.gmra.mrb[0].mxu0 %v2035
      %v2037 = vpop.f32.mrb[0].mxu0
      %v2038 = vadd.f32 %v1963, %v2037
      %v2039 = vpop.f32.mrb[0].mxu0
      %2040 = vdwg.mxu0
      %2041 = vmatprep.subr.mxu0 0.0
      %v2042 = vand.u32 %v1254, 4294901760
      %v2043 = vsub.f32 %v1254, %v2042
      %v2044 = vand.u32 %v2043, 4294901760
      %2045 = vmatpush1.msra.mxu0 %v2044
      %2046 = vmatprep.subr.mxu0 0.0
      %v2047 = vand.u32 %v1255, 4294901760
      %v2048 = vsub.f32 %v1255, %v2047
      %v2049 = vand.u32 %v2048, 4294901760
      %2050 = vmatpush1.msra.mxu0 %v2049
      %2051 = vmatprep.subr.mxu0 0.0
      %2052 = vmatpush1.msra.mxu0 0.0
      %2053 = vmatprep.subr.mxu0 0.0
      %2054 = vmatpush1.msra.mxu0 0.0
      %2055 = vmatprep.subr.mxu0 0.0
      %2056 = vmatpush1.msra.mxu0 0.0
      %2057 = vmatprep.subr.mxu0 0.0
      %2058 = vmatpush1.msra.mxu0 0.0
      %2059 = vmatprep.subr.mxu0 0.0
      %2060 = vmatpush1.msra.mxu0 0.0
      %2061 = vmatprep.subr.mxu0 0.0
      %2062 = vmatpush1.msra.mxu0 0.0
      %2063 = vmatprep.subr.mxu0 0.0
      %2064 = vmatpush1.msra.mxu0 0.0
      %2065 = vmatprep.subr.mxu0 0.0
      %2066 = vmatpush1.msra.mxu0 0.0
      %2067 = vmatprep.subr.mxu0 0.0
      %2068 = vmatpush1.msra.mxu0 0.0
      %2069 = vmatprep.subr.mxu0 0.0
      %2070 = vmatpush1.msra.mxu0 0.0
      %2071 = vmatprep.subr.mxu0 0.0
      %2072 = vmatpush1.msra.mxu0 0.0
      %2073 = vmatprep.subr.mxu0 0.0
      %2074 = vmatpush1.msra.mxu0 0.0
      %2075 = vmatprep.subr.mxu0 0.0
      %2076 = vmatpush1.msra.mxu0 0.0
      %2077 = vmatprep.subr.mxu0 0.0
      %2078 = vmatpush1.msra.mxu0 0.0
      %2079 = vmatprep.subr.mxu0 0.0
      %2080 = vmatpush1.msra.mxu0 0.0
      %2081 = vmatprep.subr.mxu0 0.0
      %2082 = vmatpush1.msra.mxu0 0.0
      %2083 = vmatprep.subr.mxu0 0.0
      %2084 = vmatpush1.msra.mxu0 0.0
      %2085 = vmatprep.subr.mxu0 0.0
      %2086 = vmatpush1.msra.mxu0 0.0
      %2087 = vmatprep.subr.mxu0 0.0
      %2088 = vmatpush1.msra.mxu0 0.0
      %2089 = vmatprep.subr.mxu0 0.0
      %2090 = vmatpush1.msra.mxu0 0.0
      %2091 = vmatprep.subr.mxu0 0.0
      %2092 = vmatpush1.msra.mxu0 0.0
      %2093 = vmatprep.subr.mxu0 0.0
      %2094 = vmatpush1.msra.mxu0 0.0
      %2095 = vmatprep.subr.mxu0 0.0
      %2096 = vmatpush1.msra.mxu0 0.0
      %2097 = vmatprep.subr.mxu0 0.0
      %2098 = vmatpush1.msra.mxu0 0.0
      %2099 = vmatprep.subr.mxu0 0.0
      %2100 = vmatpush1.msra.mxu0 0.0
      %2101 = vmatprep.subr.mxu0 0.0
      %2102 = vmatpush1.msra.mxu0 0.0
      %2103 = vmatprep.subr.mxu0 0.0
      %2104 = vmatpush1.msra.mxu0 0.0
      %2105 = vmatprep.subr.mxu0 0.0
      %2106 = vmatpush1.msra.mxu0 0.0
      %2107 = vmatprep.subr.mxu0 0.0
      %2108 = vmatpush1.msra.mxu0 0.0
      %2109 = vmatprep.subr.mxu0 0.0
      %2110 = vmatpush1.msra.mxu0 0.0
      %2111 = vmatprep.mubr.f32.mxu0 0.0
      %v2112 = vand.u32 %v1730, 4294901760
      %2113 = vmatmul.mubr.f32.gmra.mrb[0].mxu0 %v2112
      %v2114 = vpop.f32.mrb[0].mxu0
      %v2115 = vadd.f32 %v2038, %v2114
      %v2116 = vpop.f32.mrb[0].mxu0
      %2117 = vdwg.mxu0
      %2118 = vmatprep.subr.mxu0 0.0
      %v2119 = vand.u32 %v1254, 4294901760
      %2120 = vmatpush1.msra.mxu0 %v2119
      %2121 = vmatprep.subr.mxu0 0.0
      %v2122 = vand.u32 %v1255, 4294901760
      %2123 = vmatpush1.msra.mxu0 %v2122
      %2124 = vmatprep.subr.mxu0 0.0
      %2125 = vmatpush1.msra.mxu0 0.0
      %2126 = vmatprep.subr.mxu0 0.0
      %2127 = vmatpush1.msra.mxu0 0.0
      %2128 = vmatprep.subr.mxu0 0.0
      %2129 = vmatpush1.msra.mxu0 0.0
      %2130 = vmatprep.subr.mxu0 0.0
      %2131 = vmatpush1.msra.mxu0 0.0
      %2132 = vmatprep.subr.mxu0 0.0
      %2133 = vmatpush1.msra.mxu0 0.0
      %2134 = vmatprep.subr.mxu0 0.0
      %2135 = vmatpush1.msra.mxu0 0.0
      %2136 = vmatprep.subr.mxu0 0.0
      %2137 = vmatpush1.msra.mxu0 0.0
      %2138 = vmatprep.subr.mxu0 0.0
      %2139 = vmatpush1.msra.mxu0 0.0
      %2140 = vmatprep.subr.mxu0 0.0
      %2141 = vmatpush1.msra.mxu0 0.0
      %2142 = vmatprep.subr.mxu0 0.0
      %2143 = vmatpush1.msra.mxu0 0.0
      %2144 = vmatprep.subr.mxu0 0.0
      %2145 = vmatpush1.msra.mxu0 0.0
      %2146 = vmatprep.subr.mxu0 0.0
      %2147 = vmatpush1.msra.mxu0 0.0
      %2148 = vmatprep.subr.mxu0 0.0
      %2149 = vmatpush1.msra.mxu0 0.0
      %2150 = vmatprep.subr.mxu0 0.0
      %2151 = vmatpush1.msra.mxu0 0.0
      %2152 = vmatprep.subr.mxu0 0.0
      %2153 = vmatpush1.msra.mxu0 0.0
      %2154 = vmatprep.subr.mxu0 0.0
      %2155 = vmatpush1.msra.mxu0 0.0
      %2156 = vmatprep.subr.mxu0 0.0
      %2157 = vmatpush1.msra.mxu0 0.0
      %2158 = vmatprep.subr.mxu0 0.0
      %2159 = vmatpush1.msra.mxu0 0.0
      %2160 = vmatprep.subr.mxu0 0.0
      %2161 = vmatpush1.msra.mxu0 0.0
      %2162 = vmatprep.subr.mxu0 0.0
      %2163 = vmatpush1.msra.mxu0 0.0
      %2164 = vmatprep.subr.mxu0 0.0
      %2165 = vmatpush1.msra.mxu0 0.0
      %2166 = vmatprep.subr.mxu0 0.0
      %2167 = vmatpush1.msra.mxu0 0.0
      %2168 = vmatprep.subr.mxu0 0.0
      %2169 = vmatpush1.msra.mxu0 0.0
      %2170 = vmatprep.subr.mxu0 0.0
      %2171 = vmatpush1.msra.mxu0 0.0
      %2172 = vmatprep.subr.mxu0 0.0
      %2173 = vmatpush1.msra.mxu0 0.0
      %2174 = vmatprep.subr.mxu0 0.0
      %2175 = vmatpush1.msra.mxu0 0.0
      %2176 = vmatprep.subr.mxu0 0.0
      %2177 = vmatpush1.msra.mxu0 0.0
      %2178 = vmatprep.subr.mxu0 0.0
      %2179 = vmatpush1.msra.mxu0 0.0
      %2180 = vmatprep.subr.mxu0 0.0
      %2181 = vmatpush1.msra.mxu0 0.0
      %2182 = vmatprep.subr.mxu0 0.0
      %2183 = vmatpush1.msra.mxu0 0.0
      %2184 = vmatprep.mubr.f32.mxu0 0.0
      %v2185 = vand.u32 %v1730, 4294901760
      %2186 = vmatmul.mubr.f32.gmra.mrb[0].mxu0 %v2185
      %v2187 = vpop.f32.mrb[0].mxu0
      %v2188 = vadd.f32 %v2115, %v2187
      %v2189 = vpop.f32.mrb[0].mxu0
      %2190 = vdwg.mxu0
      %2192 = vrot.lane.b32.xlu0 %v2188, 8
      %v2193 = vpop.permute.xlu0 %2192
      %vm2195 = vcmask 130112
      %2196 = vst.msk [vmem:[%s330] sm:$0xff] %vm2195, %v2193
      %2197 = vrot.lane.b32.xlu0 %v1260, 37
      %v2198 = vpop.permute.xlu0 %2197
      %v2199 = vsel %vm1264, %v2198, 0
      %2201 = vmatprep.subr.mxu0 0.0
      %v2202 = vand.u32 %v1254, 4294901760
      %2203 = vmatpush1.msra.mxu0 %v2202
      %2204 = vmatprep.subr.mxu0 0.0
      %v2205 = vand.u32 %v1255, 4294901760
      %2206 = vmatpush1.msra.mxu0 %v2205
      %2207 = vmatprep.subr.mxu0 0.0
      %2208 = vmatpush1.msra.mxu0 0.0
      %2209 = vmatprep.subr.mxu0 0.0
      %2210 = vmatpush1.msra.mxu0 0.0
      %2211 = vmatprep.subr.mxu0 0.0
      %2212 = vmatpush1.msra.mxu0 0.0
      %2213 = vmatprep.subr.mxu0 0.0
      %2214 = vmatpush1.msra.mxu0 0.0
      %2215 = vmatprep.subr.mxu0 0.0
      %2216 = vmatpush1.msra.mxu0 0.0
      %2217 = vmatprep.subr.mxu0 0.0
      %2218 = vmatpush1.msra.mxu0 0.0
      %2219 = vmatprep.subr.mxu0 0.0
      %2220 = vmatpush1.msra.mxu0 0.0
      %2221 = vmatprep.subr.mxu0 0.0
      %2222 = vmatpush1.msra.mxu0 0.0
      %2223 = vmatprep.subr.mxu0 0.0
      %2224 = vmatpush1.msra.mxu0 0.0
      %2225 = vmatprep.subr.mxu0 0.0
      %2226 = vmatpush1.msra.mxu0 0.0
      %2227 = vmatprep.subr.mxu0 0.0
      %2228 = vmatpush1.msra.mxu0 0.0
      %2229 = vmatprep.subr.mxu0 0.0
      %2230 = vmatpush1.msra.mxu0 0.0
      %2231 = vmatprep.subr.mxu0 0.0
      %2232 = vmatpush1.msra.mxu0 0.0
      %2233 = vmatprep.subr.mxu0 0.0
      %2234 = vmatpush1.msra.mxu0 0.0
      %2235 = vmatprep.subr.mxu0 0.0
      %2236 = vmatpush1.msra.mxu0 0.0
      %2237 = vmatprep.subr.mxu0 0.0
      %2238 = vmatpush1.msra.mxu0 0.0
      %2239 = vmatprep.subr.mxu0 0.0
      %2240 = vmatpush1.msra.mxu0 0.0
      %2241 = vmatprep.subr.mxu0 0.0
      %2242 = vmatpush1.msra.mxu0 0.0
      %2243 = vmatprep.subr.mxu0 0.0
      %2244 = vmatpush1.msra.mxu0 0.0
      %2245 = vmatprep.subr.mxu0 0.0
      %2246 = vmatpush1.msra.mxu0 0.0
      %2247 = vmatprep.subr.mxu0 0.0
      %2248 = vmatpush1.msra.mxu0 0.0
      %2249 = vmatprep.subr.mxu0 0.0
      %2250 = vmatpush1.msra.mxu0 0.0
      %2251 = vmatprep.subr.mxu0 0.0
      %2252 = vmatpush1.msra.mxu0 0.0
      %2253 = vmatprep.subr.mxu0 0.0
      %2254 = vmatpush1.msra.mxu0 0.0
      %2255 = vmatprep.subr.mxu0 0.0
      %2256 = vmatpush1.msra.mxu0 0.0
      %2257 = vmatprep.subr.mxu0 0.0
      %2258 = vmatpush1.msra.mxu0 0.0
      %2259 = vmatprep.subr.mxu0 0.0
      %2260 = vmatpush1.msra.mxu0 0.0
      %2261 = vmatprep.subr.mxu0 0.0
      %2262 = vmatpush1.msra.mxu0 0.0
      %2263 = vmatprep.subr.mxu0 0.0
      %2264 = vmatpush1.msra.mxu0 0.0
      %2265 = vmatprep.subr.mxu0 0.0
      %2266 = vmatpush1.msra.mxu0 0.0
      %2267 = vmatprep.mubr.f32.mxu0 0.0
      %v2268 = vand.u32 %v2199, 4294901760
      %v2269 = vsub.f32 %v2199, %v2268
      %v2270 = vand.u32 %v2269, 4294901760
      %v2271 = vsub.f32 %v2269, %v2270
      %v2272 = vand.u32 %v2271, 4294901760
      %2273 = vmatmul.mubr.f32.gmra.mrb[0].mxu0 %v2272
      %v2274 = vpop.f32.mrb[0].mxu0
      %v2275 = vadd.f32 0.0, %v2274
      %v2276 = vpop.f32.mrb[0].mxu0
      %2277 = vdwg.mxu0
      %2278 = vmatprep.subr.mxu0 0.0
      %v2279 = vand.u32 %v1254, 4294901760
      %v2280 = vsub.f32 %v1254, %v2279
      %v2281 = vand.u32 %v2280, 4294901760
      %v2282 = vsub.f32 %v2280, %v2281
      %v2283 = vand.u32 %v2282, 4294901760
      %2284 = vmatpush1.msra.mxu0 %v2283
      %2285 = vmatprep.subr.mxu0 0.0
      %v2286 = vand.u32 %v1255, 4294901760
      %v2287 = vsub.f32 %v1255, %v2286
      %v2288 = vand.u32 %v2287, 4294901760
      %v2289 = vsub.f32 %v2287, %v2288
      %v2290 = vand.u32 %v2289, 4294901760
      %2291 = vmatpush1.msra.mxu0 %v2290
      %2292 = vmatprep.subr.mxu0 0.0
      %2293 = vmatpush1.msra.mxu0 0.0
      %2294 = vmatprep.subr.mxu0 0.0
      %2295 = vmatpush1.msra.mxu0 0.0
      %2296 = vmatprep.subr.mxu0 0.0
      %2297 = vmatpush1.msra.mxu0 0.0
      %2298 = vmatprep.subr.mxu0 0.0
      %2299 = vmatpush1.msra.mxu0 0.0
      %2300 = vmatprep.subr.mxu0 0.0
      %2301 = vmatpush1.msra.mxu0 0.0
      %2302 = vmatprep.subr.mxu0 0.0
      %2303 = vmatpush1.msra.mxu0 0.0
      %2304 = vmatprep.subr.mxu0 0.0
      %2305 = vmatpush1.msra.mxu0 0.0
      %2306 = vmatprep.subr.mxu0 0.0
      %2307 = vmatpush1.msra.mxu0 0.0
      %2308 = vmatprep.subr.mxu0 0.0
      %2309 = vmatpush1.msra.mxu0 0.0
      %2310 = vmatprep.subr.mxu0 0.0
      %2311 = vmatpush1.msra.mxu0 0.0
      %2312 = vmatprep.subr.mxu0 0.0
      %2313 = vmatpush1.msra.mxu0 0.0
      %2314 = vmatprep.subr.mxu0 0.0
      %2315 = vmatpush1.msra.mxu0 0.0
      %2316 = vmatprep.subr.mxu0 0.0
      %2317 = vmatpush1.msra.mxu0 0.0
      %2318 = vmatprep.subr.mxu0 0.0
      %2319 = vmatpush1.msra.mxu0 0.0
      %2320 = vmatprep.subr.mxu0 0.0
      %2321 = vmatpush1.msra.mxu0 0.0
      %2322 = vmatprep.subr.mxu0 0.0
      %2323 = vmatpush1.msra.mxu0 0.0
      %2324 = vmatprep.subr.mxu0 0.0
      %2325 = vmatpush1.msra.mxu0 0.0
      %2326 = vmatprep.subr.mxu0 0.0
      %2327 = vmatpush1.msra.mxu0 0.0
      %2328 = vmatprep.subr.mxu0 0.0
      %2329 = vmatpush1.msra.mxu0 0.0
      %2330 = vmatprep.subr.mxu0 0.0
      %2331 = vmatpush1.msra.mxu0 0.0
      %2332 = vmatprep.subr.mxu0 0.0
      %2333 = vmatpush1.msra.mxu0 0.0
      %2334 = vmatprep.subr.mxu0 0.0
      %2335 = vmatpush1.msra.mxu0 0.0
      %2336 = vmatprep.subr.mxu0 0.0
      %2337 = vmatpush1.msra.mxu0 0.0
      %2338 = vmatprep.subr.mxu0 0.0
      %2339 = vmatpush1.msra.mxu0 0.0
      %2340 = vmatprep.subr.mxu0 0.0
      %2341 = vmatpush1.msra.mxu0 0.0
      %2342 = vmatprep.subr.mxu0 0.0
      %2343 = vmatpush1.msra.mxu0 0.0
      %2344 = vmatprep.subr.mxu0 0.0
      %2345 = vmatpush1.msra.mxu0 0.0
      %2346 = vmatprep.subr.mxu0 0.0
      %2347 = vmatpush1.msra.mxu0 0.0
      %2348 = vmatprep.subr.mxu0 0.0
      %2349 = vmatpush1.msra.mxu0 0.0
      %2350 = vmatprep.subr.mxu0 0.0
      %2351 = vmatpush1.msra.mxu0 0.0
      %2352 = vmatprep.mubr.f32.mxu0 0.0
      %v2353 = vand.u32 %v2199, 4294901760
      %2354 = vmatmul.mubr.f32.gmra.mrb[0].mxu0 %v2353
      %v2355 = vpop.f32.mrb[0].mxu0
      %v2356 = vadd.f32 %v2275, %v2355
      %v2357 = vpop.f32.mrb[0].mxu0
      %2358 = vdwg.mxu0
      %2359 = vmatprep.subr.mxu0 0.0
      %v2360 = vand.u32 %v1254, 4294901760
      %v2361 = vsub.f32 %v1254, %v2360
      %2362 = vmatpush1.msra.mxu0 %v2361
      %2363 = vmatprep.subr.mxu0 0.0
      %v2364 = vand.u32 %v1255, 4294901760
      %v2365 = vsub.f32 %v1255, %v2364
      %2366 = vmatpush1.msra.mxu0 %v2365
      %2367 = vmatprep.subr.mxu0 0.0
      %2368 = vmatpush1.msra.mxu0 0.0
      %2369 = vmatprep.subr.mxu0 0.0
      %2370 = vmatpush1.msra.mxu0 0.0
      %2371 = vmatprep.subr.mxu0 0.0
      %2372 = vmatpush1.msra.mxu0 0.0
      %2373 = vmatprep.subr.mxu0 0.0
      %2374 = vmatpush1.msra.mxu0 0.0
      %2375 = vmatprep.subr.mxu0 0.0
      %2376 = vmatpush1.msra.mxu0 0.0
      %2377 = vmatprep.subr.mxu0 0.0
      %2378 = vmatpush1.msra.mxu0 0.0
      %2379 = vmatprep.subr.mxu0 0.0
      %2380 = vmatpush1.msra.mxu0 0.0
      %2381 = vmatprep.subr.mxu0 0.0
      %2382 = vmatpush1.msra.mxu0 0.0
      %2383 = vmatprep.subr.mxu0 0.0
      %2384 = vmatpush1.msra.mxu0 0.0
      %2385 = vmatprep.subr.mxu0 0.0
      %2386 = vmatpush1.msra.mxu0 0.0
      %2387 = vmatprep.subr.mxu0 0.0
      %2388 = vmatpush1.msra.mxu0 0.0
      %2389 = vmatprep.subr.mxu0 0.0
      %2390 = vmatpush1.msra.mxu0 0.0
      %2391 = vmatprep.subr.mxu0 0.0
      %2392 = vmatpush1.msra.mxu0 0.0
      %2393 = vmatprep.subr.mxu0 0.0
      %2394 = vmatpush1.msra.mxu0 0.0
      %2395 = vmatprep.subr.mxu0 0.0
      %2396 = vmatpush1.msra.mxu0 0.0
      %2397 = vmatprep.subr.mxu0 0.0
      %2398 = vmatpush1.msra.mxu0 0.0
      %2399 = vmatprep.subr.mxu0 0.0
      %2400 = vmatpush1.msra.mxu0 0.0
      %2401 = vmatprep.subr.mxu0 0.0
      %2402 = vmatpush1.msra.mxu0 0.0
      %2403 = vmatprep.subr.mxu0 0.0
      %2404 = vmatpush1.msra.mxu0 0.0
      %2405 = vmatprep.subr.mxu0 0.0
      %2406 = vmatpush1.msra.mxu0 0.0
      %2407 = vmatprep.subr.mxu0 0.0
      %2408 = vmatpush1.msra.mxu0 0.0
      %2409 = vmatprep.subr.mxu0 0.0
      %2410 = vmatpush1.msra.mxu0 0.0
      %2411 = vmatprep.subr.mxu0 0.0
      %2412 = vmatpush1.msra.mxu0 0.0
      %2413 = vmatprep.subr.mxu0 0.0
      %2414 = vmatpush1.msra.mxu0 0.0
      %2415 = vmatprep.subr.mxu0 0.0
      %2416 = vmatpush1.msra.mxu0 0.0
      %2417 = vmatprep.subr.mxu0 0.0
      %2418 = vmatpush1.msra.mxu0 0.0
      %2419 = vmatprep.subr.mxu0 0.0
      %2420 = vmatpush1.msra.mxu0 0.0
      %2421 = vmatprep.subr.mxu0 0.0
      %2422 = vmatpush1.msra.mxu0 0.0
      %2423 = vmatprep.subr.mxu0 0.0
      %2424 = vmatpush1.msra.mxu0 0.0
      %2425 = vmatprep.subr.mxu0 0.0
      %2426 = vmatpush1.msra.mxu0 0.0
      %2427 = vmatprep.mubr.f32.mxu0 0.0
      %v2428 = vand.u32 %v2199, 4294901760
      %v2429 = vsub.f32 %v2199, %v2428
      %2430 = vmatmul.mubr.f32.gmra.mrb[0].mxu0 %v2429
      %v2431 = vpop.f32.mrb[0].mxu0
      %v2432 = vadd.f32 %v2356, %v2431
      %v2433 = vpop.f32.mrb[0].mxu0
      %2434 = vdwg.mxu0
      %2435 = vmatprep.subr.mxu0 0.0
      %v2436 = vand.u32 %v1254, 4294901760
      %2437 = vmatpush1.msra.mxu0 %v2436
      %2438 = vmatprep.subr.mxu0 0.0
      %v2439 = vand.u32 %v1255, 4294901760
      %2440 = vmatpush1.msra.mxu0 %v2439
      %2441 = vmatprep.subr.mxu0 0.0
      %2442 = vmatpush1.msra.mxu0 0.0
      %2443 = vmatprep.subr.mxu0 0.0
      %2444 = vmatpush1.msra.mxu0 0.0
      %2445 = vmatprep.subr.mxu0 0.0
      %2446 = vmatpush1.msra.mxu0 0.0
      %2447 = vmatprep.subr.mxu0 0.0
      %2448 = vmatpush1.msra.mxu0 0.0
      %2449 = vmatprep.subr.mxu0 0.0
      %2450 = vmatpush1.msra.mxu0 0.0
      %2451 = vmatprep.subr.mxu0 0.0
      %2452 = vmatpush1.msra.mxu0 0.0
      %2453 = vmatprep.subr.mxu0 0.0
      %2454 = vmatpush1.msra.mxu0 0.0
      %2455 = vmatprep.subr.mxu0 0.0
      %2456 = vmatpush1.msra.mxu0 0.0
      %2457 = vmatprep.subr.mxu0 0.0
      %2458 = vmatpush1.msra.mxu0 0.0
      %2459 = vmatprep.subr.mxu0 0.0
      %2460 = vmatpush1.msra.mxu0 0.0
      %2461 = vmatprep.subr.mxu0 0.0
      %2462 = vmatpush1.msra.mxu0 0.0
      %2463 = vmatprep.subr.mxu0 0.0
      %2464 = vmatpush1.msra.mxu0 0.0
      %2465 = vmatprep.subr.mxu0 0.0
      %2466 = vmatpush1.msra.mxu0 0.0
      %2467 = vmatprep.subr.mxu0 0.0
      %2468 = vmatpush1.msra.mxu0 0.0
      %2469 = vmatprep.subr.mxu0 0.0
      %2470 = vmatpush1.msra.mxu0 0.0
      %2471 = vmatprep.subr.mxu0 0.0
      %2472 = vmatpush1.msra.mxu0 0.0
      %2473 = vmatprep.subr.mxu0 0.0
      %2474 = vmatpush1.msra.mxu0 0.0
      %2475 = vmatprep.subr.mxu0 0.0
      %2476 = vmatpush1.msra.mxu0 0.0
      %2477 = vmatprep.subr.mxu0 0.0
      %2478 = vmatpush1.msra.mxu0 0.0
      %2479 = vmatprep.subr.mxu0 0.0
      %2480 = vmatpush1.msra.mxu0 0.0
      %2481 = vmatprep.subr.mxu0 0.0
      %2482 = vmatpush1.msra.mxu0 0.0
      %2483 = vmatprep.subr.mxu0 0.0
      %2484 = vmatpush1.msra.mxu0 0.0
      %2485 = vmatprep.subr.mxu0 0.0
      %2486 = vmatpush1.msra.mxu0 0.0
      %2487 = vmatprep.subr.mxu0 0.0
      %2488 = vmatpush1.msra.mxu0 0.0
      %2489 = vmatprep.subr.mxu0 0.0
      %2490 = vmatpush1.msra.mxu0 0.0
      %2491 = vmatprep.subr.mxu0 0.0
      %2492 = vmatpush1.msra.mxu0 0.0
      %2493 = vmatprep.subr.mxu0 0.0
      %2494 = vmatpush1.msra.mxu0 0.0
      %2495 = vmatprep.subr.mxu0 0.0
      %2496 = vmatpush1.msra.mxu0 0.0
      %2497 = vmatprep.subr.mxu0 0.0
      %2498 = vmatpush1.msra.mxu0 0.0
      %2499 = vmatprep.subr.mxu0 0.0
      %2500 = vmatpush1.msra.mxu0 0.0
      %2501 = vmatprep.mubr.f32.mxu0 0.0
      %v2502 = vand.u32 %v2199, 4294901760
      %v2503 = vsub.f32 %v2199, %v2502
      %v2504 = vand.u32 %v2503, 4294901760
      %2505 = vmatmul.mubr.f32.gmra.mrb[0].mxu0 %v2504
      %v2506 = vpop.f32.mrb[0].mxu0
      %v2507 = vadd.f32 %v2432, %v2506
      %v2508 = vpop.f32.mrb[0].mxu0
      %2509 = vdwg.mxu0
      %2510 = vmatprep.subr.mxu0 0.0
      %v2511 = vand.u32 %v1254, 4294901760
      %v2512 = vsub.f32 %v1254, %v2511
      %v2513 = vand.u32 %v2512, 4294901760
      %2514 = vmatpush1.msra.mxu0 %v2513
      %2515 = vmatprep.subr.mxu0 0.0
      %v2516 = vand.u32 %v1255, 4294901760
      %v2517 = vsub.f32 %v1255, %v2516
      %v2518 = vand.u32 %v2517, 4294901760
      %2519 = vmatpush1.msra.mxu0 %v2518
      %2520 = vmatprep.subr.mxu0 0.0
      %2521 = vmatpush1.msra.mxu0 0.0
      %2522 = vmatprep.subr.mxu0 0.0
      %2523 = vmatpush1.msra.mxu0 0.0
      %2524 = vmatprep.subr.mxu0 0.0
      %2525 = vmatpush1.msra.mxu0 0.0
      %2526 = vmatprep.subr.mxu0 0.0
      %2527 = vmatpush1.msra.mxu0 0.0
      %2528 = vmatprep.subr.mxu0 0.0
      %2529 = vmatpush1.msra.mxu0 0.0
      %2530 = vmatprep.subr.mxu0 0.0
      %2531 = vmatpush1.msra.mxu0 0.0
      %2532 = vmatprep.subr.mxu0 0.0
      %2533 = vmatpush1.msra.mxu0 0.0
      %2534 = vmatprep.subr.mxu0 0.0
      %2535 = vmatpush1.msra.mxu0 0.0
      %2536 = vmatprep.subr.mxu0 0.0
      %2537 = vmatpush1.msra.mxu0 0.0
      %2538 = vmatprep.subr.mxu0 0.0
      %2539 = vmatpush1.msra.mxu0 0.0
      %2540 = vmatprep.subr.mxu0 0.0
      %2541 = vmatpush1.msra.mxu0 0.0
      %2542 = vmatprep.subr.mxu0 0.0
      %2543 = vmatpush1.msra.mxu0 0.0
      %2544 = vmatprep.subr.mxu0 0.0
      %2545 = vmatpush1.msra.mxu0 0.0
      %2546 = vmatprep.subr.mxu0 0.0
      %2547 = vmatpush1.msra.mxu0 0.0
      %2548 = vmatprep.subr.mxu0 0.0
      %2549 = vmatpush1.msra.mxu0 0.0
      %2550 = vmatprep.subr.mxu0 0.0
      %2551 = vmatpush1.msra.mxu0 0.0
      %2552 = vmatprep.subr.mxu0 0.0
      %2553 = vmatpush1.msra.mxu0 0.0
      %2554 = vmatprep.subr.mxu0 0.0
      %2555 = vmatpush1.msra.mxu0 0.0
      %2556 = vmatprep.subr.mxu0 0.0
      %2557 = vmatpush1.msra.mxu0 0.0
      %2558 = vmatprep.subr.mxu0 0.0
      %2559 = vmatpush1.msra.mxu0 0.0
      %2560 = vmatprep.subr.mxu0 0.0
      %2561 = vmatpush1.msra.mxu0 0.0
      %2562 = vmatprep.subr.mxu0 0.0
      %2563 = vmatpush1.msra.mxu0 0.0
      %2564 = vmatprep.subr.mxu0 0.0
      %2565 = vmatpush1.msra.mxu0 0.0
      %2566 = vmatprep.subr.mxu0 0.0
      %2567 = vmatpush1.msra.mxu0 0.0
      %2568 = vmatprep.subr.mxu0 0.0
      %2569 = vmatpush1.msra.mxu0 0.0
      %2570 = vmatprep.subr.mxu0 0.0
      %2571 = vmatpush1.msra.mxu0 0.0
      %2572 = vmatprep.subr.mxu0 0.0
      %2573 = vmatpush1.msra.mxu0 0.0
      %2574 = vmatprep.subr.mxu0 0.0
      %2575 = vmatpush1.msra.mxu0 0.0
      %2576 = vmatprep.subr.mxu0 0.0
      %2577 = vmatpush1.msra.mxu0 0.0
      %2578 = vmatprep.subr.mxu0 0.0
      %2579 = vmatpush1.msra.mxu0 0.0
      %2580 = vmatprep.mubr.f32.mxu0 0.0
      %v2581 = vand.u32 %v2199, 4294901760
      %2582 = vmatmul.mubr.f32.gmra.mrb[0].mxu0 %v2581
      %v2583 = vpop.f32.mrb[0].mxu0
      %v2584 = vadd.f32 %v2507, %v2583
      %v2585 = vpop.f32.mrb[0].mxu0
      %2586 = vdwg.mxu0
      %2587 = vmatprep.subr.mxu0 0.0
      %v2588 = vand.u32 %v1254, 4294901760
      %2589 = vmatpush1.msra.mxu0 %v2588
      %2590 = vmatprep.subr.mxu0 0.0
      %v2591 = vand.u32 %v1255, 4294901760
      %2592 = vmatpush1.msra.mxu0 %v2591
      %2593 = vmatprep.subr.mxu0 0.0
      %2594 = vmatpush1.msra.mxu0 0.0
      %2595 = vmatprep.subr.mxu0 0.0
      %2596 = vmatpush1.msra.mxu0 0.0
      %2597 = vmatprep.subr.mxu0 0.0
      %2598 = vmatpush1.msra.mxu0 0.0
      %2599 = vmatprep.subr.mxu0 0.0
      %2600 = vmatpush1.msra.mxu0 0.0
      %2601 = vmatprep.subr.mxu0 0.0
      %2602 = vmatpush1.msra.mxu0 0.0
      %2603 = vmatprep.subr.mxu0 0.0
      %2604 = vmatpush1.msra.mxu0 0.0
      %2605 = vmatprep.subr.mxu0 0.0
      %2606 = vmatpush1.msra.mxu0 0.0
      %2607 = vmatprep.subr.mxu0 0.0
      %2608 = vmatpush1.msra.mxu0 0.0
      %2609 = vmatprep.subr.mxu0 0.0
      %2610 = vmatpush1.msra.mxu0 0.0
      %2611 = vmatprep.subr.mxu0 0.0
      %2612 = vmatpush1.msra.mxu0 0.0
      %2613 = vmatprep.subr.mxu0 0.0
      %2614 = vmatpush1.msra.mxu0 0.0
      %2615 = vmatprep.subr.mxu0 0.0
      %2616 = vmatpush1.msra.mxu0 0.0
      %2617 = vmatprep.subr.mxu0 0.0
      %2618 = vmatpush1.msra.mxu0 0.0
      %2619 = vmatprep.subr.mxu0 0.0
      %2620 = vmatpush1.msra.mxu0 0.0
      %2621 = vmatprep.subr.mxu0 0.0
      %2622 = vmatpush1.msra.mxu0 0.0
      %2623 = vmatprep.subr.mxu0 0.0
      %2624 = vmatpush1.msra.mxu0 0.0
      %2625 = vmatprep.subr.mxu0 0.0
      %2626 = vmatpush1.msra.mxu0 0.0
      %2627 = vmatprep.subr.mxu0 0.0
      %2628 = vmatpush1.msra.mxu0 0.0
      %2629 = vmatprep.subr.mxu0 0.0
      %2630 = vmatpush1.msra.mxu0 0.0
      %2631 = vmatprep.subr.mxu0 0.0
      %2632 = vmatpush1.msra.mxu0 0.0
      %2633 = vmatprep.subr.mxu0 0.0
      %2634 = vmatpush1.msra.mxu0 0.0
      %2635 = vmatprep.subr.mxu0 0.0
      %2636 = vmatpush1.msra.mxu0 0.0
      %2637 = vmatprep.subr.mxu0 0.0
      %2638 = vmatpush1.msra.mxu0 0.0
      %2639 = vmatprep.subr.mxu0 0.0
      %2640 = vmatpush1.msra.mxu0 0.0
      %2641 = vmatprep.subr.mxu0 0.0
      %2642 = vmatpush1.msra.mxu0 0.0
      %2643 = vmatprep.subr.mxu0 0.0
      %2644 = vmatpush1.msra.mxu0 0.0
      %2645 = vmatprep.subr.mxu0 0.0
      %2646 = vmatpush1.msra.mxu0 0.0
      %2647 = vmatprep.subr.mxu0 0.0
      %2648 = vmatpush1.msra.mxu0 0.0
      %2649 = vmatprep.subr.mxu0 0.0
      %2650 = vmatpush1.msra.mxu0 0.0
      %2651 = vmatprep.subr.mxu0 0.0
      %2652 = vmatpush1.msra.mxu0 0.0
      %2653 = vmatprep.mubr.f32.mxu0 0.0
      %v2654 = vand.u32 %v2199, 4294901760
      %2655 = vmatmul.mubr.f32.gmra.mrb[0].mxu0 %v2654
      %v2656 = vpop.f32.mrb[0].mxu0
      %v2657 = vadd.f32 %v2584, %v2656
      %v2658 = vpop.f32.mrb[0].mxu0
      %2659 = vdwg.mxu0
      %2661 = vrot.lane.b32.xlu0 %v2657, 16
      %v2662 = vpop.permute.xlu0 %2661
      %vm2664 = vcmask 195712
      %2665 = vst.msk [vmem:[%s330] sm:$0xff] %vm2664, %v2662
      %2667 = vrot.lane.b32.xlu0 %v1252, 110
      %v2668 = vpop.permute.xlu0 %2667
      %v2670 = vadd.f32 %v1251, %v2668
      %v2671 = vadd.f32 %v1252, %v2668
      %2674 = vrot.lane.b32.xlu0 %v2670, 1
      %v2675 = vpop.permute.xlu0 %2674
      %2676 = vrot.lane.b32.xlu0 %v2671, 1
      %v2677 = vpop.permute.xlu0 %2676
      %vm2678 = vcmask 7168
      %v2679 = vsel %vm2678, %v2675, %v2677
      %v2680 = vsel %vm1264, %v2679, 0
      %2682 = vmatprep.subr.mxu0 0.0
      %v2683 = vand.u32 %v1254, 4294901760
      %2684 = vmatpush1.msra.mxu0 %v2683
      %2685 = vmatprep.subr.mxu0 0.0
      %v2686 = vand.u32 %v1255, 4294901760
      %2687 = vmatpush1.msra.mxu0 %v2686
      %2688 = vmatprep.subr.mxu0 0.0
      %2689 = vmatpush1.msra.mxu0 0.0
      %2690 = vmatprep.subr.mxu0 0.0
      %2691 = vmatpush1.msra.mxu0 0.0
      %2692 = vmatprep.subr.mxu0 0.0
      %2693 = vmatpush1.msra.mxu0 0.0
      %2694 = vmatprep.subr.mxu0 0.0
      %2695 = vmatpush1.msra.mxu0 0.0
      %2696 = vmatprep.subr.mxu0 0.0
      %2697 = vmatpush1.msra.mxu0 0.0
      %2698 = vmatprep.subr.mxu0 0.0
      %2699 = vmatpush1.msra.mxu0 0.0
      %2700 = vmatprep.subr.mxu0 0.0
      %2701 = vmatpush1.msra.mxu0 0.0
      %2702 = vmatprep.subr.mxu0 0.0
      %2703 = vmatpush1.msra.mxu0 0.0
      %2704 = vmatprep.subr.mxu0 0.0
      %2705 = vmatpush1.msra.mxu0 0.0
      %2706 = vmatprep.subr.mxu0 0.0
      %2707 = vmatpush1.msra.mxu0 0.0
      %2708 = vmatprep.subr.mxu0 0.0
      %2709 = vmatpush1.msra.mxu0 0.0
      %2710 = vmatprep.subr.mxu0 0.0
      %2711 = vmatpush1.msra.mxu0 0.0
      %2712 = vmatprep.subr.mxu0 0.0
      %2713 = vmatpush1.msra.mxu0 0.0
      %2714 = vmatprep.subr.mxu0 0.0
      %2715 = vmatpush1.msra.mxu0 0.0
      %2716 = vmatprep.subr.mxu0 0.0
      %2717 = vmatpush1.msra.mxu0 0.0
      %2718 = vmatprep.subr.mxu0 0.0
      %2719 = vmatpush1.msra.mxu0 0.0
      %2720 = vmatprep.subr.mxu0 0.0
      %2721 = vmatpush1.msra.mxu0 0.0
      %2722 = vmatprep.subr.mxu0 0.0
      %2723 = vmatpush1.msra.mxu0 0.0
      %2724 = vmatprep.subr.mxu0 0.0
      %2725 = vmatpush1.msra.mxu0 0.0
      %2726 = vmatprep.subr.mxu0 0.0
      %2727 = vmatpush1.msra.mxu0 0.0
      %2728 = vmatprep.subr.mxu0 0.0
      %2729 = vmatpush1.msra.mxu0 0.0
      %2730 = vmatprep.subr.mxu0 0.0
      %2731 = vmatpush1.msra.mxu0 0.0
      %2732 = vmatprep.subr.mxu0 0.0
      %2733 = vmatpush1.msra.mxu0 0.0
      %2734 = vmatprep.subr.mxu0 0.0
      %2735 = vmatpush1.msra.mxu0 0.0
      %2736 = vmatprep.subr.mxu0 0.0
      %2737 = vmatpush1.msra.mxu0 0.0
      %2738 = vmatprep.subr.mxu0 0.0
      %2739 = vmatpush1.msra.mxu0 0.0
      %2740 = vmatprep.subr.mxu0 0.0
      %2741 = vmatpush1.msra.mxu0 0.0
      %2742 = vmatprep.subr.mxu0 0.0
      %2743 = vmatpush1.msra.mxu0 0.0
      %2744 = vmatprep.subr.mxu0 0.0
      %2745 = vmatpush1.msra.mxu0 0.0
      %2746 = vmatprep.subr.mxu0 0.0
      %2747 = vmatpush1.msra.mxu0 0.0
      %2748 = vmatprep.mubr.f32.mxu0 0.0
      %v2749 = vand.u32 %v2680, 4294901760
      %v2750 = vsub.f32 %v2680, %v2749
      %v2751 = vand.u32 %v2750, 4294901760
      %v2752 = vsub.f32 %v2750, %v2751
      %v2753 = vand.u32 %v2752, 4294901760
      %2754 = vmatmul.mubr.f32.gmra.mrb[0].mxu0 %v2753
      %v2755 = vpop.f32.mrb[0].mxu0
      %v2756 = vadd.f32 0.0, %v2755
      %v2757 = vpop.f32.mrb[0].mxu0
      %2758 = vdwg.mxu0
      %2759 = vmatprep.subr.mxu0 0.0
      %v2760 = vand.u32 %v1254, 4294901760
      %v2761 = vsub.f32 %v1254, %v2760
      %v2762 = vand.u32 %v2761, 4294901760
      %v2763 = vsub.f32 %v2761, %v2762
      %v2764 = vand.u32 %v2763, 4294901760
      %2765 = vmatpush1.msra.mxu0 %v2764
      %2766 = vmatprep.subr.mxu0 0.0
      %v2767 = vand.u32 %v1255, 4294901760
      %v2768 = vsub.f32 %v1255, %v2767
      %v2769 = vand.u32 %v2768, 4294901760
      %v2770 = vsub.f32 %v2768, %v2769
      %v2771 = vand.u32 %v2770, 4294901760
      %2772 = vmatpush1.msra.mxu0 %v2771
      %2773 = vmatprep.subr.mxu0 0.0
      %2774 = vmatpush1.msra.mxu0 0.0
      %2775 = vmatprep.subr.mxu0 0.0
      %2776 = vmatpush1.msra.mxu0 0.0
      %2777 = vmatprep.subr.mxu0 0.0
      %2778 = vmatpush1.msra.mxu0 0.0
      %2779 = vmatprep.subr.mxu0 0.0
      %2780 = vmatpush1.msra.mxu0 0.0
      %2781 = vmatprep.subr.mxu0 0.0
      %2782 = vmatpush1.msra.mxu0 0.0
      %2783 = vmatprep.subr.mxu0 0.0
      %2784 = vmatpush1.msra.mxu0 0.0
      %2785 = vmatprep.subr.mxu0 0.0
      %2786 = vmatpush1.msra.mxu0 0.0
      %2787 = vmatprep.subr.mxu0 0.0
      %2788 = vmatpush1.msra.mxu0 0.0
      %2789 = vmatprep.subr.mxu0 0.0
      %2790 = vmatpush1.msra.mxu0 0.0
      %2791 = vmatprep.subr.mxu0 0.0
      %2792 = vmatpush1.msra.mxu0 0.0
      %2793 = vmatprep.subr.mxu0 0.0
      %2794 = vmatpush1.msra.mxu0 0.0
      %2795 = vmatprep.subr.mxu0 0.0
      %2796 = vmatpush1.msra.mxu0 0.0
      %2797 = vmatprep.subr.mxu0 0.0
      %2798 = vmatpush1.msra.mxu0 0.0
      %2799 = vmatprep.subr.mxu0 0.0
      %2800 = vmatpush1.msra.mxu0 0.0
      %2801 = vmatprep.subr.mxu0 0.0
      %2802 = vmatpush1.msra.mxu0 0.0
      %2803 = vmatprep.subr.mxu0 0.0
      %2804 = vmatpush1.msra.mxu0 0.0
      %2805 = vmatprep.subr.mxu0 0.0
      %2806 = vmatpush1.msra.mxu0 0.0
      %2807 = vmatprep.subr.mxu0 0.0
      %2808 = vmatpush1.msra.mxu0 0.0
      %2809 = vmatprep.subr.mxu0 0.0
      %2810 = vmatpush1.msra.mxu0 0.0
      %2811 = vmatprep.subr.mxu0 0.0
      %2812 = vmatpush1.msra.mxu0 0.0
      %2813 = vmatprep.subr.mxu0 0.0
      %2814 = vmatpush1.msra.mxu0 0.0
      %2815 = vmatprep.subr.mxu0 0.0
      %2816 = vmatpush1.msra.mxu0 0.0
      %2817 = vmatprep.subr.mxu0 0.0
      %2818 = vmatpush1.msra.mxu0 0.0
      %2819 = vmatprep.subr.mxu0 0.0
      %2820 = vmatpush1.msra.mxu0 0.0
      %2821 = vmatprep.subr.mxu0 0.0
      %2822 = vmatpush1.msra.mxu0 0.0
      %2823 = vmatprep.subr.mxu0 0.0
      %2824 = vmatpush1.msra.mxu0 0.0
      %2825 = vmatprep.subr.mxu0 0.0
      %2826 = vmatpush1.msra.mxu0 0.0
      %2827 = vmatprep.subr.mxu0 0.0
      %2828 = vmatpush1.msra.mxu0 0.0
      %2829 = vmatprep.subr.mxu0 0.0
      %2830 = vmatpush1.msra.mxu0 0.0
      %2831 = vmatprep.subr.mxu0 0.0
      %2832 = vmatpush1.msra.mxu0 0.0
      %2833 = vmatprep.mubr.f32.mxu0 0.0
      %v2834 = vand.u32 %v2680, 4294901760
      %2835 = vmatmul.mubr.f32.gmra.mrb[0].mxu0 %v2834
      %v2836 = vpop.f32.mrb[0].mxu0
      %v2837 = vadd.f32 %v2756, %v2836
      %v2838 = vpop.f32.mrb[0].mxu0
      %2839 = vdwg.mxu0
      %2840 = vmatprep.subr.mxu0 0.0
      %v2841 = vand.u32 %v1254, 4294901760
      %v2842 = vsub.f32 %v1254, %v2841
      %2843 = vmatpush1.msra.mxu0 %v2842
      %2844 = vmatprep.subr.mxu0 0.0
      %v2845 = vand.u32 %v1255, 4294901760
      %v2846 = vsub.f32 %v1255, %v2845
      %2847 = vmatpush1.msra.mxu0 %v2846
      %2848 = vmatprep.subr.mxu0 0.0
      %2849 = vmatpush1.msra.mxu0 0.0
      %2850 = vmatprep.subr.mxu0 0.0
      %2851 = vmatpush1.msra.mxu0 0.0
      %2852 = vmatprep.subr.mxu0 0.0
      %2853 = vmatpush1.msra.mxu0 0.0
      %2854 = vmatprep.subr.mxu0 0.0
      %2855 = vmatpush1.msra.mxu0 0.0
      %2856 = vmatprep.subr.mxu0 0.0
      %2857 = vmatpush1.msra.mxu0 0.0
      %2858 = vmatprep.subr.mxu0 0.0
      %2859 = vmatpush1.msra.mxu0 0.0
      %2860 = vmatprep.subr.mxu0 0.0
      %2861 = vmatpush1.msra.mxu0 0.0
      %2862 = vmatprep.subr.mxu0 0.0
      %2863 = vmatpush1.msra.mxu0 0.0
      %2864 = vmatprep.subr.mxu0 0.0
      %2865 = vmatpush1.msra.mxu0 0.0
      %2866 = vmatprep.subr.mxu0 0.0
      %2867 = vmatpush1.msra.mxu0 0.0
      %2868 = vmatprep.subr.mxu0 0.0
      %2869 = vmatpush1.msra.mxu0 0.0
      %2870 = vmatprep.subr.mxu0 0.0
      %2871 = vmatpush1.msra.mxu0 0.0
      %2872 = vmatprep.subr.mxu0 0.0
      %2873 = vmatpush1.msra.mxu0 0.0
      %2874 = vmatprep.subr.mxu0 0.0
      %2875 = vmatpush1.msra.mxu0 0.0
      %2876 = vmatprep.subr.mxu0 0.0
      %2877 = vmatpush1.msra.mxu0 0.0
      %2878 = vmatprep.subr.mxu0 0.0
      %2879 = vmatpush1.msra.mxu0 0.0
      %2880 = vmatprep.subr.mxu0 0.0
      %2881 = vmatpush1.msra.mxu0 0.0
      %2882 = vmatprep.subr.mxu0 0.0
      %2883 = vmatpush1.msra.mxu0 0.0
      %2884 = vmatprep.subr.mxu0 0.0
      %2885 = vmatpush1.msra.mxu0 0.0
      %2886 = vmatprep.subr.mxu0 0.0
      %2887 = vmatpush1.msra.mxu0 0.0
      %2888 = vmatprep.subr.mxu0 0.0
      %2889 = vmatpush1.msra.mxu0 0.0
      %2890 = vmatprep.subr.mxu0 0.0
      %2891 = vmatpush1.msra.mxu0 0.0
      %2892 = vmatprep.subr.mxu0 0.0
      %2893 = vmatpush1.msra.mxu0 0.0
      %2894 = vmatprep.subr.mxu0 0.0
      %2895 = vmatpush1.msra.mxu0 0.0
      %2896 = vmatprep.subr.mxu0 0.0
      %2897 = vmatpush1.msra.mxu0 0.0
      %2898 = vmatprep.subr.mxu0 0.0
      %2899 = vmatpush1.msra.mxu0 0.0
      %2900 = vmatprep.subr.mxu0 0.0
      %2901 = vmatpush1.msra.mxu0 0.0
      %2902 = vmatprep.subr.mxu0 0.0
      %2903 = vmatpush1.msra.mxu0 0.0
      %2904 = vmatprep.subr.mxu0 0.0
      %2905 = vmatpush1.msra.mxu0 0.0
      %2906 = vmatprep.subr.mxu0 0.0
      %2907 = vmatpush1.msra.mxu0 0.0
      %2908 = vmatprep.mubr.f32.mxu0 0.0
      %v2909 = vand.u32 %v2680, 4294901760
      %v2910 = vsub.f32 %v2680, %v2909
      %2911 = vmatmul.mubr.f32.gmra.mrb[0].mxu0 %v2910
      %v2912 = vpop.f32.mrb[0].mxu0
      %v2913 = vadd.f32 %v2837, %v2912
      %v2914 = vpop.f32.mrb[0].mxu0
      %2915 = vdwg.mxu0
      %2916 = vmatprep.subr.mxu0 0.0
      %v2917 = vand.u32 %v1254, 4294901760
      %2918 = vmatpush1.msra.mxu0 %v2917
      %2919 = vmatprep.subr.mxu0 0.0
      %v2920 = vand.u32 %v1255, 4294901760
      %2921 = vmatpush1.msra.mxu0 %v2920
      %2922 = vmatprep.subr.mxu0 0.0
      %2923 = vmatpush1.msra.mxu0 0.0
      %2924 = vmatprep.subr.mxu0 0.0
      %2925 = vmatpush1.msra.mxu0 0.0
      %2926 = vmatprep.subr.mxu0 0.0
      %2927 = vmatpush1.msra.mxu0 0.0
      %2928 = vmatprep.subr.mxu0 0.0
      %2929 = vmatpush1.msra.mxu0 0.0
      %2930 = vmatprep.subr.mxu0 0.0
      %2931 = vmatpush1.msra.mxu0 0.0
      %2932 = vmatprep.subr.mxu0 0.0
      %2933 = vmatpush1.msra.mxu0 0.0
      %2934 = vmatprep.subr.mxu0 0.0
      %2935 = vmatpush1.msra.mxu0 0.0
      %2936 = vmatprep.subr.mxu0 0.0
      %2937 = vmatpush1.msra.mxu0 0.0
      %2938 = vmatprep.subr.mxu0 0.0
      %2939 = vmatpush1.msra.mxu0 0.0
      %2940 = vmatprep.subr.mxu0 0.0
      %2941 = vmatpush1.msra.mxu0 0.0
      %2942 = vmatprep.subr.mxu0 0.0
      %2943 = vmatpush1.msra.mxu0 0.0
      %2944 = vmatprep.subr.mxu0 0.0
      %2945 = vmatpush1.msra.mxu0 0.0
      %2946 = vmatprep.subr.mxu0 0.0
      %2947 = vmatpush1.msra.mxu0 0.0
      %2948 = vmatprep.subr.mxu0 0.0
      %2949 = vmatpush1.msra.mxu0 0.0
      %2950 = vmatprep.subr.mxu0 0.0
      %2951 = vmatpush1.msra.mxu0 0.0
      %2952 = vmatprep.subr.mxu0 0.0
      %2953 = vmatpush1.msra.mxu0 0.0
      %2954 = vmatprep.subr.mxu0 0.0
      %2955 = vmatpush1.msra.mxu0 0.0
      %2956 = vmatprep.subr.mxu0 0.0
      %2957 = vmatpush1.msra.mxu0 0.0
      %2958 = vmatprep.subr.mxu0 0.0
      %2959 = vmatpush1.msra.mxu0 0.0
      %2960 = vmatprep.subr.mxu0 0.0
      %2961 = vmatpush1.msra.mxu0 0.0
      %2962 = vmatprep.subr.mxu0 0.0
      %2963 = vmatpush1.msra.mxu0 0.0
      %2964 = vmatprep.subr.mxu0 0.0
      %2965 = vmatpush1.msra.mxu0 0.0
      %2966 = vmatprep.subr.mxu0 0.0
      %2967 = vmatpush1.msra.mxu0 0.0
      %2968 = vmatprep.subr.mxu0 0.0
      %2969 = vmatpush1.msra.mxu0 0.0
      %2970 = vmatprep.subr.mxu0 0.0
      %2971 = vmatpush1.msra.mxu0 0.0
      %2972 = vmatprep.subr.mxu0 0.0
      %2973 = vmatpush1.msra.mxu0 0.0
      %2974 = vmatprep.subr.mxu0 0.0
      %2975 = vmatpush1.msra.mxu0 0.0
      %2976 = vmatprep.subr.mxu0 0.0
      %2977 = vmatpush1.msra.mxu0 0.0
      %2978 = vmatprep.subr.mxu0 0.0
      %2979 = vmatpush1.msra.mxu0 0.0
      %2980 = vmatprep.subr.mxu0 0.0
      %2981 = vmatpush1.msra.mxu0 0.0
      %2982 = vmatprep.mubr.f32.mxu0 0.0
      %v2983 = vand.u32 %v2680, 4294901760
      %v2984 = vsub.f32 %v2680, %v2983
      %v2985 = vand.u32 %v2984, 4294901760
      %2986 = vmatmul.mubr.f32.gmra.mrb[0].mxu0 %v2985
      %v2987 = vpop.f32.mrb[0].mxu0
      %v2988 = vadd.f32 %v2913, %v2987
      %v2989 = vpop.f32.mrb[0].mxu0
      %2990 = vdwg.mxu0
      %2991 = vmatprep.subr.mxu0 0.0
      %v2992 = vand.u32 %v1254, 4294901760
      %v2993 = vsub.f32 %v1254, %v2992
      %v2994 = vand.u32 %v2993, 4294901760
      %2995 = vmatpush1.msra.mxu0 %v2994
      %2996 = vmatprep.subr.mxu0 0.0
      %v2997 = vand.u32 %v1255, 4294901760
      %v2998 = vsub.f32 %v1255, %v2997
      %v2999 = vand.u32 %v2998, 4294901760
      %3000 = vmatpush1.msra.mxu0 %v2999
      %3001 = vmatprep.subr.mxu0 0.0
      %3002 = vmatpush1.msra.mxu0 0.0
      %3003 = vmatprep.subr.mxu0 0.0
      %3004 = vmatpush1.msra.mxu0 0.0
      %3005 = vmatprep.subr.mxu0 0.0
      %3006 = vmatpush1.msra.mxu0 0.0
      %3007 = vmatprep.subr.mxu0 0.0
      %3008 = vmatpush1.msra.mxu0 0.0
      %3009 = vmatprep.subr.mxu0 0.0
      %3010 = vmatpush1.msra.mxu0 0.0
      %3011 = vmatprep.subr.mxu0 0.0
      %3012 = vmatpush1.msra.mxu0 0.0
      %3013 = vmatprep.subr.mxu0 0.0
      %3014 = vmatpush1.msra.mxu0 0.0
      %3015 = vmatprep.subr.mxu0 0.0
      %3016 = vmatpush1.msra.mxu0 0.0
      %3017 = vmatprep.subr.mxu0 0.0
      %3018 = vmatpush1.msra.mxu0 0.0
      %3019 = vmatprep.subr.mxu0 0.0
      %3020 = vmatpush1.msra.mxu0 0.0
      %3021 = vmatprep.subr.mxu0 0.0
      %3022 = vmatpush1.msra.mxu0 0.0
      %3023 = vmatprep.subr.mxu0 0.0
      %3024 = vmatpush1.msra.mxu0 0.0
      %3025 = vmatprep.subr.mxu0 0.0
      %3026 = vmatpush1.msra.mxu0 0.0
      %3027 = vmatprep.subr.mxu0 0.0
      %3028 = vmatpush1.msra.mxu0 0.0
      %3029 = vmatprep.subr.mxu0 0.0
      %3030 = vmatpush1.msra.mxu0 0.0
      %3031 = vmatprep.subr.mxu0 0.0
      %3032 = vmatpush1.msra.mxu0 0.0
      %3033 = vmatprep.subr.mxu0 0.0
      %3034 = vmatpush1.msra.mxu0 0.0
      %3035 = vmatprep.subr.mxu0 0.0
      %3036 = vmatpush1.msra.mxu0 0.0
      %3037 = vmatprep.subr.mxu0 0.0
      %3038 = vmatpush1.msra.mxu0 0.0
      %3039 = vmatprep.subr.mxu0 0.0
      %3040 = vmatpush1.msra.mxu0 0.0
      %3041 = vmatprep.subr.mxu0 0.0
      %3042 = vmatpush1.msra.mxu0 0.0
      %3043 = vmatprep.subr.mxu0 0.0
      %3044 = vmatpush1.msra.mxu0 0.0
      %3045 = vmatprep.subr.mxu0 0.0
      %3046 = vmatpush1.msra.mxu0 0.0
      %3047 = vmatprep.subr.mxu0 0.0
      %3048 = vmatpush1.msra.mxu0 0.0
      %3049 = vmatprep.subr.mxu0 0.0
      %3050 = vmatpush1.msra.mxu0 0.0
      %3051 = vmatprep.subr.mxu0 0.0
      %3052 = vmatpush1.msra.mxu0 0.0
      %3053 = vmatprep.subr.mxu0 0.0
      %3054 = vmatpush1.msra.mxu0 0.0
      %3055 = vmatprep.subr.mxu0 0.0
      %3056 = vmatpush1.msra.mxu0 0.0
      %3057 = vmatprep.subr.mxu0 0.0
      %3058 = vmatpush1.msra.mxu0 0.0
      %3059 = vmatprep.subr.mxu0 0.0
      %3060 = vmatpush1.msra.mxu0 0.0
      %3061 = vmatprep.mubr.f32.mxu0 0.0
      %v3062 = vand.u32 %v2680, 4294901760
      %3063 = vmatmul.mubr.f32.gmra.mrb[0].mxu0 %v3062
      %v3064 = vpop.f32.mrb[0].mxu0
      %v3065 = vadd.f32 %v2988, %v3064
      %v3066 = vpop.f32.mrb[0].mxu0
      %3067 = vdwg.mxu0
      %3068 = vmatprep.subr.mxu0 0.0
      %v3069 = vand.u32 %v1254, 4294901760
      %3070 = vmatpush1.msra.mxu0 %v3069
      %3071 = vmatprep.subr.mxu0 0.0
      %v3072 = vand.u32 %v1255, 4294901760
      %3073 = vmatpush1.msra.mxu0 %v3072
      %3074 = vmatprep.subr.mxu0 0.0
      %3075 = vmatpush1.msra.mxu0 0.0
      %3076 = vmatprep.subr.mxu0 0.0
      %3077 = vmatpush1.msra.mxu0 0.0
      %3078 = vmatprep.subr.mxu0 0.0
      %3079 = vmatpush1.msra.mxu0 0.0
      %3080 = vmatprep.subr.mxu0 0.0
      %3081 = vmatpush1.msra.mxu0 0.0
      %3082 = vmatprep.subr.mxu0 0.0
      %3083 = vmatpush1.msra.mxu0 0.0
      %3084 = vmatprep.subr.mxu0 0.0
      %3085 = vmatpush1.msra.mxu0 0.0
      %3086 = vmatprep.subr.mxu0 0.0
      %3087 = vmatpush1.msra.mxu0 0.0
      %3088 = vmatprep.subr.mxu0 0.0
      %3089 = vmatpush1.msra.mxu0 0.0
      %3090 = vmatprep.subr.mxu0 0.0
      %3091 = vmatpush1.msra.mxu0 0.0
      %3092 = vmatprep.subr.mxu0 0.0
      %3093 = vmatpush1.msra.mxu0 0.0
      %3094 = vmatprep.subr.mxu0 0.0
      %3095 = vmatpush1.msra.mxu0 0.0
      %3096 = vmatprep.subr.mxu0 0.0
      %3097 = vmatpush1.msra.mxu0 0.0
      %3098 = vmatprep.subr.mxu0 0.0
      %3099 = vmatpush1.msra.mxu0 0.0
      %3100 = vmatprep.subr.mxu0 0.0
      %3101 = vmatpush1.msra.mxu0 0.0
      %3102 = vmatprep.subr.mxu0 0.0
      %3103 = vmatpush1.msra.mxu0 0.0
      %3104 = vmatprep.subr.mxu0 0.0
      %3105 = vmatpush1.msra.mxu0 0.0
      %3106 = vmatprep.subr.mxu0 0.0
      %3107 = vmatpush1.msra.mxu0 0.0
      %3108 = vmatprep.subr.mxu0 0.0
      %3109 = vmatpush1.msra.mxu0 0.0
      %3110 = vmatprep.subr.mxu0 0.0
      %3111 = vmatpush1.msra.mxu0 0.0
      %3112 = vmatprep.subr.mxu0 0.0
      %3113 = vmatpush1.msra.mxu0 0.0
      %3114 = vmatprep.subr.mxu0 0.0
      %3115 = vmatpush1.msra.mxu0 0.0
      %3116 = vmatprep.subr.mxu0 0.0
      %3117 = vmatpush1.msra.mxu0 0.0
      %3118 = vmatprep.subr.mxu0 0.0
      %3119 = vmatpush1.msra.mxu0 0.0
      %3120 = vmatprep.subr.mxu0 0.0
      %3121 = vmatpush1.msra.mxu0 0.0
      %3122 = vmatprep.subr.mxu0 0.0
      %3123 = vmatpush1.msra.mxu0 0.0
      %3124 = vmatprep.subr.mxu0 0.0
      %3125 = vmatpush1.msra.mxu0 0.0
      %3126 = vmatprep.subr.mxu0 0.0
      %3127 = vmatpush1.msra.mxu0 0.0
      %3128 = vmatprep.subr.mxu0 0.0
      %3129 = vmatpush1.msra.mxu0 0.0
      %3130 = vmatprep.subr.mxu0 0.0
      %3131 = vmatpush1.msra.mxu0 0.0
      %3132 = vmatprep.subr.mxu0 0.0
      %3133 = vmatpush1.msra.mxu0 0.0
      %3134 = vmatprep.mubr.f32.mxu0 0.0
      %v3135 = vand.u32 %v2680, 4294901760
      %3136 = vmatmul.mubr.f32.gmra.mrb[0].mxu0 %v3135
      %v3137 = vpop.f32.mrb[0].mxu0
      %v3138 = vadd.f32 %v3065, %v3137
      %v3139 = vpop.f32.mrb[0].mxu0
      %3140 = vdwg.mxu0
      %3142 = vrot.lane.b32.xlu0 %v3138, 24
      %v3143 = vpop.permute.xlu0 %3142
      %vm3145 = vcmask 261312
      %3146 = vst.msk [vmem:[%s330] sm:$0xff] %vm3145, %v3143
      %3147 = vrot.lane.b32.xlu0 %v2671, 93
      %v3148 = vpop.permute.xlu0 %3147
      %v3149 = vsel %vm1264, %v3148, 0
      %3151 = vmatprep.subr.mxu0 0.0
      %v3152 = vand.u32 %v1254, 4294901760
      %3153 = vmatpush1.msra.mxu0 %v3152
      %3154 = vmatprep.subr.mxu0 0.0
      %v3155 = vand.u32 %v1255, 4294901760
      %3156 = vmatpush1.msra.mxu0 %v3155
      %3157 = vmatprep.subr.mxu0 0.0
      %3158 = vmatpush1.msra.mxu0 0.0
      %3159 = vmatprep.subr.mxu0 0.0
      %3160 = vmatpush1.msra.mxu0 0.0
      %3161 = vmatprep.subr.mxu0 0.0
      %3162 = vmatpush1.msra.mxu0 0.0
      %3163 = vmatprep.subr.mxu0 0.0
      %3164 = vmatpush1.msra.mxu0 0.0
      %3165 = vmatprep.subr.mxu0 0.0
      %3166 = vmatpush1.msra.mxu0 0.0
      %3167 = vmatprep.subr.mxu0 0.0
      %3168 = vmatpush1.msra.mxu0 0.0
      %3169 = vmatprep.subr.mxu0 0.0
      %3170 = vmatpush1.msra.mxu0 0.0
      %3171 = vmatprep.subr.mxu0 0.0
      %3172 = vmatpush1.msra.mxu0 0.0
      %3173 = vmatprep.subr.mxu0 0.0
      %3174 = vmatpush1.msra.mxu0 0.0
      %3175 = vmatprep.subr.mxu0 0.0
      %3176 = vmatpush1.msra.mxu0 0.0
      %3177 = vmatprep.subr.mxu0 0.0
      %3178 = vmatpush1.msra.mxu0 0.0
      %3179 = vmatprep.subr.mxu0 0.0
      %3180 = vmatpush1.msra.mxu0 0.0
      %3181 = vmatprep.subr.mxu0 0.0
      %3182 = vmatpush1.msra.mxu0 0.0
      %3183 = vmatprep.subr.mxu0 0.0
      %3184 = vmatpush1.msra.mxu0 0.0
      %3185 = vmatprep.subr.mxu0 0.0
      %3186 = vmatpush1.msra.mxu0 0.0
      %3187 = vmatprep.subr.mxu0 0.0
      %3188 = vmatpush1.msra.mxu0 0.0
      %3189 = vmatprep.subr.mxu0 0.0
      %3190 = vmatpush1.msra.mxu0 0.0
      %3191 = vmatprep.subr.mxu0 0.0
      %3192 = vmatpush1.msra.mxu0 0.0
      %3193 = vmatprep.subr.mxu0 0.0
      %3194 = vmatpush1.msra.mxu0 0.0
      %3195 = vmatprep.subr.mxu0 0.0
      %3196 = vmatpush1.msra.mxu0 0.0
      %3197 = vmatprep.subr.mxu0 0.0
      %3198 = vmatpush1.msra.mxu0 0.0
      %3199 = vmatprep.subr.mxu0 0.0
      %3200 = vmatpush1.msra.mxu0 0.0
      %3201 = vmatprep.subr.mxu0 0.0
      %3202 = vmatpush1.msra.mxu0 0.0
      %3203 = vmatprep.subr.mxu0 0.0
      %3204 = vmatpush1.msra.mxu0 0.0
      %3205 = vmatprep.subr.mxu0 0.0
      %3206 = vmatpush1.msra.mxu0 0.0
      %3207 = vmatprep.subr.mxu0 0.0
      %3208 = vmatpush1.msra.mxu0 0.0
      %3209 = vmatprep.subr.mxu0 0.0
      %3210 = vmatpush1.msra.mxu0 0.0
      %3211 = vmatprep.subr.mxu0 0.0
      %3212 = vmatpush1.msra.mxu0 0.0
      %3213 = vmatprep.subr.mxu0 0.0
      %3214 = vmatpush1.msra.mxu0 0.0
      %3215 = vmatprep.subr.mxu0 0.0
      %3216 = vmatpush1.msra.mxu0 0.0
      %3217 = vmatprep.mubr.f32.mxu0 0.0
      %v3218 = vand.u32 %v3149, 4294901760
      %v3219 = vsub.f32 %v3149, %v3218
      %v3220 = vand.u32 %v3219, 4294901760
      %v3221 = vsub.f32 %v3219, %v3220
      %v3222 = vand.u32 %v3221, 4294901760
      %3223 = vmatmul.mubr.f32.gmra.mrb[0].mxu0 %v3222
      %v3224 = vpop.f32.mrb[0].mxu0
      %v3225 = vadd.f32 0.0, %v3224
      %v3226 = vpop.f32.mrb[0].mxu0
      %3227 = vdwg.mxu0
      %3228 = vmatprep.subr.mxu0 0.0
      %v3229 = vand.u32 %v1254, 4294901760
      %v3230 = vsub.f32 %v1254, %v3229
      %v3231 = vand.u32 %v3230, 4294901760
      %v3232 = vsub.f32 %v3230, %v3231
      %v3233 = vand.u32 %v3232, 4294901760
      %3234 = vmatpush1.msra.mxu0 %v3233
      %3235 = vmatprep.subr.mxu0 0.0
      %v3236 = vand.u32 %v1255, 4294901760
      %v3237 = vsub.f32 %v1255, %v3236
      %v3238 = vand.u32 %v3237, 4294901760
      %v3239 = vsub.f32 %v3237, %v3238
      %v3240 = vand.u32 %v3239, 4294901760
      %3241 = vmatpush1.msra.mxu0 %v3240
      %3242 = vmatprep.subr.mxu0 0.0
      %3243 = vmatpush1.msra.mxu0 0.0
      %3244 = vmatprep.subr.mxu0 0.0
      %3245 = vmatpush1.msra.mxu0 0.0
      %3246 = vmatprep.subr.mxu0 0.0
      %3247 = vmatpush1.msra.mxu0 0.0
      %3248 = vmatprep.subr.mxu0 0.0
      %3249 = vmatpush1.msra.mxu0 0.0
      %3250 = vmatprep.subr.mxu0 0.0
      %3251 = vmatpush1.msra.mxu0 0.0
      %3252 = vmatprep.subr.mxu0 0.0
      %3253 = vmatpush1.msra.mxu0 0.0
      %3254 = vmatprep.subr.mxu0 0.0
      %3255 = vmatpush1.msra.mxu0 0.0
      %3256 = vmatprep.subr.mxu0 0.0
      %3257 = vmatpush1.msra.mxu0 0.0
      %3258 = vmatprep.subr.mxu0 0.0
      %3259 = vmatpush1.msra.mxu0 0.0
      %3260 = vmatprep.subr.mxu0 0.0
      %3261 = vmatpush1.msra.mxu0 0.0
      %3262 = vmatprep.subr.mxu0 0.0
      %3263 = vmatpush1.msra.mxu0 0.0
      %3264 = vmatprep.subr.mxu0 0.0
      %3265 = vmatpush1.msra.mxu0 0.0
      %3266 = vmatprep.subr.mxu0 0.0
      %3267 = vmatpush1.msra.mxu0 0.0
      %3268 = vmatprep.subr.mxu0 0.0
      %3269 = vmatpush1.msra.mxu0 0.0
      %3270 = vmatprep.subr.mxu0 0.0
      %3271 = vmatpush1.msra.mxu0 0.0
      %3272 = vmatprep.subr.mxu0 0.0
      %3273 = vmatpush1.msra.mxu0 0.0
      %3274 = vmatprep.subr.mxu0 0.0
      %3275 = vmatpush1.msra.mxu0 0.0
      %3276 = vmatprep.subr.mxu0 0.0
      %3277 = vmatpush1.msra.mxu0 0.0
      %3278 = vmatprep.subr.mxu0 0.0
      %3279 = vmatpush1.msra.mxu0 0.0
      %3280 = vmatprep.subr.mxu0 0.0
      %3281 = vmatpush1.msra.mxu0 0.0
      %3282 = vmatprep.subr.mxu0 0.0
      %3283 = vmatpush1.msra.mxu0 0.0
      %3284 = vmatprep.subr.mxu0 0.0
      %3285 = vmatpush1.msra.mxu0 0.0
      %3286 = vmatprep.subr.mxu0 0.0
      %3287 = vmatpush1.msra.mxu0 0.0
      %3288 = vmatprep.subr.mxu0 0.0
      %3289 = vmatpush1.msra.mxu0 0.0
      %3290 = vmatprep.subr.mxu0 0.0
      %3291 = vmatpush1.msra.mxu0 0.0
      %3292 = vmatprep.subr.mxu0 0.0
      %3293 = vmatpush1.msra.mxu0 0.0
      %3294 = vmatprep.subr.mxu0 0.0
      %3295 = vmatpush1.msra.mxu0 0.0
      %3296 = vmatprep.subr.mxu0 0.0
      %3297 = vmatpush1.msra.mxu0 0.0
      %3298 = vmatprep.subr.mxu0 0.0
      %3299 = vmatpush1.msra.mxu0 0.0
      %3300 = vmatprep.subr.mxu0 0.0
      %3301 = vmatpush1.msra.mxu0 0.0
      %3302 = vmatprep.mubr.f32.mxu0 0.0
      %v3303 = vand.u32 %v3149, 4294901760
      %3304 = vmatmul.mubr.f32.gmra.mrb[0].mxu0 %v3303
      %v3305 = vpop.f32.mrb[0].mxu0
      %v3306 = vadd.f32 %v3225, %v3305
      %v3307 = vpop.f32.mrb[0].mxu0
      %3308 = vdwg.mxu0
      %3309 = vmatprep.subr.mxu0 0.0
      %v3310 = vand.u32 %v1254, 4294901760
      %v3311 = vsub.f32 %v1254, %v3310
      %3312 = vmatpush1.msra.mxu0 %v3311
      %3313 = vmatprep.subr.mxu0 0.0
      %v3314 = vand.u32 %v1255, 4294901760
      %v3315 = vsub.f32 %v1255, %v3314
      %3316 = vmatpush1.msra.mxu0 %v3315
      %3317 = vmatprep.subr.mxu0 0.0
      %3318 = vmatpush1.msra.mxu0 0.0
      %3319 = vmatprep.subr.mxu0 0.0
      %3320 = vmatpush1.msra.mxu0 0.0
      %3321 = vmatprep.subr.mxu0 0.0
      %3322 = vmatpush1.msra.mxu0 0.0
      %3323 = vmatprep.subr.mxu0 0.0
      %3324 = vmatpush1.msra.mxu0 0.0
      %3325 = vmatprep.subr.mxu0 0.0
      %3326 = vmatpush1.msra.mxu0 0.0
      %3327 = vmatprep.subr.mxu0 0.0
      %3328 = vmatpush1.msra.mxu0 0.0
      %3329 = vmatprep.subr.mxu0 0.0
      %3330 = vmatpush1.msra.mxu0 0.0
      %3331 = vmatprep.subr.mxu0 0.0
      %3332 = vmatpush1.msra.mxu0 0.0
      %3333 = vmatprep.subr.mxu0 0.0
      %3334 = vmatpush1.msra.mxu0 0.0
      %3335 = vmatprep.subr.mxu0 0.0
      %3336 = vmatpush1.msra.mxu0 0.0
      %3337 = vmatprep.subr.mxu0 0.0
      %3338 = vmatpush1.msra.mxu0 0.0
      %3339 = vmatprep.subr.mxu0 0.0
      %3340 = vmatpush1.msra.mxu0 0.0
      %3341 = vmatprep.subr.mxu0 0.0
      %3342 = vmatpush1.msra.mxu0 0.0
      %3343 = vmatprep.subr.mxu0 0.0
      %3344 = vmatpush1.msra.mxu0 0.0
      %3345 = vmatprep.subr.mxu0 0.0
      %3346 = vmatpush1.msra.mxu0 0.0
      %3347 = vmatprep.subr.mxu0 0.0
      %3348 = vmatpush1.msra.mxu0 0.0
      %3349 = vmatprep.subr.mxu0 0.0
      %3350 = vmatpush1.msra.mxu0 0.0
      %3351 = vmatprep.subr.mxu0 0.0
      %3352 = vmatpush1.msra.mxu0 0.0
      %3353 = vmatprep.subr.mxu0 0.0
      %3354 = vmatpush1.msra.mxu0 0.0
      %3355 = vmatprep.subr.mxu0 0.0
      %3356 = vmatpush1.msra.mxu0 0.0
      %3357 = vmatprep.subr.mxu0 0.0
      %3358 = vmatpush1.msra.mxu0 0.0
      %3359 = vmatprep.subr.mxu0 0.0
      %3360 = vmatpush1.msra.mxu0 0.0
      %3361 = vmatprep.subr.mxu0 0.0
      %3362 = vmatpush1.msra.mxu0 0.0
      %3363 = vmatprep.subr.mxu0 0.0
      %3364 = vmatpush1.msra.mxu0 0.0
      %3365 = vmatprep.subr.mxu0 0.0
      %3366 = vmatpush1.msra.mxu0 0.0
      %3367 = vmatprep.subr.mxu0 0.0
      %3368 = vmatpush1.msra.mxu0 0.0
      %3369 = vmatprep.subr.mxu0 0.0
      %3370 = vmatpush1.msra.mxu0 0.0
      %3371 = vmatprep.subr.mxu0 0.0
      %3372 = vmatpush1.msra.mxu0 0.0
      %3373 = vmatprep.subr.mxu0 0.0
      %3374 = vmatpush1.msra.mxu0 0.0
      %3375 = vmatprep.subr.mxu0 0.0
      %3376 = vmatpush1.msra.mxu0 0.0
      %3377 = vmatprep.mubr.f32.mxu0 0.0
      %v3378 = vand.u32 %v3149, 4294901760
      %v3379 = vsub.f32 %v3149, %v3378
      %3380 = vmatmul.mubr.f32.gmra.mrb[0].mxu0 %v3379
      %v3381 = vpop.f32.mrb[0].mxu0
      %v3382 = vadd.f32 %v3306, %v3381
      %v3383 = vpop.f32.mrb[0].mxu0
      %3384 = vdwg.mxu0
      %3385 = vmatprep.subr.mxu0 0.0
      %v3386 = vand.u32 %v1254, 4294901760
      %3387 = vmatpush1.msra.mxu0 %v3386
      %3388 = vmatprep.subr.mxu0 0.0
      %v3389 = vand.u32 %v1255, 4294901760
      %3390 = vmatpush1.msra.mxu0 %v3389
      %3391 = vmatprep.subr.mxu0 0.0
      %3392 = vmatpush1.msra.mxu0 0.0
      %3393 = vmatprep.subr.mxu0 0.0
      %3394 = vmatpush1.msra.mxu0 0.0
      %3395 = vmatprep.subr.mxu0 0.0
      %3396 = vmatpush1.msra.mxu0 0.0
      %3397 = vmatprep.subr.mxu0 0.0
      %3398 = vmatpush1.msra.mxu0 0.0
      %3399 = vmatprep.subr.mxu0 0.0
      %3400 = vmatpush1.msra.mxu0 0.0
      %3401 = vmatprep.subr.mxu0 0.0
      %3402 = vmatpush1.msra.mxu0 0.0
      %3403 = vmatprep.subr.mxu0 0.0
      %3404 = vmatpush1.msra.mxu0 0.0
      %3405 = vmatprep.subr.mxu0 0.0
      %3406 = vmatpush1.msra.mxu0 0.0
      %3407 = vmatprep.subr.mxu0 0.0
      %3408 = vmatpush1.msra.mxu0 0.0
      %3409 = vmatprep.subr.mxu0 0.0
      %3410 = vmatpush1.msra.mxu0 0.0
      %3411 = vmatprep.subr.mxu0 0.0
      %3412 = vmatpush1.msra.mxu0 0.0
      %3413 = vmatprep.subr.mxu0 0.0
      %3414 = vmatpush1.msra.mxu0 0.0
      %3415 = vmatprep.subr.mxu0 0.0
      %3416 = vmatpush1.msra.mxu0 0.0
      %3417 = vmatprep.subr.mxu0 0.0
      %3418 = vmatpush1.msra.mxu0 0.0
      %3419 = vmatprep.subr.mxu0 0.0
      %3420 = vmatpush1.msra.mxu0 0.0
      %3421 = vmatprep.subr.mxu0 0.0
      %3422 = vmatpush1.msra.mxu0 0.0
      %3423 = vmatprep.subr.mxu0 0.0
      %3424 = vmatpush1.msra.mxu0 0.0
      %3425 = vmatprep.subr.mxu0 0.0
      %3426 = vmatpush1.msra.mxu0 0.0
      %3427 = vmatprep.subr.mxu0 0.0
      %3428 = vmatpush1.msra.mxu0 0.0
      %3429 = vmatprep.subr.mxu0 0.0
      %3430 = vmatpush1.msra.mxu0 0.0
      %3431 = vmatprep.subr.mxu0 0.0
      %3432 = vmatpush1.msra.mxu0 0.0
      %3433 = vmatprep.subr.mxu0 0.0
      %3434 = vmatpush1.msra.mxu0 0.0
      %3435 = vmatprep.subr.mxu0 0.0
      %3436 = vmatpush1.msra.mxu0 0.0
      %3437 = vmatprep.subr.mxu0 0.0
      %3438 = vmatpush1.msra.mxu0 0.0
      %3439 = vmatprep.subr.mxu0 0.0
      %3440 = vmatpush1.msra.mxu0 0.0
      %3441 = vmatprep.subr.mxu0 0.0
      %3442 = vmatpush1.msra.mxu0 0.0
      %3443 = vmatprep.subr.mxu0 0.0
      %3444 = vmatpush1.msra.mxu0 0.0
      %3445 = vmatprep.subr.mxu0 0.0
      %3446 = vmatpush1.msra.mxu0 0.0
      %3447 = vmatprep.subr.mxu0 0.0
      %3448 = vmatpush1.msra.mxu0 0.0
      %3449 = vmatprep.subr.mxu0 0.0
      %3450 = vmatpush1.msra.mxu0 0.0
      %3451 = vmatprep.mubr.f32.mxu0 0.0
      %v3452 = vand.u32 %v3149, 4294901760
      %v3453 = vsub.f32 %v3149, %v3452
      %v3454 = vand.u32 %v3453, 4294901760
      %3455 = vmatmul.mubr.f32.gmra.mrb[0].mxu0 %v3454
      %v3456 = vpop.f32.mrb[0].mxu0
      %v3457 = vadd.f32 %v3382, %v3456
      %v3458 = vpop.f32.mrb[0].mxu0
      %3459 = vdwg.mxu0
      %3460 = vmatprep.subr.mxu0 0.0
      %v3461 = vand.u32 %v1254, 4294901760
      %v3462 = vsub.f32 %v1254, %v3461
      %v3463 = vand.u32 %v3462, 4294901760
      %3464 = vmatpush1.msra.mxu0 %v3463
      %3465 = vmatprep.subr.mxu0 0.0
      %v3466 = vand.u32 %v1255, 4294901760
      %v3467 = vsub.f32 %v1255, %v3466
      %v3468 = vand.u32 %v3467, 4294901760
      %3469 = vmatpush1.msra.mxu0 %v3468
      %3470 = vmatprep.subr.mxu0 0.0
      %3471 = vmatpush1.msra.mxu0 0.0
      %3472 = vmatprep.subr.mxu0 0.0
      %3473 = vmatpush1.msra.mxu0 0.0
      %3474 = vmatprep.subr.mxu0 0.0
      %3475 = vmatpush1.msra.mxu0 0.0
      %3476 = vmatprep.subr.mxu0 0.0
      %3477 = vmatpush1.msra.mxu0 0.0
      %3478 = vmatprep.subr.mxu0 0.0
      %3479 = vmatpush1.msra.mxu0 0.0
      %3480 = vmatprep.subr.mxu0 0.0
      %3481 = vmatpush1.msra.mxu0 0.0
      %3482 = vmatprep.subr.mxu0 0.0
      %3483 = vmatpush1.msra.mxu0 0.0
      %3484 = vmatprep.subr.mxu0 0.0
      %3485 = vmatpush1.msra.mxu0 0.0
      %3486 = vmatprep.subr.mxu0 0.0
      %3487 = vmatpush1.msra.mxu0 0.0
      %3488 = vmatprep.subr.mxu0 0.0
      %3489 = vmatpush1.msra.mxu0 0.0
      %3490 = vmatprep.subr.mxu0 0.0
      %3491 = vmatpush1.msra.mxu0 0.0
      %3492 = vmatprep.subr.mxu0 0.0
      %3493 = vmatpush1.msra.mxu0 0.0
      %3494 = vmatprep.subr.mxu0 0.0
      %3495 = vmatpush1.msra.mxu0 0.0
      %3496 = vmatprep.subr.mxu0 0.0
      %3497 = vmatpush1.msra.mxu0 0.0
      %3498 = vmatprep.subr.mxu0 0.0
      %3499 = vmatpush1.msra.mxu0 0.0
      %3500 = vmatprep.subr.mxu0 0.0
      %3501 = vmatpush1.msra.mxu0 0.0
      %3502 = vmatprep.subr.mxu0 0.0
      %3503 = vmatpush1.msra.mxu0 0.0
      %3504 = vmatprep.subr.mxu0 0.0
      %3505 = vmatpush1.msra.mxu0 0.0
      %3506 = vmatprep.subr.mxu0 0.0
      %3507 = vmatpush1.msra.mxu0 0.0
      %3508 = vmatprep.subr.mxu0 0.0
      %3509 = vmatpush1.msra.mxu0 0.0
      %3510 = vmatprep.subr.mxu0 0.0
      %3511 = vmatpush1.msra.mxu0 0.0
      %3512 = vmatprep.subr.mxu0 0.0
      %3513 = vmatpush1.msra.mxu0 0.0
      %3514 = vmatprep.subr.mxu0 0.0
      %3515 = vmatpush1.msra.mxu0 0.0
      %3516 = vmatprep.subr.mxu0 0.0
      %3517 = vmatpush1.msra.mxu0 0.0
      %3518 = vmatprep.subr.mxu0 0.0
      %3519 = vmatpush1.msra.mxu0 0.0
      %3520 = vmatprep.subr.mxu0 0.0
      %3521 = vmatpush1.msra.mxu0 0.0
      %3522 = vmatprep.subr.mxu0 0.0
      %3523 = vmatpush1.msra.mxu0 0.0
      %3524 = vmatprep.subr.mxu0 0.0
      %3525 = vmatpush1.msra.mxu0 0.0
      %3526 = vmatprep.subr.mxu0 0.0
      %3527 = vmatpush1.msra.mxu0 0.0
      %3528 = vmatprep.subr.mxu0 0.0
      %3529 = vmatpush1.msra.mxu0 0.0
      %3530 = vmatprep.mubr.f32.mxu0 0.0
      %v3531 = vand.u32 %v3149, 4294901760
      %3532 = vmatmul.mubr.f32.gmra.mrb[0].mxu0 %v3531
      %v3533 = vpop.f32.mrb[0].mxu0
      %v3534 = vadd.f32 %v3457, %v3533
      %v3535 = vpop.f32.mrb[0].mxu0
      %3536 = vdwg.mxu0
      %3537 = vmatprep.subr.mxu0 0.0
      %v3538 = vand.u32 %v1254, 4294901760
      %3539 = vmatpush1.msra.mxu0 %v3538
      %3540 = vmatprep.subr.mxu0 0.0
      %v3541 = vand.u32 %v1255, 4294901760
      %3542 = vmatpush1.msra.mxu0 %v3541
      %3543 = vmatprep.subr.mxu0 0.0
      %3544 = vmatpush1.msra.mxu0 0.0
      %3545 = vmatprep.subr.mxu0 0.0
      %3546 = vmatpush1.msra.mxu0 0.0
      %3547 = vmatprep.subr.mxu0 0.0
      %3548 = vmatpush1.msra.mxu0 0.0
      %3549 = vmatprep.subr.mxu0 0.0
      %3550 = vmatpush1.msra.mxu0 0.0
      %3551 = vmatprep.subr.mxu0 0.0
      %3552 = vmatpush1.msra.mxu0 0.0
      %3553 = vmatprep.subr.mxu0 0.0
      %3554 = vmatpush1.msra.mxu0 0.0
      %3555 = vmatprep.subr.mxu0 0.0
      %3556 = vmatpush1.msra.mxu0 0.0
      %3557 = vmatprep.subr.mxu0 0.0
      %3558 = vmatpush1.msra.mxu0 0.0
      %3559 = vmatprep.subr.mxu0 0.0
      %3560 = vmatpush1.msra.mxu0 0.0
      %3561 = vmatprep.subr.mxu0 0.0
      %3562 = vmatpush1.msra.mxu0 0.0
      %3563 = vmatprep.subr.mxu0 0.0
      %3564 = vmatpush1.msra.mxu0 0.0
      %3565 = vmatprep.subr.mxu0 0.0
      %3566 = vmatpush1.msra.mxu0 0.0
      %3567 = vmatprep.subr.mxu0 0.0
      %3568 = vmatpush1.msra.mxu0 0.0
      %3569 = vmatprep.subr.mxu0 0.0
      %3570 = vmatpush1.msra.mxu0 0.0
      %3571 = vmatprep.subr.mxu0 0.0
      %3572 = vmatpush1.msra.mxu0 0.0
      %3573 = vmatprep.subr.mxu0 0.0
      %3574 = vmatpush1.msra.mxu0 0.0
      %3575 = vmatprep.subr.mxu0 0.0
      %3576 = vmatpush1.msra.mxu0 0.0
      %3577 = vmatprep.subr.mxu0 0.0
      %3578 = vmatpush1.msra.mxu0 0.0
      %3579 = vmatprep.subr.mxu0 0.0
      %3580 = vmatpush1.msra.mxu0 0.0
      %3581 = vmatprep.subr.mxu0 0.0
      %3582 = vmatpush1.msra.mxu0 0.0
      %3583 = vmatprep.subr.mxu0 0.0
      %3584 = vmatpush1.msra.mxu0 0.0
      %3585 = vmatprep.subr.mxu0 0.0
      %3586 = vmatpush1.msra.mxu0 0.0
      %3587 = vmatprep.subr.mxu0 0.0
      %3588 = vmatpush1.msra.mxu0 0.0
      %3589 = vmatprep.subr.mxu0 0.0
      %3590 = vmatpush1.msra.mxu0 0.0
      %3591 = vmatprep.subr.mxu0 0.0
      %3592 = vmatpush1.msra.mxu0 0.0
      %3593 = vmatprep.subr.mxu0 0.0
      %3594 = vmatpush1.msra.mxu0 0.0
      %3595 = vmatprep.subr.mxu0 0.0
      %3596 = vmatpush1.msra.mxu0 0.0
      %3597 = vmatprep.subr.mxu0 0.0
      %3598 = vmatpush1.msra.mxu0 0.0
      %3599 = vmatprep.subr.mxu0 0.0
      %3600 = vmatpush1.msra.mxu0 0.0
      %3601 = vmatprep.subr.mxu0 0.0
      %3602 = vmatpush1.msra.mxu0 0.0
      %3603 = vmatprep.mubr.f32.mxu0 0.0
      %v3604 = vand.u32 %v3149, 4294901760
      %3605 = vmatmul.mubr.f32.gmra.mrb[0].mxu0 %v3604
      %v3606 = vpop.f32.mrb[0].mxu0
      %v3607 = vadd.f32 %v3534, %v3606
      %v3608 = vpop.f32.mrb[0].mxu0
      %3609 = vdwg.mxu0
      %3611 = vrot.lane.b32.xlu0 %v3607, 32
      %v3612 = vpop.permute.xlu0 %3611
      %vm3614 = vcmask 326912
      %3615 = vst.msk [vmem:[%s330] sm:$0xff] %vm3614, %v3612
      %3616 = vrot.lane.b32.xlu0 %v2671, 57
      %v3617 = vpop.permute.xlu0 %3616
      %v3618 = vsel %vm1264, %v3617, 0
      %3620 = vmatprep.subr.mxu0 0.0
      %v3621 = vand.u32 %v1254, 4294901760
      %3622 = vmatpush1.msra.mxu0 %v3621
      %3623 = vmatprep.subr.mxu0 0.0
      %v3624 = vand.u32 %v1255, 4294901760
      %3625 = vmatpush1.msra.mxu0 %v3624
      %3626 = vmatprep.subr.mxu0 0.0
      %3627 = vmatpush1.msra.mxu0 0.0
      %3628 = vmatprep.subr.mxu0 0.0
      %3629 = vmatpush1.msra.mxu0 0.0
      %3630 = vmatprep.subr.mxu0 0.0
      %3631 = vmatpush1.msra.mxu0 0.0
      %3632 = vmatprep.subr.mxu0 0.0
      %3633 = vmatpush1.msra.mxu0 0.0
      %3634 = vmatprep.subr.mxu0 0.0
      %3635 = vmatpush1.msra.mxu0 0.0
      %3636 = vmatprep.subr.mxu0 0.0
      %3637 = vmatpush1.msra.mxu0 0.0
      %3638 = vmatprep.subr.mxu0 0.0
      %3639 = vmatpush1.msra.mxu0 0.0
      %3640 = vmatprep.subr.mxu0 0.0
      %3641 = vmatpush1.msra.mxu0 0.0
      %3642 = vmatprep.subr.mxu0 0.0
      %3643 = vmatpush1.msra.mxu0 0.0
      %3644 = vmatprep.subr.mxu0 0.0
      %3645 = vmatpush1.msra.mxu0 0.0
      %3646 = vmatprep.subr.mxu0 0.0
      %3647 = vmatpush1.msra.mxu0 0.0
      %3648 = vmatprep.subr.mxu0 0.0
      %3649 = vmatpush1.msra.mxu0 0.0
      %3650 = vmatprep.subr.mxu0 0.0
      %3651 = vmatpush1.msra.mxu0 0.0
      %3652 = vmatprep.subr.mxu0 0.0
      %3653 = vmatpush1.msra.mxu0 0.0
      %3654 = vmatprep.subr.mxu0 0.0
      %3655 = vmatpush1.msra.mxu0 0.0
      %3656 = vmatprep.subr.mxu0 0.0
      %3657 = vmatpush1.msra.mxu0 0.0
      %3658 = vmatprep.subr.mxu0 0.0
      %3659 = vmatpush1.msra.mxu0 0.0
      %3660 = vmatprep.subr.mxu0 0.0
      %3661 = vmatpush1.msra.mxu0 0.0
      %3662 = vmatprep.subr.mxu0 0.0
      %3663 = vmatpush1.msra.mxu0 0.0
      %3664 = vmatprep.subr.mxu0 0.0
      %3665 = vmatpush1.msra.mxu0 0.0
      %3666 = vmatprep.subr.mxu0 0.0
      %3667 = vmatpush1.msra.mxu0 0.0
      %3668 = vmatprep.subr.mxu0 0.0
      %3669 = vmatpush1.msra.mxu0 0.0
      %3670 = vmatprep.subr.mxu0 0.0
      %3671 = vmatpush1.msra.mxu0 0.0
      %3672 = vmatprep.subr.mxu0 0.0
      %3673 = vmatpush1.msra.mxu0 0.0
      %3674 = vmatprep.subr.mxu0 0.0
      %3675 = vmatpush1.msra.mxu0 0.0
      %3676 = vmatprep.subr.mxu0 0.0
      %3677 = vmatpush1.msra.mxu0 0.0
      %3678 = vmatprep.subr.mxu0 0.0
      %3679 = vmatpush1.msra.mxu0 0.0
      %3680 = vmatprep.subr.mxu0 0.0
      %3681 = vmatpush1.msra.mxu0 0.0
      %3682 = vmatprep.subr.mxu0 0.0
      %3683 = vmatpush1.msra.mxu0 0.0
      %3684 = vmatprep.subr.mxu0 0.0
      %3685 = vmatpush1.msra.mxu0 0.0
      %3686 = vmatprep.mubr.f32.mxu0 0.0
      %v3687 = vand.u32 %v3618, 4294901760
      %v3688 = vsub.f32 %v3618, %v3687
      %v3689 = vand.u32 %v3688, 4294901760
      %v3690 = vsub.f32 %v3688, %v3689
      %v3691 = vand.u32 %v3690, 4294901760
      %3692 = vmatmul.mubr.f32.gmra.mrb[0].mxu0 %v3691
      %v3693 = vpop.f32.mrb[0].mxu0
      %v3694 = vadd.f32 0.0, %v3693
      %v3695 = vpop.f32.mrb[0].mxu0
      %3696 = vdwg.mxu0
      %3697 = vmatprep.subr.mxu0 0.0
      %v3698 = vand.u32 %v1254, 4294901760
      %v3699 = vsub.f32 %v1254, %v3698
      %v3700 = vand.u32 %v3699, 4294901760
      %v3701 = vsub.f32 %v3699, %v3700
      %v3702 = vand.u32 %v3701, 4294901760
      %3703 = vmatpush1.msra.mxu0 %v3702
      %3704 = vmatprep.subr.mxu0 0.0
      %v3705 = vand.u32 %v1255, 4294901760
      %v3706 = vsub.f32 %v1255, %v3705
      %v3707 = vand.u32 %v3706, 4294901760
      %v3708 = vsub.f32 %v3706, %v3707
      %v3709 = vand.u32 %v3708, 4294901760
      %3710 = vmatpush1.msra.mxu0 %v3709
      %3711 = vmatprep.subr.mxu0 0.0
      %3712 = vmatpush1.msra.mxu0 0.0
      %3713 = vmatprep.subr.mxu0 0.0
      %3714 = vmatpush1.msra.mxu0 0.0
      %3715 = vmatprep.subr.mxu0 0.0
      %3716 = vmatpush1.msra.mxu0 0.0
      %3717 = vmatprep.subr.mxu0 0.0
      %3718 = vmatpush1.msra.mxu0 0.0
      %3719 = vmatprep.subr.mxu0 0.0
      %3720 = vmatpush1.msra.mxu0 0.0
      %3721 = vmatprep.subr.mxu0 0.0
      %3722 = vmatpush1.msra.mxu0 0.0
      %3723 = vmatprep.subr.mxu0 0.0
      %3724 = vmatpush1.msra.mxu0 0.0
      %3725 = vmatprep.subr.mxu0 0.0
      %3726 = vmatpush1.msra.mxu0 0.0
      %3727 = vmatprep.subr.mxu0 0.0
      %3728 = vmatpush1.msra.mxu0 0.0
      %3729 = vmatprep.subr.mxu0 0.0
      %3730 = vmatpush1.msra.mxu0 0.0
      %3731 = vmatprep.subr.mxu0 0.0
      %3732 = vmatpush1.msra.mxu0 0.0
      %3733 = vmatprep.subr.mxu0 0.0
      %3734 = vmatpush1.msra.mxu0 0.0
      %3735 = vmatprep.subr.mxu0 0.0
      %3736 = vmatpush1.msra.mxu0 0.0
      %3737 = vmatprep.subr.mxu0 0.0
      %3738 = vmatpush1.msra.mxu0 0.0
      %3739 = vmatprep.subr.mxu0 0.0
      %3740 = vmatpush1.msra.mxu0 0.0
      %3741 = vmatprep.subr.mxu0 0.0
      %3742 = vmatpush1.msra.mxu0 0.0
      %3743 = vmatprep.subr.mxu0 0.0
      %3744 = vmatpush1.msra.mxu0 0.0
      %3745 = vmatprep.subr.mxu0 0.0
      %3746 = vmatpush1.msra.mxu0 0.0
      %3747 = vmatprep.subr.mxu0 0.0
      %3748 = vmatpush1.msra.mxu0 0.0
      %3749 = vmatprep.subr.mxu0 0.0
      %3750 = vmatpush1.msra.mxu0 0.0
      %3751 = vmatprep.subr.mxu0 0.0
      %3752 = vmatpush1.msra.mxu0 0.0
      %3753 = vmatprep.subr.mxu0 0.0
      %3754 = vmatpush1.msra.mxu0 0.0
      %3755 = vmatprep.subr.mxu0 0.0
      %3756 = vmatpush1.msra.mxu0 0.0
      %3757 = vmatprep.subr.mxu0 0.0
      %3758 = vmatpush1.msra.mxu0 0.0
      %3759 = vmatprep.subr.mxu0 0.0
      %3760 = vmatpush1.msra.mxu0 0.0
      %3761 = vmatprep.subr.mxu0 0.0
      %3762 = vmatpush1.msra.mxu0 0.0
      %3763 = vmatprep.subr.mxu0 0.0
      %3764 = vmatpush1.msra.mxu0 0.0
      %3765 = vmatprep.subr.mxu0 0.0
      %3766 = vmatpush1.msra.mxu0 0.0
      %3767 = vmatprep.subr.mxu0 0.0
      %3768 = vmatpush1.msra.mxu0 0.0
      %3769 = vmatprep.subr.mxu0 0.0
      %3770 = vmatpush1.msra.mxu0 0.0
      %3771 = vmatprep.mubr.f32.mxu0 0.0
      %v3772 = vand.u32 %v3618, 4294901760
      %3773 = vmatmul.mubr.f32.gmra.mrb[0].mxu0 %v3772
      %v3774 = vpop.f32.mrb[0].mxu0
      %v3775 = vadd.f32 %v3694, %v3774
      %v3776 = vpop.f32.mrb[0].mxu0
      %3777 = vdwg.mxu0
      %3778 = vmatprep.subr.mxu0 0.0
      %v3779 = vand.u32 %v1254, 4294901760
      %v3780 = vsub.f32 %v1254, %v3779
      %3781 = vmatpush1.msra.mxu0 %v3780
      %3782 = vmatprep.subr.mxu0 0.0
      %v3783 = vand.u32 %v1255, 4294901760
      %v3784 = vsub.f32 %v1255, %v3783
      %3785 = vmatpush1.msra.mxu0 %v3784
      %3786 = vmatprep.subr.mxu0 0.0
      %3787 = vmatpush1.msra.mxu0 0.0
      %3788 = vmatprep.subr.mxu0 0.0
      %3789 = vmatpush1.msra.mxu0 0.0
      %3790 = vmatprep.subr.mxu0 0.0
      %3791 = vmatpush1.msra.mxu0 0.0
      %3792 = vmatprep.subr.mxu0 0.0
      %3793 = vmatpush1.msra.mxu0 0.0
      %3794 = vmatprep.subr.mxu0 0.0
      %3795 = vmatpush1.msra.mxu0 0.0
      %3796 = vmatprep.subr.mxu0 0.0
      %3797 = vmatpush1.msra.mxu0 0.0
      %3798 = vmatprep.subr.mxu0 0.0
      %3799 = vmatpush1.msra.mxu0 0.0
      %3800 = vmatprep.subr.mxu0 0.0
      %3801 = vmatpush1.msra.mxu0 0.0
      %3802 = vmatprep.subr.mxu0 0.0
      %3803 = vmatpush1.msra.mxu0 0.0
      %3804 = vmatprep.subr.mxu0 0.0
      %3805 = vmatpush1.msra.mxu0 0.0
      %3806 = vmatprep.subr.mxu0 0.0
      %3807 = vmatpush1.msra.mxu0 0.0
      %3808 = vmatprep.subr.mxu0 0.0
      %3809 = vmatpush1.msra.mxu0 0.0
      %3810 = vmatprep.subr.mxu0 0.0
      %3811 = vmatpush1.msra.mxu0 0.0
      %3812 = vmatprep.subr.mxu0 0.0
      %3813 = vmatpush1.msra.mxu0 0.0
      %3814 = vmatprep.subr.mxu0 0.0
      %3815 = vmatpush1.msra.mxu0 0.0
      %3816 = vmatprep.subr.mxu0 0.0
      %3817 = vmatpush1.msra.mxu0 0.0
      %3818 = vmatprep.subr.mxu0 0.0
      %3819 = vmatpush1.msra.mxu0 0.0
      %3820 = vmatprep.subr.mxu0 0.0
      %3821 = vmatpush1.msra.mxu0 0.0
      %3822 = vmatprep.subr.mxu0 0.0
      %3823 = vmatpush1.msra.mxu0 0.0
      %3824 = vmatprep.subr.mxu0 0.0
      %3825 = vmatpush1.msra.mxu0 0.0
      %3826 = vmatprep.subr.mxu0 0.0
      %3827 = vmatpush1.msra.mxu0 0.0
      %3828 = vmatprep.subr.mxu0 0.0
      %3829 = vmatpush1.msra.mxu0 0.0
      %3830 = vmatprep.subr.mxu0 0.0
      %3831 = vmatpush1.msra.mxu0 0.0
      %3832 = vmatprep.subr.mxu0 0.0
      %3833 = vmatpush1.msra.mxu0 0.0
      %3834 = vmatprep.subr.mxu0 0.0
      %3835 = vmatpush1.msra.mxu0 0.0
      %3836 = vmatprep.subr.mxu0 0.0
      %3837 = vmatpush1.msra.mxu0 0.0
      %3838 = vmatprep.subr.mxu0 0.0
      %3839 = vmatpush1.msra.mxu0 0.0
      %3840 = vmatprep.subr.mxu0 0.0
      %3841 = vmatpush1.msra.mxu0 0.0
      %3842 = vmatprep.subr.mxu0 0.0
      %3843 = vmatpush1.msra.mxu0 0.0
      %3844 = vmatprep.subr.mxu0 0.0
      %3845 = vmatpush1.msra.mxu0 0.0
      %3846 = vmatprep.mubr.f32.mxu0 0.0
      %v3847 = vand.u32 %v3618, 4294901760
      %v3848 = vsub.f32 %v3618, %v3847
      %3849 = vmatmul.mubr.f32.gmra.mrb[0].mxu0 %v3848
      %v3850 = vpop.f32.mrb[0].mxu0
      %v3851 = vadd.f32 %v3775, %v3850
      %v3852 = vpop.f32.mrb[0].mxu0
      %3853 = vdwg.mxu0
      %3854 = vmatprep.subr.mxu0 0.0
      %v3855 = vand.u32 %v1254, 4294901760
      %3856 = vmatpush1.msra.mxu0 %v3855
      %3857 = vmatprep.subr.mxu0 0.0
      %v3858 = vand.u32 %v1255, 4294901760
      %3859 = vmatpush1.msra.mxu0 %v3858
      %3860 = vmatprep.subr.mxu0 0.0
      %3861 = vmatpush1.msra.mxu0 0.0
      %3862 = vmatprep.subr.mxu0 0.0
      %3863 = vmatpush1.msra.mxu0 0.0
      %3864 = vmatprep.subr.mxu0 0.0
      %3865 = vmatpush1.msra.mxu0 0.0
      %3866 = vmatprep.subr.mxu0 0.0
      %3867 = vmatpush1.msra.mxu0 0.0
      %3868 = vmatprep.subr.mxu0 0.0
      %3869 = vmatpush1.msra.mxu0 0.0
      %3870 = vmatprep.subr.mxu0 0.0
      %3871 = vmatpush1.msra.mxu0 0.0
      %3872 = vmatprep.subr.mxu0 0.0
      %3873 = vmatpush1.msra.mxu0 0.0
      %3874 = vmatprep.subr.mxu0 0.0
      %3875 = vmatpush1.msra.mxu0 0.0
      %3876 = vmatprep.subr.mxu0 0.0
      %3877 = vmatpush1.msra.mxu0 0.0
      %3878 = vmatprep.subr.mxu0 0.0
      %3879 = vmatpush1.msra.mxu0 0.0
      %3880 = vmatprep.subr.mxu0 0.0
      %3881 = vmatpush1.msra.mxu0 0.0
      %3882 = vmatprep.subr.mxu0 0.0
      %3883 = vmatpush1.msra.mxu0 0.0
      %3884 = vmatprep.subr.mxu0 0.0
      %3885 = vmatpush1.msra.mxu0 0.0
      %3886 = vmatprep.subr.mxu0 0.0
      %3887 = vmatpush1.msra.mxu0 0.0
      %3888 = vmatprep.subr.mxu0 0.0
      %3889 = vmatpush1.msra.mxu0 0.0
      %3890 = vmatprep.subr.mxu0 0.0
      %3891 = vmatpush1.msra.mxu0 0.0
      %3892 = vmatprep.subr.mxu0 0.0
      %3893 = vmatpush1.msra.mxu0 0.0
      %3894 = vmatprep.subr.mxu0 0.0
      %3895 = vmatpush1.msra.mxu0 0.0
      %3896 = vmatprep.subr.mxu0 0.0
      %3897 = vmatpush1.msra.mxu0 0.0
      %3898 = vmatprep.subr.mxu0 0.0
      %3899 = vmatpush1.msra.mxu0 0.0
      %3900 = vmatprep.subr.mxu0 0.0
      %3901 = vmatpush1.msra.mxu0 0.0
      %3902 = vmatprep.subr.mxu0 0.0
      %3903 = vmatpush1.msra.mxu0 0.0
      %3904 = vmatprep.subr.mxu0 0.0
      %3905 = vmatpush1.msra.mxu0 0.0
      %3906 = vmatprep.subr.mxu0 0.0
      %3907 = vmatpush1.msra.mxu0 0.0
      %3908 = vmatprep.subr.mxu0 0.0
      %3909 = vmatpush1.msra.mxu0 0.0
      %3910 = vmatprep.subr.mxu0 0.0
      %3911 = vmatpush1.msra.mxu0 0.0
      %3912 = vmatprep.subr.mxu0 0.0
      %3913 = vmatpush1.msra.mxu0 0.0
      %3914 = vmatprep.subr.mxu0 0.0
      %3915 = vmatpush1.msra.mxu0 0.0
      %3916 = vmatprep.subr.mxu0 0.0
      %3917 = vmatpush1.msra.mxu0 0.0
      %3918 = vmatprep.subr.mxu0 0.0
      %3919 = vmatpush1.msra.mxu0 0.0
      %3920 = vmatprep.mubr.f32.mxu0 0.0
      %v3921 = vand.u32 %v3618, 4294901760
      %v3922 = vsub.f32 %v3618, %v3921
      %v3923 = vand.u32 %v3922, 4294901760
      %3924 = vmatmul.mubr.f32.gmra.mrb[0].mxu0 %v3923
      %v3925 = vpop.f32.mrb[0].mxu0
      %v3926 = vadd.f32 %v3851, %v3925
      %v3927 = vpop.f32.mrb[0].mxu0
      %3928 = vdwg.mxu0
      %3929 = vmatprep.subr.mxu0 0.0
      %v3930 = vand.u32 %v1254, 4294901760
      %v3931 = vsub.f32 %v1254, %v3930
      %v3932 = vand.u32 %v3931, 4294901760
      %3933 = vmatpush1.msra.mxu0 %v3932
      %3934 = vmatprep.subr.mxu0 0.0
      %v3935 = vand.u32 %v1255, 4294901760
      %v3936 = vsub.f32 %v1255, %v3935
      %v3937 = vand.u32 %v3936, 4294901760
      %3938 = vmatpush1.msra.mxu0 %v3937
      %3939 = vmatprep.subr.mxu0 0.0
      %3940 = vmatpush1.msra.mxu0 0.0
      %3941 = vmatprep.subr.mxu0 0.0
      %3942 = vmatpush1.msra.mxu0 0.0
      %3943 = vmatprep.subr.mxu0 0.0
      %3944 = vmatpush1.msra.mxu0 0.0
      %3945 = vmatprep.subr.mxu0 0.0
      %3946 = vmatpush1.msra.mxu0 0.0
      %3947 = vmatprep.subr.mxu0 0.0
      %3948 = vmatpush1.msra.mxu0 0.0
      %3949 = vmatprep.subr.mxu0 0.0
      %3950 = vmatpush1.msra.mxu0 0.0
      %3951 = vmatprep.subr.mxu0 0.0
      %3952 = vmatpush1.msra.mxu0 0.0
      %3953 = vmatprep.subr.mxu0 0.0
      %3954 = vmatpush1.msra.mxu0 0.0
      %3955 = vmatprep.subr.mxu0 0.0
      %3956 = vmatpush1.msra.mxu0 0.0
      %3957 = vmatprep.subr.mxu0 0.0
      %3958 = vmatpush1.msra.mxu0 0.0
      %3959 = vmatprep.subr.mxu0 0.0
      %3960 = vmatpush1.msra.mxu0 0.0
      %3961 = vmatprep.subr.mxu0 0.0
      %3962 = vmatpush1.msra.mxu0 0.0
      %3963 = vmatprep.subr.mxu0 0.0
      %3964 = vmatpush1.msra.mxu0 0.0
      %3965 = vmatprep.subr.mxu0 0.0
      %3966 = vmatpush1.msra.mxu0 0.0
      %3967 = vmatprep.subr.mxu0 0.0
      %3968 = vmatpush1.msra.mxu0 0.0
      %3969 = vmatprep.subr.mxu0 0.0
      %3970 = vmatpush1.msra.mxu0 0.0
      %3971 = vmatprep.subr.mxu0 0.0
      %3972 = vmatpush1.msra.mxu0 0.0
      %3973 = vmatprep.subr.mxu0 0.0
      %3974 = vmatpush1.msra.mxu0 0.0
      %3975 = vmatprep.subr.mxu0 0.0
      %3976 = vmatpush1.msra.mxu0 0.0
      %3977 = vmatprep.subr.mxu0 0.0
      %3978 = vmatpush1.msra.mxu0 0.0
      %3979 = vmatprep.subr.mxu0 0.0
      %3980 = vmatpush1.msra.mxu0 0.0
      %3981 = vmatprep.subr.mxu0 0.0
      %3982 = vmatpush1.msra.mxu0 0.0
      %3983 = vmatprep.subr.mxu0 0.0
      %3984 = vmatpush1.msra.mxu0 0.0
      %3985 = vmatprep.subr.mxu0 0.0
      %3986 = vmatpush1.msra.mxu0 0.0
      %3987 = vmatprep.subr.mxu0 0.0
      %3988 = vmatpush1.msra.mxu0 0.0
      %3989 = vmatprep.subr.mxu0 0.0
      %3990 = vmatpush1.msra.mxu0 0.0
      %3991 = vmatprep.subr.mxu0 0.0
      %3992 = vmatpush1.msra.mxu0 0.0
      %3993 = vmatprep.subr.mxu0 0.0
      %3994 = vmatpush1.msra.mxu0 0.0
      %3995 = vmatprep.subr.mxu0 0.0
      %3996 = vmatpush1.msra.mxu0 0.0
      %3997 = vmatprep.subr.mxu0 0.0
      %3998 = vmatpush1.msra.mxu0 0.0
      %3999 = vmatprep.mubr.f32.mxu0 0.0
      %v4000 = vand.u32 %v3618, 4294901760
      %4001 = vmatmul.mubr.f32.gmra.mrb[0].mxu0 %v4000
      %v4002 = vpop.f32.mrb[0].mxu0
      %v4003 = vadd.f32 %v3926, %v4002
      %v4004 = vpop.f32.mrb[0].mxu0
      %4005 = vdwg.mxu0
      %4006 = vmatprep.subr.mxu0 0.0
      %v4007 = vand.u32 %v1254, 4294901760
      %4008 = vmatpush1.msra.mxu0 %v4007
      %4009 = vmatprep.subr.mxu0 0.0
      %v4010 = vand.u32 %v1255, 4294901760
      %4011 = vmatpush1.msra.mxu0 %v4010
      %4012 = vmatprep.subr.mxu0 0.0
      %4013 = vmatpush1.msra.mxu0 0.0
      %4014 = vmatprep.subr.mxu0 0.0
      %4015 = vmatpush1.msra.mxu0 0.0
      %4016 = vmatprep.subr.mxu0 0.0
      %4017 = vmatpush1.msra.mxu0 0.0
      %4018 = vmatprep.subr.mxu0 0.0
      %4019 = vmatpush1.msra.mxu0 0.0
      %4020 = vmatprep.subr.mxu0 0.0
      %4021 = vmatpush1.msra.mxu0 0.0
      %4022 = vmatprep.subr.mxu0 0.0
      %4023 = vmatpush1.msra.mxu0 0.0
      %4024 = vmatprep.subr.mxu0 0.0
      %4025 = vmatpush1.msra.mxu0 0.0
      %4026 = vmatprep.subr.mxu0 0.0
      %4027 = vmatpush1.msra.mxu0 0.0
      %4028 = vmatprep.subr.mxu0 0.0
      %4029 = vmatpush1.msra.mxu0 0.0
      %4030 = vmatprep.subr.mxu0 0.0
      %4031 = vmatpush1.msra.mxu0 0.0
      %4032 = vmatprep.subr.mxu0 0.0
      %4033 = vmatpush1.msra.mxu0 0.0
      %4034 = vmatprep.subr.mxu0 0.0
      %4035 = vmatpush1.msra.mxu0 0.0
      %4036 = vmatprep.subr.mxu0 0.0
      %4037 = vmatpush1.msra.mxu0 0.0
      %4038 = vmatprep.subr.mxu0 0.0
      %4039 = vmatpush1.msra.mxu0 0.0
      %4040 = vmatprep.subr.mxu0 0.0
      %4041 = vmatpush1.msra.mxu0 0.0
      %4042 = vmatprep.subr.mxu0 0.0
      %4043 = vmatpush1.msra.mxu0 0.0
      %4044 = vmatprep.subr.mxu0 0.0
      %4045 = vmatpush1.msra.mxu0 0.0
      %4046 = vmatprep.subr.mxu0 0.0
      %4047 = vmatpush1.msra.mxu0 0.0
      %4048 = vmatprep.subr.mxu0 0.0
      %4049 = vmatpush1.msra.mxu0 0.0
      %4050 = vmatprep.subr.mxu0 0.0
      %4051 = vmatpush1.msra.mxu0 0.0
      %4052 = vmatprep.subr.mxu0 0.0
      %4053 = vmatpush1.msra.mxu0 0.0
      %4054 = vmatprep.subr.mxu0 0.0
      %4055 = vmatpush1.msra.mxu0 0.0
      %4056 = vmatprep.subr.mxu0 0.0
      %4057 = vmatpush1.msra.mxu0 0.0
      %4058 = vmatprep.subr.mxu0 0.0
      %4059 = vmatpush1.msra.mxu0 0.0
      %4060 = vmatprep.subr.mxu0 0.0
      %4061 = vmatpush1.msra.mxu0 0.0
      %4062 = vmatprep.subr.mxu0 0.0
      %4063 = vmatpush1.msra.mxu0 0.0
      %4064 = vmatprep.subr.mxu0 0.0
      %4065 = vmatpush1.msra.mxu0 0.0
      %4066 = vmatprep.subr.mxu0 0.0
      %4067 = vmatpush1.msra.mxu0 0.0
      %4068 = vmatprep.subr.mxu0 0.0
      %4069 = vmatpush1.msra.mxu0 0.0
      %4070 = vmatprep.subr.mxu0 0.0
      %4071 = vmatpush1.msra.mxu0 0.0
      %4072 = vmatprep.mubr.f32.mxu0 0.0
      %v4073 = vand.u32 %v3618, 4294901760
      %4074 = vmatmul.mubr.f32.gmra.mrb[0].mxu0 %v4073
      %v4075 = vpop.f32.mrb[0].mxu0
      %v4076 = vadd.f32 %v4003, %v4075
      %v4077 = vpop.f32.mrb[0].mxu0
      %4078 = vdwg.mxu0
      %4080 = vrot.lane.b32.xlu0 %v4076, 40
      %v4081 = vpop.permute.xlu0 %4080
      %vm4083 = vcmask 392512
      %4084 = vst.msk [vmem:[%s330] sm:$0xff] %vm4083, %v4081
      %4086 = vrot.lane.b32.xlu0 %v1253, 110
      %v4087 = vpop.permute.xlu0 %4086
      %vm4088 = vcmask 900096
      %v4089 = vsel %vm4088, %v2668, %v4087
      %v4091 = vadd.f32 %v1252, %v4089
      %4093 = vrot.lane.b32.xlu0 %v4091, 21
      %v4094 = vpop.permute.xlu0 %4093
      %v4095 = vsel %vm1264, %v4094, 0
      %4097 = vmatprep.subr.mxu0 0.0
      %v4098 = vand.u32 %v1254, 4294901760
      %4099 = vmatpush1.msra.mxu0 %v4098
      %4100 = vmatprep.subr.mxu0 0.0
      %v4101 = vand.u32 %v1255, 4294901760
      %4102 = vmatpush1.msra.mxu0 %v4101
      %4103 = vmatprep.subr.mxu0 0.0
      %4104 = vmatpush1.msra.mxu0 0.0
      %4105 = vmatprep.subr.mxu0 0.0
      %4106 = vmatpush1.msra.mxu0 0.0
      %4107 = vmatprep.subr.mxu0 0.0
      %4108 = vmatpush1.msra.mxu0 0.0
      %4109 = vmatprep.subr.mxu0 0.0
      %4110 = vmatpush1.msra.mxu0 0.0
      %4111 = vmatprep.subr.mxu0 0.0
      %4112 = vmatpush1.msra.mxu0 0.0
      %4113 = vmatprep.subr.mxu0 0.0
      %4114 = vmatpush1.msra.mxu0 0.0
      %4115 = vmatprep.subr.mxu0 0.0
      %4116 = vmatpush1.msra.mxu0 0.0
      %4117 = vmatprep.subr.mxu0 0.0
      %4118 = vmatpush1.msra.mxu0 0.0
      %4119 = vmatprep.subr.mxu0 0.0
      %4120 = vmatpush1.msra.mxu0 0.0
      %4121 = vmatprep.subr.mxu0 0.0
      %4122 = vmatpush1.msra.mxu0 0.0
      %4123 = vmatprep.subr.mxu0 0.0
      %4124 = vmatpush1.msra.mxu0 0.0
      %4125 = vmatprep.subr.mxu0 0.0
      %4126 = vmatpush1.msra.mxu0 0.0
      %4127 = vmatprep.subr.mxu0 0.0
      %4128 = vmatpush1.msra.mxu0 0.0
      %4129 = vmatprep.subr.mxu0 0.0
      %4130 = vmatpush1.msra.mxu0 0.0
      %4131 = vmatprep.subr.mxu0 0.0
      %4132 = vmatpush1.msra.mxu0 0.0
      %4133 = vmatprep.subr.mxu0 0.0
      %4134 = vmatpush1.msra.mxu0 0.0
      %4135 = vmatprep.subr.mxu0 0.0
      %4136 = vmatpush1.msra.mxu0 0.0
      %4137 = vmatprep.subr.mxu0 0.0
      %4138 = vmatpush1.msra.mxu0 0.0
      %4139 = vmatprep.subr.mxu0 0.0
      %4140 = vmatpush1.msra.mxu0 0.0
      %4141 = vmatprep.subr.mxu0 0.0
      %4142 = vmatpush1.msra.mxu0 0.0
      %4143 = vmatprep.subr.mxu0 0.0
      %4144 = vmatpush1.msra.mxu0 0.0
      %4145 = vmatprep.subr.mxu0 0.0
      %4146 = vmatpush1.msra.mxu0 0.0
      %4147 = vmatprep.subr.mxu0 0.0
      %4148 = vmatpush1.msra.mxu0 0.0
      %4149 = vmatprep.subr.mxu0 0.0
      %4150 = vmatpush1.msra.mxu0 0.0
      %4151 = vmatprep.subr.mxu0 0.0
      %4152 = vmatpush1.msra.mxu0 0.0
      %4153 = vmatprep.subr.mxu0 0.0
      %4154 = vmatpush1.msra.mxu0 0.0
      %4155 = vmatprep.subr.mxu0 0.0
      %4156 = vmatpush1.msra.mxu0 0.0
      %4157 = vmatprep.subr.mxu0 0.0
      %4158 = vmatpush1.msra.mxu0 0.0
      %4159 = vmatprep.subr.mxu0 0.0
      %4160 = vmatpush1.msra.mxu0 0.0
      %4161 = vmatprep.subr.mxu0 0.0
      %4162 = vmatpush1.msra.mxu0 0.0
      %4163 = vmatprep.mubr.f32.mxu0 0.0
      %v4164 = vand.u32 %v4095, 4294901760
      %v4165 = vsub.f32 %v4095, %v4164
      %v4166 = vand.u32 %v4165, 4294901760
      %v4167 = vsub.f32 %v4165, %v4166
      %v4168 = vand.u32 %v4167, 4294901760
      %4169 = vmatmul.mubr.f32.gmra.mrb[0].mxu0 %v4168
      %v4170 = vpop.f32.mrb[0].mxu0
      %v4171 = vadd.f32 0.0, %v4170
      %v4172 = vpop.f32.mrb[0].mxu0
      %4173 = vdwg.mxu0
      %4174 = vmatprep.subr.mxu0 0.0
      %v4175 = vand.u32 %v1254, 4294901760
      %v4176 = vsub.f32 %v1254, %v4175
      %v4177 = vand.u32 %v4176, 4294901760
      %v4178 = vsub.f32 %v4176, %v4177
      %v4179 = vand.u32 %v4178, 4294901760
      %4180 = vmatpush1.msra.mxu0 %v4179
      %4181 = vmatprep.subr.mxu0 0.0
      %v4182 = vand.u32 %v1255, 4294901760
      %v4183 = vsub.f32 %v1255, %v4182
      %v4184 = vand.u32 %v4183, 4294901760
      %v4185 = vsub.f32 %v4183, %v4184
      %v4186 = vand.u32 %v4185, 4294901760
      %4187 = vmatpush1.msra.mxu0 %v4186
      %4188 = vmatprep.subr.mxu0 0.0
      %4189 = vmatpush1.msra.mxu0 0.0
      %4190 = vmatprep.subr.mxu0 0.0
      %4191 = vmatpush1.msra.mxu0 0.0
      %4192 = vmatprep.subr.mxu0 0.0
      %4193 = vmatpush1.msra.mxu0 0.0
      %4194 = vmatprep.subr.mxu0 0.0
      %4195 = vmatpush1.msra.mxu0 0.0
      %4196 = vmatprep.subr.mxu0 0.0
      %4197 = vmatpush1.msra.mxu0 0.0
      %4198 = vmatprep.subr.mxu0 0.0
      %4199 = vmatpush1.msra.mxu0 0.0
      %4200 = vmatprep.subr.mxu0 0.0
      %4201 = vmatpush1.msra.mxu0 0.0
      %4202 = vmatprep.subr.mxu0 0.0
      %4203 = vmatpush1.msra.mxu0 0.0
      %4204 = vmatprep.subr.mxu0 0.0
      %4205 = vmatpush1.msra.mxu0 0.0
      %4206 = vmatprep.subr.mxu0 0.0
      %4207 = vmatpush1.msra.mxu0 0.0
      %4208 = vmatprep.subr.mxu0 0.0
      %4209 = vmatpush1.msra.mxu0 0.0
      %4210 = vmatprep.subr.mxu0 0.0
      %4211 = vmatpush1.msra.mxu0 0.0
      %4212 = vmatprep.subr.mxu0 0.0
      %4213 = vmatpush1.msra.mxu0 0.0
      %4214 = vmatprep.subr.mxu0 0.0
      %4215 = vmatpush1.msra.mxu0 0.0
      %4216 = vmatprep.subr.mxu0 0.0
      %4217 = vmatpush1.msra.mxu0 0.0
      %4218 = vmatprep.subr.mxu0 0.0
      %4219 = vmatpush1.msra.mxu0 0.0
      %4220 = vmatprep.subr.mxu0 0.0
      %4221 = vmatpush1.msra.mxu0 0.0
      %4222 = vmatprep.subr.mxu0 0.0
      %4223 = vmatpush1.msra.mxu0 0.0
      %4224 = vmatprep.subr.mxu0 0.0
      %4225 = vmatpush1.msra.mxu0 0.0
      %4226 = vmatprep.subr.mxu0 0.0
      %4227 = vmatpush1.msra.mxu0 0.0
      %4228 = vmatprep.subr.mxu0 0.0
      %4229 = vmatpush1.msra.mxu0 0.0
      %4230 = vmatprep.subr.mxu0 0.0
      %4231 = vmatpush1.msra.mxu0 0.0
      %4232 = vmatprep.subr.mxu0 0.0
      %4233 = vmatpush1.msra.mxu0 0.0
      %4234 = vmatprep.subr.mxu0 0.0
      %4235 = vmatpush1.msra.mxu0 0.0
      %4236 = vmatprep.subr.mxu0 0.0
      %4237 = vmatpush1.msra.mxu0 0.0
      %4238 = vmatprep.subr.mxu0 0.0
      %4239 = vmatpush1.msra.mxu0 0.0
      %4240 = vmatprep.subr.mxu0 0.0
      %4241 = vmatpush1.msra.mxu0 0.0
      %4242 = vmatprep.subr.mxu0 0.0
      %4243 = vmatpush1.msra.mxu0 0.0
      %4244 = vmatprep.subr.mxu0 0.0
      %4245 = vmatpush1.msra.mxu0 0.0
      %4246 = vmatprep.subr.mxu0 0.0
      %4247 = vmatpush1.msra.mxu0 0.0
      %4248 = vmatprep.mubr.f32.mxu0 0.0
      %v4249 = vand.u32 %v4095, 4294901760
      %4250 = vmatmul.mubr.f32.gmra.mrb[0].mxu0 %v4249
      %v4251 = vpop.f32.mrb[0].mxu0
      %v4252 = vadd.f32 %v4171, %v4251
      %v4253 = vpop.f32.mrb[0].mxu0
      %4254 = vdwg.mxu0
      %4255 = vmatprep.subr.mxu0 0.0
      %v4256 = vand.u32 %v1254, 4294901760
      %v4257 = vsub.f32 %v1254, %v4256
      %4258 = vmatpush1.msra.mxu0 %v4257
      %4259 = vmatprep.subr.mxu0 0.0
      %v4260 = vand.u32 %v1255, 4294901760
      %v4261 = vsub.f32 %v1255, %v4260
      %4262 = vmatpush1.msra.mxu0 %v4261
      %4263 = vmatprep.subr.mxu0 0.0
      %4264 = vmatpush1.msra.mxu0 0.0
      %4265 = vmatprep.subr.mxu0 0.0
      %4266 = vmatpush1.msra.mxu0 0.0
      %4267 = vmatprep.subr.mxu0 0.0
      %4268 = vmatpush1.msra.mxu0 0.0
      %4269 = vmatprep.subr.mxu0 0.0
      %4270 = vmatpush1.msra.mxu0 0.0
      %4271 = vmatprep.subr.mxu0 0.0
      %4272 = vmatpush1.msra.mxu0 0.0
      %4273 = vmatprep.subr.mxu0 0.0
      %4274 = vmatpush1.msra.mxu0 0.0
      %4275 = vmatprep.subr.mxu0 0.0
      %4276 = vmatpush1.msra.mxu0 0.0
      %4277 = vmatprep.subr.mxu0 0.0
      %4278 = vmatpush1.msra.mxu0 0.0
      %4279 = vmatprep.subr.mxu0 0.0
      %4280 = vmatpush1.msra.mxu0 0.0
      %4281 = vmatprep.subr.mxu0 0.0
      %4282 = vmatpush1.msra.mxu0 0.0
      %4283 = vmatprep.subr.mxu0 0.0
      %4284 = vmatpush1.msra.mxu0 0.0
      %4285 = vmatprep.subr.mxu0 0.0
      %4286 = vmatpush1.msra.mxu0 0.0
      %4287 = vmatprep.subr.mxu0 0.0
      %4288 = vmatpush1.msra.mxu0 0.0
      %4289 = vmatprep.subr.mxu0 0.0
      %4290 = vmatpush1.msra.mxu0 0.0
      %4291 = vmatprep.subr.mxu0 0.0
      %4292 = vmatpush1.msra.mxu0 0.0
      %4293 = vmatprep.subr.mxu0 0.0
      %4294 = vmatpush1.msra.mxu0 0.0
      %4295 = vmatprep.subr.mxu0 0.0
      %4296 = vmatpush1.msra.mxu0 0.0
      %4297 = vmatprep.subr.mxu0 0.0
      %4298 = vmatpush1.msra.mxu0 0.0
      %4299 = vmatprep.subr.mxu0 0.0
      %4300 = vmatpush1.msra.mxu0 0.0
      %4301 = vmatprep.subr.mxu0 0.0
      %4302 = vmatpush1.msra.mxu0 0.0
      %4303 = vmatprep.subr.mxu0 0.0
      %4304 = vmatpush1.msra.mxu0 0.0
      %4305 = vmatprep.subr.mxu0 0.0
      %4306 = vmatpush1.msra.mxu0 0.0
      %4307 = vmatprep.subr.mxu0 0.0
      %4308 = vmatpush1.msra.mxu0 0.0
      %4309 = vmatprep.subr.mxu0 0.0
      %4310 = vmatpush1.msra.mxu0 0.0
      %4311 = vmatprep.subr.mxu0 0.0
      %4312 = vmatpush1.msra.mxu0 0.0
      %4313 = vmatprep.subr.mxu0 0.0
      %4314 = vmatpush1.msra.mxu0 0.0
      %4315 = vmatprep.subr.mxu0 0.0
      %4316 = vmatpush1.msra.mxu0 0.0
      %4317 = vmatprep.subr.mxu0 0.0
      %4318 = vmatpush1.msra.mxu0 0.0
      %4319 = vmatprep.subr.mxu0 0.0
      %4320 = vmatpush1.msra.mxu0 0.0
      %4321 = vmatprep.subr.mxu0 0.0
      %4322 = vmatpush1.msra.mxu0 0.0
      %4323 = vmatprep.mubr.f32.mxu0 0.0
      %v4324 = vand.u32 %v4095, 4294901760
      %v4325 = vsub.f32 %v4095, %v4324
      %4326 = vmatmul.mubr.f32.gmra.mrb[0].mxu0 %v4325
      %v4327 = vpop.f32.mrb[0].mxu0
      %v4328 = vadd.f32 %v4252, %v4327
      %v4329 = vpop.f32.mrb[0].mxu0
      %4330 = vdwg.mxu0
      %4331 = vmatprep.subr.mxu0 0.0
      %v4332 = vand.u32 %v1254, 4294901760
      %4333 = vmatpush1.msra.mxu0 %v4332
      %4334 = vmatprep.subr.mxu0 0.0
      %v4335 = vand.u32 %v1255, 4294901760
      %4336 = vmatpush1.msra.mxu0 %v4335
      %4337 = vmatprep.subr.mxu0 0.0
      %4338 = vmatpush1.msra.mxu0 0.0
      %4339 = vmatprep.subr.mxu0 0.0
      %4340 = vmatpush1.msra.mxu0 0.0
      %4341 = vmatprep.subr.mxu0 0.0
      %4342 = vmatpush1.msra.mxu0 0.0
      %4343 = vmatprep.subr.mxu0 0.0
      %4344 = vmatpush1.msra.mxu0 0.0
      %4345 = vmatprep.subr.mxu0 0.0
      %4346 = vmatpush1.msra.mxu0 0.0
      %4347 = vmatprep.subr.mxu0 0.0
      %4348 = vmatpush1.msra.mxu0 0.0
      %4349 = vmatprep.subr.mxu0 0.0
      %4350 = vmatpush1.msra.mxu0 0.0
      %4351 = vmatprep.subr.mxu0 0.0
      %4352 = vmatpush1.msra.mxu0 0.0
      %4353 = vmatprep.subr.mxu0 0.0
      %4354 = vmatpush1.msra.mxu0 0.0
      %4355 = vmatprep.subr.mxu0 0.0
      %4356 = vmatpush1.msra.mxu0 0.0
      %4357 = vmatprep.subr.mxu0 0.0
      %4358 = vmatpush1.msra.mxu0 0.0
      %4359 = vmatprep.subr.mxu0 0.0
      %4360 = vmatpush1.msra.mxu0 0.0
      %4361 = vmatprep.subr.mxu0 0.0
      %4362 = vmatpush1.msra.mxu0 0.0
      %4363 = vmatprep.subr.mxu0 0.0
      %4364 = vmatpush1.msra.mxu0 0.0
      %4365 = vmatprep.subr.mxu0 0.0
      %4366 = vmatpush1.msra.mxu0 0.0
      %4367 = vmatprep.subr.mxu0 0.0
      %4368 = vmatpush1.msra.mxu0 0.0
      %4369 = vmatprep.subr.mxu0 0.0
      %4370 = vmatpush1.msra.mxu0 0.0
      %4371 = vmatprep.subr.mxu0 0.0
      %4372 = vmatpush1.msra.mxu0 0.0
      %4373 = vmatprep.subr.mxu0 0.0
      %4374 = vmatpush1.msra.mxu0 0.0
      %4375 = vmatprep.subr.mxu0 0.0
      %4376 = vmatpush1.msra.mxu0 0.0
      %4377 = vmatprep.subr.mxu0 0.0
      %4378 = vmatpush1.msra.mxu0 0.0
      %4379 = vmatprep.subr.mxu0 0.0
      %4380 = vmatpush1.msra.mxu0 0.0
      %4381 = vmatprep.subr.mxu0 0.0
      %4382 = vmatpush1.msra.mxu0 0.0
      %4383 = vmatprep.subr.mxu0 0.0
      %4384 = vmatpush1.msra.mxu0 0.0
      %4385 = vmatprep.subr.mxu0 0.0
      %4386 = vmatpush1.msra.mxu0 0.0
      %4387 = vmatprep.subr.mxu0 0.0
      %4388 = vmatpush1.msra.mxu0 0.0
      %4389 = vmatprep.subr.mxu0 0.0
      %4390 = vmatpush1.msra.mxu0 0.0
      %4391 = vmatprep.subr.mxu0 0.0
      %4392 = vmatpush1.msra.mxu0 0.0
      %4393 = vmatprep.subr.mxu0 0.0
      %4394 = vmatpush1.msra.mxu0 0.0
      %4395 = vmatprep.subr.mxu0 0.0
      %4396 = vmatpush1.msra.mxu0 0.0
      %4397 = vmatprep.mubr.f32.mxu0 0.0
      %v4398 = vand.u32 %v4095, 4294901760
      %v4399 = vsub.f32 %v4095, %v4398
      %v4400 = vand.u32 %v4399, 4294901760
      %4401 = vmatmul.mubr.f32.gmra.mrb[0].mxu0 %v4400
      %v4402 = vpop.f32.mrb[0].mxu0
      %v4403 = vadd.f32 %v4328, %v4402
      %v4404 = vpop.f32.mrb[0].mxu0
      %4405 = vdwg.mxu0
      %4406 = vmatprep.subr.mxu0 0.0
      %v4407 = vand.u32 %v1254, 4294901760
      %v4408 = vsub.f32 %v1254, %v4407
      %v4409 = vand.u32 %v4408, 4294901760
      %4410 = vmatpush1.msra.mxu0 %v4409
      %4411 = vmatprep.subr.mxu0 0.0
      %v4412 = vand.u32 %v1255, 4294901760
      %v4413 = vsub.f32 %v1255, %v4412
      %v4414 = vand.u32 %v4413, 4294901760
      %4415 = vmatpush1.msra.mxu0 %v4414
      %4416 = vmatprep.subr.mxu0 0.0
      %4417 = vmatpush1.msra.mxu0 0.0
      %4418 = vmatprep.subr.mxu0 0.0
      %4419 = vmatpush1.msra.mxu0 0.0
      %4420 = vmatprep.subr.mxu0 0.0
      %4421 = vmatpush1.msra.mxu0 0.0
      %4422 = vmatprep.subr.mxu0 0.0
      %4423 = vmatpush1.msra.mxu0 0.0
      %4424 = vmatprep.subr.mxu0 0.0
      %4425 = vmatpush1.msra.mxu0 0.0
      %4426 = vmatprep.subr.mxu0 0.0
      %4427 = vmatpush1.msra.mxu0 0.0
      %4428 = vmatprep.subr.mxu0 0.0
      %4429 = vmatpush1.msra.mxu0 0.0
      %4430 = vmatprep.subr.mxu0 0.0
      %4431 = vmatpush1.msra.mxu0 0.0
      %4432 = vmatprep.subr.mxu0 0.0
      %4433 = vmatpush1.msra.mxu0 0.0
      %4434 = vmatprep.subr.mxu0 0.0
      %4435 = vmatpush1.msra.mxu0 0.0
      %4436 = vmatprep.subr.mxu0 0.0
      %4437 = vmatpush1.msra.mxu0 0.0
      %4438 = vmatprep.subr.mxu0 0.0
      %4439 = vmatpush1.msra.mxu0 0.0
      %4440 = vmatprep.subr.mxu0 0.0
      %4441 = vmatpush1.msra.mxu0 0.0
      %4442 = vmatprep.subr.mxu0 0.0
      %4443 = vmatpush1.msra.mxu0 0.0
      %4444 = vmatprep.subr.mxu0 0.0
      %4445 = vmatpush1.msra.mxu0 0.0
      %4446 = vmatprep.subr.mxu0 0.0
      %4447 = vmatpush1.msra.mxu0 0.0
      %4448 = vmatprep.subr.mxu0 0.0
      %4449 = vmatpush1.msra.mxu0 0.0
      %4450 = vmatprep.subr.mxu0 0.0
      %4451 = vmatpush1.msra.mxu0 0.0
      %4452 = vmatprep.subr.mxu0 0.0
      %4453 = vmatpush1.msra.mxu0 0.0
      %4454 = vmatprep.subr.mxu0 0.0
      %4455 = vmatpush1.msra.mxu0 0.0
      %4456 = vmatprep.subr.mxu0 0.0
      %4457 = vmatpush1.msra.mxu0 0.0
      %4458 = vmatprep.subr.mxu0 0.0
      %4459 = vmatpush1.msra.mxu0 0.0
      %4460 = vmatprep.subr.mxu0 0.0
      %4461 = vmatpush1.msra.mxu0 0.0
      %4462 = vmatprep.subr.mxu0 0.0
      %4463 = vmatpush1.msra.mxu0 0.0
      %4464 = vmatprep.subr.mxu0 0.0
      %4465 = vmatpush1.msra.mxu0 0.0
      %4466 = vmatprep.subr.mxu0 0.0
      %4467 = vmatpush1.msra.mxu0 0.0
      %4468 = vmatprep.subr.mxu0 0.0
      %4469 = vmatpush1.msra.mxu0 0.0
      %4470 = vmatprep.subr.mxu0 0.0
      %4471 = vmatpush1.msra.mxu0 0.0
      %4472 = vmatprep.subr.mxu0 0.0
      %4473 = vmatpush1.msra.mxu0 0.0
      %4474 = vmatprep.subr.mxu0 0.0
      %4475 = vmatpush1.msra.mxu0 0.0
      %4476 = vmatprep.mubr.f32.mxu0 0.0
      %v4477 = vand.u32 %v4095, 4294901760
      %4478 = vmatmul.mubr.f32.gmra.mrb[0].mxu0 %v4477
      %v4479 = vpop.f32.mrb[0].mxu0
      %v4480 = vadd.f32 %v4403, %v4479
      %v4481 = vpop.f32.mrb[0].mxu0
      %4482 = vdwg.mxu0
      %4483 = vmatprep.subr.mxu0 0.0
      %v4484 = vand.u32 %v1254, 4294901760
      %4485 = vmatpush1.msra.mxu0 %v4484
      %4486 = vmatprep.subr.mxu0 0.0
      %v4487 = vand.u32 %v1255, 4294901760
      %4488 = vmatpush1.msra.mxu0 %v4487
      %4489 = vmatprep.subr.mxu0 0.0
      %4490 = vmatpush1.msra.mxu0 0.0
      %4491 = vmatprep.subr.mxu0 0.0
      %4492 = vmatpush1.msra.mxu0 0.0
      %4493 = vmatprep.subr.mxu0 0.0
      %4494 = vmatpush1.msra.mxu0 0.0
      %4495 = vmatprep.subr.mxu0 0.0
      %4496 = vmatpush1.msra.mxu0 0.0
      %4497 = vmatprep.subr.mxu0 0.0
      %4498 = vmatpush1.msra.mxu0 0.0
      %4499 = vmatprep.subr.mxu0 0.0
      %4500 = vmatpush1.msra.mxu0 0.0
      %4501 = vmatprep.subr.mxu0 0.0
      %4502 = vmatpush1.msra.mxu0 0.0
      %4503 = vmatprep.subr.mxu0 0.0
      %4504 = vmatpush1.msra.mxu0 0.0
      %4505 = vmatprep.subr.mxu0 0.0
      %4506 = vmatpush1.msra.mxu0 0.0
      %4507 = vmatprep.subr.mxu0 0.0
      %4508 = vmatpush1.msra.mxu0 0.0
      %4509 = vmatprep.subr.mxu0 0.0
      %4510 = vmatpush1.msra.mxu0 0.0
      %4511 = vmatprep.subr.mxu0 0.0
      %4512 = vmatpush1.msra.mxu0 0.0
      %4513 = vmatprep.subr.mxu0 0.0
      %4514 = vmatpush1.msra.mxu0 0.0
      %4515 = vmatprep.subr.mxu0 0.0
      %4516 = vmatpush1.msra.mxu0 0.0
      %4517 = vmatprep.subr.mxu0 0.0
      %4518 = vmatpush1.msra.mxu0 0.0
      %4519 = vmatprep.subr.mxu0 0.0
      %4520 = vmatpush1.msra.mxu0 0.0
      %4521 = vmatprep.subr.mxu0 0.0
      %4522 = vmatpush1.msra.mxu0 0.0
      %4523 = vmatprep.subr.mxu0 0.0
      %4524 = vmatpush1.msra.mxu0 0.0
      %4525 = vmatprep.subr.mxu0 0.0
      %4526 = vmatpush1.msra.mxu0 0.0
      %4527 = vmatprep.subr.mxu0 0.0
      %4528 = vmatpush1.msra.mxu0 0.0
      %4529 = vmatprep.subr.mxu0 0.0
      %4530 = vmatpush1.msra.mxu0 0.0
      %4531 = vmatprep.subr.mxu0 0.0
      %4532 = vmatpush1.msra.mxu0 0.0
      %4533 = vmatprep.subr.mxu0 0.0
      %4534 = vmatpush1.msra.mxu0 0.0
      %4535 = vmatprep.subr.mxu0 0.0
      %4536 = vmatpush1.msra.mxu0 0.0
      %4537 = vmatprep.subr.mxu0 0.0
      %4538 = vmatpush1.msra.mxu0 0.0
      %4539 = vmatprep.subr.mxu0 0.0
      %4540 = vmatpush1.msra.mxu0 0.0
      %4541 = vmatprep.subr.mxu0 0.0
      %4542 = vmatpush1.msra.mxu0 0.0
      %4543 = vmatprep.subr.mxu0 0.0
      %4544 = vmatpush1.msra.mxu0 0.0
      %4545 = vmatprep.subr.mxu0 0.0
      %4546 = vmatpush1.msra.mxu0 0.0
      %4547 = vmatprep.subr.mxu0 0.0
      %4548 = vmatpush1.msra.mxu0 0.0
      %4549 = vmatprep.mubr.f32.mxu0 0.0
      %v4550 = vand.u32 %v4095, 4294901760
      %4551 = vmatmul.mubr.f32.gmra.mrb[0].mxu0 %v4550
      %v4552 = vpop.f32.mrb[0].mxu0
      %v4553 = vadd.f32 %v4480, %v4552
      %v4554 = vpop.f32.mrb[0].mxu0
      %4555 = vdwg.mxu0
      %4557 = vrot.lane.b32.xlu0 %v4553, 48
      %v4558 = vpop.permute.xlu0 %4557
      %vm4560 = vcmask 458112
      %4561 = vst.msk [vmem:[%s330] sm:$0xff] %vm4560, %v4558
      %v4563 = vadd.f32 %v1253, %v4087
      %4565 = vrot.lane.b32.xlu0 %v4563, 113
      %v4566 = vpop.permute.xlu0 %4565
      %v4567 = vsel %vm1264, %v4566, 0
      %4569 = vmatprep.subr.mxu0 0.0
      %v4570 = vand.u32 %v1254, 4294901760
      %4571 = vmatpush1.msra.mxu0 %v4570
      %4572 = vmatprep.subr.mxu0 0.0
      %v4573 = vand.u32 %v1255, 4294901760
      %4574 = vmatpush1.msra.mxu0 %v4573
      %4575 = vmatprep.subr.mxu0 0.0
      %4576 = vmatpush1.msra.mxu0 0.0
      %4577 = vmatprep.subr.mxu0 0.0
      %4578 = vmatpush1.msra.mxu0 0.0
      %4579 = vmatprep.subr.mxu0 0.0
      %4580 = vmatpush1.msra.mxu0 0.0
      %4581 = vmatprep.subr.mxu0 0.0
      %4582 = vmatpush1.msra.mxu0 0.0
      %4583 = vmatprep.subr.mxu0 0.0
      %4584 = vmatpush1.msra.mxu0 0.0
      %4585 = vmatprep.subr.mxu0 0.0
      %4586 = vmatpush1.msra.mxu0 0.0
      %4587 = vmatprep.subr.mxu0 0.0
      %4588 = vmatpush1.msra.mxu0 0.0
      %4589 = vmatprep.subr.mxu0 0.0
      %4590 = vmatpush1.msra.mxu0 0.0
      %4591 = vmatprep.subr.mxu0 0.0
      %4592 = vmatpush1.msra.mxu0 0.0
      %4593 = vmatprep.subr.mxu0 0.0
      %4594 = vmatpush1.msra.mxu0 0.0
      %4595 = vmatprep.subr.mxu0 0.0
      %4596 = vmatpush1.msra.mxu0 0.0
      %4597 = vmatprep.subr.mxu0 0.0
      %4598 = vmatpush1.msra.mxu0 0.0
      %4599 = vmatprep.subr.mxu0 0.0
      %4600 = vmatpush1.msra.mxu0 0.0
      %4601 = vmatprep.subr.mxu0 0.0
      %4602 = vmatpush1.msra.mxu0 0.0
      %4603 = vmatprep.subr.mxu0 0.0
      %4604 = vmatpush1.msra.mxu0 0.0
      %4605 = vmatprep.subr.mxu0 0.0
      %4606 = vmatpush1.msra.mxu0 0.0
      %4607 = vmatprep.subr.mxu0 0.0
      %4608 = vmatpush1.msra.mxu0 0.0
      %4609 = vmatprep.subr.mxu0 0.0
      %4610 = vmatpush1.msra.mxu0 0.0
      %4611 = vmatprep.subr.mxu0 0.0
      %4612 = vmatpush1.msra.mxu0 0.0
      %4613 = vmatprep.subr.mxu0 0.0
      %4614 = vmatpush1.msra.mxu0 0.0
      %4615 = vmatprep.subr.mxu0 0.0
      %4616 = vmatpush1.msra.mxu0 0.0
      %4617 = vmatprep.subr.mxu0 0.0
      %4618 = vmatpush1.msra.mxu0 0.0
      %4619 = vmatprep.subr.mxu0 0.0
      %4620 = vmatpush1.msra.mxu0 0.0
      %4621 = vmatprep.subr.mxu0 0.0
      %4622 = vmatpush1.msra.mxu0 0.0
      %4623 = vmatprep.subr.mxu0 0.0
      %4624 = vmatpush1.msra.mxu0 0.0
      %4625 = vmatprep.subr.mxu0 0.0
      %4626 = vmatpush1.msra.mxu0 0.0
      %4627 = vmatprep.subr.mxu0 0.0
      %4628 = vmatpush1.msra.mxu0 0.0
      %4629 = vmatprep.subr.mxu0 0.0
      %4630 = vmatpush1.msra.mxu0 0.0
      %4631 = vmatprep.subr.mxu0 0.0
      %4632 = vmatpush1.msra.mxu0 0.0
      %4633 = vmatprep.subr.mxu0 0.0
      %4634 = vmatpush1.msra.mxu0 0.0
      %4635 = vmatprep.mubr.f32.mxu0 0.0
      %v4636 = vand.u32 %v4567, 4294901760
      %v4637 = vsub.f32 %v4567, %v4636
      %v4638 = vand.u32 %v4637, 4294901760
      %v4639 = vsub.f32 %v4637, %v4638
      %v4640 = vand.u32 %v4639, 4294901760
      %4641 = vmatmul.mubr.f32.gmra.mrb[0].mxu0 %v4640
      %v4642 = vpop.f32.mrb[0].mxu0
      %v4643 = vadd.f32 0.0, %v4642
      %v4644 = vpop.f32.mrb[0].mxu0
      %4645 = vdwg.mxu0
      %4646 = vmatprep.subr.mxu0 0.0
      %v4647 = vand.u32 %v1254, 4294901760
      %v4648 = vsub.f32 %v1254, %v4647
      %v4649 = vand.u32 %v4648, 4294901760
      %v4650 = vsub.f32 %v4648, %v4649
      %v4651 = vand.u32 %v4650, 4294901760
      %4652 = vmatpush1.msra.mxu0 %v4651
      %4653 = vmatprep.subr.mxu0 0.0
      %v4654 = vand.u32 %v1255, 4294901760
      %v4655 = vsub.f32 %v1255, %v4654
      %v4656 = vand.u32 %v4655, 4294901760
      %v4657 = vsub.f32 %v4655, %v4656
      %v4658 = vand.u32 %v4657, 4294901760
      %4659 = vmatpush1.msra.mxu0 %v4658
      %4660 = vmatprep.subr.mxu0 0.0
      %4661 = vmatpush1.msra.mxu0 0.0
      %4662 = vmatprep.subr.mxu0 0.0
      %4663 = vmatpush1.msra.mxu0 0.0
      %4664 = vmatprep.subr.mxu0 0.0
      %4665 = vmatpush1.msra.mxu0 0.0
      %4666 = vmatprep.subr.mxu0 0.0
      %4667 = vmatpush1.msra.mxu0 0.0
      %4668 = vmatprep.subr.mxu0 0.0
      %4669 = vmatpush1.msra.mxu0 0.0
      %4670 = vmatprep.subr.mxu0 0.0
      %4671 = vmatpush1.msra.mxu0 0.0
      %4672 = vmatprep.subr.mxu0 0.0
      %4673 = vmatpush1.msra.mxu0 0.0
      %4674 = vmatprep.subr.mxu0 0.0
      %4675 = vmatpush1.msra.mxu0 0.0
      %4676 = vmatprep.subr.mxu0 0.0
      %4677 = vmatpush1.msra.mxu0 0.0
      %4678 = vmatprep.subr.mxu0 0.0
      %4679 = vmatpush1.msra.mxu0 0.0
      %4680 = vmatprep.subr.mxu0 0.0
      %4681 = vmatpush1.msra.mxu0 0.0
      %4682 = vmatprep.subr.mxu0 0.0
      %4683 = vmatpush1.msra.mxu0 0.0
      %4684 = vmatprep.subr.mxu0 0.0
      %4685 = vmatpush1.msra.mxu0 0.0
      %4686 = vmatprep.subr.mxu0 0.0
      %4687 = vmatpush1.msra.mxu0 0.0
      %4688 = vmatprep.subr.mxu0 0.0
      %4689 = vmatpush1.msra.mxu0 0.0
      %4690 = vmatprep.subr.mxu0 0.0
      %4691 = vmatpush1.msra.mxu0 0.0
      %4692 = vmatprep.subr.mxu0 0.0
      %4693 = vmatpush1.msra.mxu0 0.0
      %4694 = vmatprep.subr.mxu0 0.0
      %4695 = vmatpush1.msra.mxu0 0.0
      %4696 = vmatprep.subr.mxu0 0.0
      %4697 = vmatpush1.msra.mxu0 0.0
      %4698 = vmatprep.subr.mxu0 0.0
      %4699 = vmatpush1.msra.mxu0 0.0
      %4700 = vmatprep.subr.mxu0 0.0
      %4701 = vmatpush1.msra.mxu0 0.0
      %4702 = vmatprep.subr.mxu0 0.0
      %4703 = vmatpush1.msra.mxu0 0.0
      %4704 = vmatprep.subr.mxu0 0.0
      %4705 = vmatpush1.msra.mxu0 0.0
      %4706 = vmatprep.subr.mxu0 0.0
      %4707 = vmatpush1.msra.mxu0 0.0
      %4708 = vmatprep.subr.mxu0 0.0
      %4709 = vmatpush1.msra.mxu0 0.0
      %4710 = vmatprep.subr.mxu0 0.0
      %4711 = vmatpush1.msra.mxu0 0.0
      %4712 = vmatprep.subr.mxu0 0.0
      %4713 = vmatpush1.msra.mxu0 0.0
      %4714 = vmatprep.subr.mxu0 0.0
      %4715 = vmatpush1.msra.mxu0 0.0
      %4716 = vmatprep.subr.mxu0 0.0
      %4717 = vmatpush1.msra.mxu0 0.0
      %4718 = vmatprep.subr.mxu0 0.0
      %4719 = vmatpush1.msra.mxu0 0.0
      %4720 = vmatprep.mubr.f32.mxu0 0.0
      %v4721 = vand.u32 %v4567, 4294901760
      %4722 = vmatmul.mubr.f32.gmra.mrb[0].mxu0 %v4721
      %v4723 = vpop.f32.mrb[0].mxu0
      %v4724 = vadd.f32 %v4643, %v4723
      %v4725 = vpop.f32.mrb[0].mxu0
      %4726 = vdwg.mxu0
      %4727 = vmatprep.subr.mxu0 0.0
      %v4728 = vand.u32 %v1254, 4294901760
      %v4729 = vsub.f32 %v1254, %v4728
      %4730 = vmatpush1.msra.mxu0 %v4729
      %4731 = vmatprep.subr.mxu0 0.0
      %v4732 = vand.u32 %v1255, 4294901760
      %v4733 = vsub.f32 %v1255, %v4732
      %4734 = vmatpush1.msra.mxu0 %v4733
      %4735 = vmatprep.subr.mxu0 0.0
      %4736 = vmatpush1.msra.mxu0 0.0
      %4737 = vmatprep.subr.mxu0 0.0
      %4738 = vmatpush1.msra.mxu0 0.0
      %4739 = vmatprep.subr.mxu0 0.0
      %4740 = vmatpush1.msra.mxu0 0.0
      %4741 = vmatprep.subr.mxu0 0.0
      %4742 = vmatpush1.msra.mxu0 0.0
      %4743 = vmatprep.subr.mxu0 0.0
      %4744 = vmatpush1.msra.mxu0 0.0
      %4745 = vmatprep.subr.mxu0 0.0
      %4746 = vmatpush1.msra.mxu0 0.0
      %4747 = vmatprep.subr.mxu0 0.0
      %4748 = vmatpush1.msra.mxu0 0.0
      %4749 = vmatprep.subr.mxu0 0.0
      %4750 = vmatpush1.msra.mxu0 0.0
      %4751 = vmatprep.subr.mxu0 0.0
      %4752 = vmatpush1.msra.mxu0 0.0
      %4753 = vmatprep.subr.mxu0 0.0
      %4754 = vmatpush1.msra.mxu0 0.0
      %4755 = vmatprep.subr.mxu0 0.0
      %4756 = vmatpush1.msra.mxu0 0.0
      %4757 = vmatprep.subr.mxu0 0.0
      %4758 = vmatpush1.msra.mxu0 0.0
      %4759 = vmatprep.subr.mxu0 0.0
      %4760 = vmatpush1.msra.mxu0 0.0
      %4761 = vmatprep.subr.mxu0 0.0
      %4762 = vmatpush1.msra.mxu0 0.0
      %4763 = vmatprep.subr.mxu0 0.0
      %4764 = vmatpush1.msra.mxu0 0.0
      %4765 = vmatprep.subr.mxu0 0.0
      %4766 = vmatpush1.msra.mxu0 0.0
      %4767 = vmatprep.subr.mxu0 0.0
      %4768 = vmatpush1.msra.mxu0 0.0
      %4769 = vmatprep.subr.mxu0 0.0
      %4770 = vmatpush1.msra.mxu0 0.0
      %4771 = vmatprep.subr.mxu0 0.0
      %4772 = vmatpush1.msra.mxu0 0.0
      %4773 = vmatprep.subr.mxu0 0.0
      %4774 = vmatpush1.msra.mxu0 0.0
      %4775 = vmatprep.subr.mxu0 0.0
      %4776 = vmatpush1.msra.mxu0 0.0
      %4777 = vmatprep.subr.mxu0 0.0
      %4778 = vmatpush1.msra.mxu0 0.0
      %4779 = vmatprep.subr.mxu0 0.0
      %4780 = vmatpush1.msra.mxu0 0.0
      %4781 = vmatprep.subr.mxu0 0.0
      %4782 = vmatpush1.msra.mxu0 0.0
      %4783 = vmatprep.subr.mxu0 0.0
      %4784 = vmatpush1.msra.mxu0 0.0
      %4785 = vmatprep.subr.mxu0 0.0
      %4786 = vmatpush1.msra.mxu0 0.0
      %4787 = vmatprep.subr.mxu0 0.0
      %4788 = vmatpush1.msra.mxu0 0.0
      %4789 = vmatprep.subr.mxu0 0.0
      %4790 = vmatpush1.msra.mxu0 0.0
      %4791 = vmatprep.subr.mxu0 0.0
      %4792 = vmatpush1.msra.mxu0 0.0
      %4793 = vmatprep.subr.mxu0 0.0
      %4794 = vmatpush1.msra.mxu0 0.0
      %4795 = vmatprep.mubr.f32.mxu0 0.0
      %v4796 = vand.u32 %v4567, 4294901760
      %v4797 = vsub.f32 %v4567, %v4796
      %4798 = vmatmul.mubr.f32.gmra.mrb[0].mxu0 %v4797
      %v4799 = vpop.f32.mrb[0].mxu0
      %v4800 = vadd.f32 %v4724, %v4799
      %v4801 = vpop.f32.mrb[0].mxu0
      %4802 = vdwg.mxu0
      %4803 = vmatprep.subr.mxu0 0.0
      %v4804 = vand.u32 %v1254, 4294901760
      %4805 = vmatpush1.msra.mxu0 %v4804
      %4806 = vmatprep.subr.mxu0 0.0
      %v4807 = vand.u32 %v1255, 4294901760
      %4808 = vmatpush1.msra.mxu0 %v4807
      %4809 = vmatprep.subr.mxu0 0.0
      %4810 = vmatpush1.msra.mxu0 0.0
      %4811 = vmatprep.subr.mxu0 0.0
      %4812 = vmatpush1.msra.mxu0 0.0
      %4813 = vmatprep.subr.mxu0 0.0
      %4814 = vmatpush1.msra.mxu0 0.0
      %4815 = vmatprep.subr.mxu0 0.0
      %4816 = vmatpush1.msra.mxu0 0.0
      %4817 = vmatprep.subr.mxu0 0.0
      %4818 = vmatpush1.msra.mxu0 0.0
      %4819 = vmatprep.subr.mxu0 0.0
      %4820 = vmatpush1.msra.mxu0 0.0
      %4821 = vmatprep.subr.mxu0 0.0
      %4822 = vmatpush1.msra.mxu0 0.0
      %4823 = vmatprep.subr.mxu0 0.0
      %4824 = vmatpush1.msra.mxu0 0.0
      %4825 = vmatprep.subr.mxu0 0.0
      %4826 = vmatpush1.msra.mxu0 0.0
      %4827 = vmatprep.subr.mxu0 0.0
      %4828 = vmatpush1.msra.mxu0 0.0
      %4829 = vmatprep.subr.mxu0 0.0
      %4830 = vmatpush1.msra.mxu0 0.0
      %4831 = vmatprep.subr.mxu0 0.0
      %4832 = vmatpush1.msra.mxu0 0.0
      %4833 = vmatprep.subr.mxu0 0.0
      %4834 = vmatpush1.msra.mxu0 0.0
      %4835 = vmatprep.subr.mxu0 0.0
      %4836 = vmatpush1.msra.mxu0 0.0
      %4837 = vmatprep.subr.mxu0 0.0
      %4838 = vmatpush1.msra.mxu0 0.0
      %4839 = vmatprep.subr.mxu0 0.0
      %4840 = vmatpush1.msra.mxu0 0.0
      %4841 = vmatprep.subr.mxu0 0.0
      %4842 = vmatpush1.msra.mxu0 0.0
      %4843 = vmatprep.subr.mxu0 0.0
      %4844 = vmatpush1.msra.mxu0 0.0
      %4845 = vmatprep.subr.mxu0 0.0
      %4846 = vmatpush1.msra.mxu0 0.0
      %4847 = vmatprep.subr.mxu0 0.0
      %4848 = vmatpush1.msra.mxu0 0.0
      %4849 = vmatprep.subr.mxu0 0.0
      %4850 = vmatpush1.msra.mxu0 0.0
      %4851 = vmatprep.subr.mxu0 0.0
      %4852 = vmatpush1.msra.mxu0 0.0
      %4853 = vmatprep.subr.mxu0 0.0
      %4854 = vmatpush1.msra.mxu0 0.0
      %4855 = vmatprep.subr.mxu0 0.0
      %4856 = vmatpush1.msra.mxu0 0.0
      %4857 = vmatprep.subr.mxu0 0.0
      %4858 = vmatpush1.msra.mxu0 0.0
      %4859 = vmatprep.subr.mxu0 0.0
      %4860 = vmatpush1.msra.mxu0 0.0
      %4861 = vmatprep.subr.mxu0 0.0
      %4862 = vmatpush1.msra.mxu0 0.0
      %4863 = vmatprep.subr.mxu0 0.0
      %4864 = vmatpush1.msra.mxu0 0.0
      %4865 = vmatprep.subr.mxu0 0.0
      %4866 = vmatpush1.msra.mxu0 0.0
      %4867 = vmatprep.subr.mxu0 0.0
      %4868 = vmatpush1.msra.mxu0 0.0
      %4869 = vmatprep.mubr.f32.mxu0 0.0
      %v4870 = vand.u32 %v4567, 4294901760
      %v4871 = vsub.f32 %v4567, %v4870
      %v4872 = vand.u32 %v4871, 4294901760
      %4873 = vmatmul.mubr.f32.gmra.mrb[0].mxu0 %v4872
      %v4874 = vpop.f32.mrb[0].mxu0
      %v4875 = vadd.f32 %v4800, %v4874
      %v4876 = vpop.f32.mrb[0].mxu0
      %4877 = vdwg.mxu0
      %4878 = vmatprep.subr.mxu0 0.0
      %v4879 = vand.u32 %v1254, 4294901760
      %v4880 = vsub.f32 %v1254, %v4879
      %v4881 = vand.u32 %v4880, 4294901760
      %4882 = vmatpush1.msra.mxu0 %v4881
      %4883 = vmatprep.subr.mxu0 0.0
      %v4884 = vand.u32 %v1255, 4294901760
      %v4885 = vsub.f32 %v1255, %v4884
      %v4886 = vand.u32 %v4885, 4294901760
      %4887 = vmatpush1.msra.mxu0 %v4886
      %4888 = vmatprep.subr.mxu0 0.0
      %4889 = vmatpush1.msra.mxu0 0.0
      %4890 = vmatprep.subr.mxu0 0.0
      %4891 = vmatpush1.msra.mxu0 0.0
      %4892 = vmatprep.subr.mxu0 0.0
      %4893 = vmatpush1.msra.mxu0 0.0
      %4894 = vmatprep.subr.mxu0 0.0
      %4895 = vmatpush1.msra.mxu0 0.0
      %4896 = vmatprep.subr.mxu0 0.0
      %4897 = vmatpush1.msra.mxu0 0.0
      %4898 = vmatprep.subr.mxu0 0.0
      %4899 = vmatpush1.msra.mxu0 0.0
      %4900 = vmatprep.subr.mxu0 0.0
      %4901 = vmatpush1.msra.mxu0 0.0
      %4902 = vmatprep.subr.mxu0 0.0
      %4903 = vmatpush1.msra.mxu0 0.0
      %4904 = vmatprep.subr.mxu0 0.0
      %4905 = vmatpush1.msra.mxu0 0.0
      %4906 = vmatprep.subr.mxu0 0.0
      %4907 = vmatpush1.msra.mxu0 0.0
      %4908 = vmatprep.subr.mxu0 0.0
      %4909 = vmatpush1.msra.mxu0 0.0
      %4910 = vmatprep.subr.mxu0 0.0
      %4911 = vmatpush1.msra.mxu0 0.0
      %4912 = vmatprep.subr.mxu0 0.0
      %4913 = vmatpush1.msra.mxu0 0.0
      %4914 = vmatprep.subr.mxu0 0.0
      %4915 = vmatpush1.msra.mxu0 0.0
      %4916 = vmatprep.subr.mxu0 0.0
      %4917 = vmatpush1.msra.mxu0 0.0
      %4918 = vmatprep.subr.mxu0 0.0
      %4919 = vmatpush1.msra.mxu0 0.0
      %4920 = vmatprep.subr.mxu0 0.0
      %4921 = vmatpush1.msra.mxu0 0.0
      %4922 = vmatprep.subr.mxu0 0.0
      %4923 = vmatpush1.msra.mxu0 0.0
      %4924 = vmatprep.subr.mxu0 0.0
      %4925 = vmatpush1.msra.mxu0 0.0
      %4926 = vmatprep.subr.mxu0 0.0
      %4927 = vmatpush1.msra.mxu0 0.0
      %4928 = vmatprep.subr.mxu0 0.0
      %4929 = vmatpush1.msra.mxu0 0.0
      %4930 = vmatprep.subr.mxu0 0.0
      %4931 = vmatpush1.msra.mxu0 0.0
      %4932 = vmatprep.subr.mxu0 0.0
      %4933 = vmatpush1.msra.mxu0 0.0
      %4934 = vmatprep.subr.mxu0 0.0
      %4935 = vmatpush1.msra.mxu0 0.0
      %4936 = vmatprep.subr.mxu0 0.0
      %4937 = vmatpush1.msra.mxu0 0.0
      %4938 = vmatprep.subr.mxu0 0.0
      %4939 = vmatpush1.msra.mxu0 0.0
      %4940 = vmatprep.subr.mxu0 0.0
      %4941 = vmatpush1.msra.mxu0 0.0
      %4942 = vmatprep.subr.mxu0 0.0
      %4943 = vmatpush1.msra.mxu0 0.0
      %4944 = vmatprep.subr.mxu0 0.0
      %4945 = vmatpush1.msra.mxu0 0.0
      %4946 = vmatprep.subr.mxu0 0.0
      %4947 = vmatpush1.msra.mxu0 0.0
      %4948 = vmatprep.mubr.f32.mxu0 0.0
      %v4949 = vand.u32 %v4567, 4294901760
      %4950 = vmatmul.mubr.f32.gmra.mrb[0].mxu0 %v4949
      %v4951 = vpop.f32.mrb[0].mxu0
      %v4952 = vadd.f32 %v4875, %v4951
      %v4953 = vpop.f32.mrb[0].mxu0
      %4954 = vdwg.mxu0
      %4955 = vmatprep.subr.mxu0 0.0
      %v4956 = vand.u32 %v1254, 4294901760
      %4957 = vmatpush1.msra.mxu0 %v4956
      %4958 = vmatprep.subr.mxu0 0.0
      %v4959 = vand.u32 %v1255, 4294901760
      %4960 = vmatpush1.msra.mxu0 %v4959
      %4961 = vmatprep.subr.mxu0 0.0
      %4962 = vmatpush1.msra.mxu0 0.0
      %4963 = vmatprep.subr.mxu0 0.0
      %4964 = vmatpush1.msra.mxu0 0.0
      %4965 = vmatprep.subr.mxu0 0.0
      %4966 = vmatpush1.msra.mxu0 0.0
      %4967 = vmatprep.subr.mxu0 0.0
      %4968 = vmatpush1.msra.mxu0 0.0
      %4969 = vmatprep.subr.mxu0 0.0
      %4970 = vmatpush1.msra.mxu0 0.0
      %4971 = vmatprep.subr.mxu0 0.0
      %4972 = vmatpush1.msra.mxu0 0.0
      %4973 = vmatprep.subr.mxu0 0.0
      %4974 = vmatpush1.msra.mxu0 0.0
      %4975 = vmatprep.subr.mxu0 0.0
      %4976 = vmatpush1.msra.mxu0 0.0
      %4977 = vmatprep.subr.mxu0 0.0
      %4978 = vmatpush1.msra.mxu0 0.0
      %4979 = vmatprep.subr.mxu0 0.0
      %4980 = vmatpush1.msra.mxu0 0.0
      %4981 = vmatprep.subr.mxu0 0.0
      %4982 = vmatpush1.msra.mxu0 0.0
      %4983 = vmatprep.subr.mxu0 0.0
      %4984 = vmatpush1.msra.mxu0 0.0
      %4985 = vmatprep.subr.mxu0 0.0
      %4986 = vmatpush1.msra.mxu0 0.0
      %4987 = vmatprep.subr.mxu0 0.0
      %4988 = vmatpush1.msra.mxu0 0.0
      %4989 = vmatprep.subr.mxu0 0.0
      %4990 = vmatpush1.msra.mxu0 0.0
      %4991 = vmatprep.subr.mxu0 0.0
      %4992 = vmatpush1.msra.mxu0 0.0
      %4993 = vmatprep.subr.mxu0 0.0
      %4994 = vmatpush1.msra.mxu0 0.0
      %4995 = vmatprep.subr.mxu0 0.0
      %4996 = vmatpush1.msra.mxu0 0.0
      %4997 = vmatprep.subr.mxu0 0.0
      %4998 = vmatpush1.msra.mxu0 0.0
      %4999 = vmatprep.subr.mxu0 0.0
      %5000 = vmatpush1.msra.mxu0 0.0
      %5001 = vmatprep.subr.mxu0 0.0
      %5002 = vmatpush1.msra.mxu0 0.0
      %5003 = vmatprep.subr.mxu0 0.0
      %5004 = vmatpush1.msra.mxu0 0.0
      %5005 = vmatprep.subr.mxu0 0.0
      %5006 = vmatpush1.msra.mxu0 0.0
      %5007 = vmatprep.subr.mxu0 0.0
      %5008 = vmatpush1.msra.mxu0 0.0
      %5009 = vmatprep.subr.mxu0 0.0
      %5010 = vmatpush1.msra.mxu0 0.0
      %5011 = vmatprep.subr.mxu0 0.0
      %5012 = vmatpush1.msra.mxu0 0.0
      %5013 = vmatprep.subr.mxu0 0.0
      %5014 = vmatpush1.msra.mxu0 0.0
      %5015 = vmatprep.subr.mxu0 0.0
      %5016 = vmatpush1.msra.mxu0 0.0
      %5017 = vmatprep.subr.mxu0 0.0
      %5018 = vmatpush1.msra.mxu0 0.0
      %5019 = vmatprep.subr.mxu0 0.0
      %5020 = vmatpush1.msra.mxu0 0.0
      %5021 = vmatprep.mubr.f32.mxu0 0.0
      %v5022 = vand.u32 %v4567, 4294901760
      %5023 = vmatmul.mubr.f32.gmra.mrb[0].mxu0 %v5022
      %v5024 = vpop.f32.mrb[0].mxu0
      %v5025 = vadd.f32 %v4952, %v5024
      %v5026 = vpop.f32.mrb[0].mxu0
      %5027 = vdwg.mxu0
      %5029 = vrot.lane.b32.xlu0 %v5025, 56
      %v5030 = vpop.permute.xlu0 %5029
      %vm5032 = vcmask 523712
      %5033 = vst.msk [vmem:[%s330] sm:$0xff] %vm5032, %v5030
      %p5034 = scmp.lt.s32.totalorder %s20, 1
      %s5035 = scalar_select %p5034, %s20, 1
      %s5036 = smul.addr %s5035, 8
      %s5037 = scalar_lea.vmem %s9, %s5036
      // Predicated region
      $region57: #{conv_block_forward.1} parent=55 // pred_check
        %p5038 = pneg %p232
      $region58: #{conv_block_forward.1} parent=55 // pred_check_branch
        %5040 = sbr.rel (%p5038) target = $region60
      $region59: #{conv_block_forward.1} parent=55 // pred_region
        _
      $region60: #{conv_block_forward.1} parent=55 // pred_fallthru
        _
    $region56: #{conv_block_forward.1} parent=5 // pred_fallthru
      _
    %p5041 = scmp.le.s32.totalorder 2, %s15
    // Predicated region
    $region61: #{conv_block_forward.1} parent=5 // pred_check
      %p5042 = pneg %p5041
    $region62: #{conv_block_forward.1} parent=5 // pred_check_branch
      %5044 = sbr.rel (%p5042) target = $region64
    $region63: #{conv_block_forward.1} parent=5 // pred_region
      %s5045 = ssub.s32 %s15, 2
      // Predicated region
      $region65: #{conv_block_forward.1} parent=63 // pred_check
        %p5046 = pneg %p238
      $region66: #{conv_block_forward.1} parent=63 // pred_check_branch
        %5048 = sbr.rel (%p5046) target = $region68
      $region67: #{conv_block_forward.1} parent=63 // pred_region
        %p5049 = scmp.lt.s32.totalorder %s21, 1
        %s5050 = scalar_select %p5049, %s21, 1
        %s5051 = smul.addr %s5050, 8
        %s5052 = scalar_lea.vmem %s9, %s5051
      $region68: #{conv_block_forward.1} parent=63 // pred_fallthru
        _
    $region64: #{conv_block_forward.1} parent=5 // pred_fallthru
      _
  $region6: #{conv_block_forward.1} parent=0 // loop_footer
    %s19 = sadd.s32 1, %s15
  $region7: #{conv_block_forward.1} parent=0 // loop_footer_branch
    %14 = sbr.rel target = $region3
  $region8: #{conv_block_forward.1} parent=0 // loop_exit
    _

</llo_original>
